<compile_context>
chip_gen: v6e
topology: v6e:2x2x1
jax: 0.10.0
libtpu: 0.0.40
codegen_flags: <defaults>
</compile_context>

<pallas_src>
import functools
import math

import jax
import jax.numpy as jnp
from jax import lax
from jax.experimental import pallas as pl
from jax.experimental.pallas import tpu as pltpu


def _round_up(v, m):
    return ((v + m - 1) // m) * m


def _layernorm_masked(z, gamma, beta, mask, inv_e, eps):
    """LayerNorm over the real E columns of a zero-padded (M, Ep) f32 tensor."""
    mu = jnp.sum(z, axis=-1, keepdims=True) * inv_e          # pad cols are zero
    d = (z - mu) * mask                                       # kill pad cols
    var = jnp.sum(d * d, axis=-1, keepdims=True) * inv_e
    return d * lax.rsqrt(var + eps) * gamma + beta            # gamma/beta pad = 0


# ---------------------------------------------------------------------------
# Fused encoder-layer kernel (one batch tile per grid step)
# ---------------------------------------------------------------------------
def _encoder_layer_kernel(
    x_ref, pos_ref,                        # (BT, L, Ep) f32 activations
    wqk_ref, bqk_ref,                      # (Ep, 2*H*Dp) bf16, (1, 2*H*Dp) f32
    wv_ref, bv_ref,                        # (Ep, H*Dp) bf16,  (1, H*Dp) f32
    wo_ref, bo_ref,                        # (H, Dp, Ep) bf16, (1, Ep) f32
    g1_ref, b1_ref,                        # (1, Ep) f32  LayerNorm1
    w1_ref, bf1_ref,                       # (Ep, Dffp) bf16, (1, Dffp) f32
    w2_ref, bf2_ref,                       # (Dffp, Ep) bf16, (1, Ep) f32
    g2_ref, b2_ref,                        # (1, Ep) f32  LayerNorm2
    o_ref,                                 # (BT, L, Ep) f32
    *, num_heads, d_head_pad, e_model, eps):
    BT, L, Ep = x_ref.shape
    H, Dp = num_heads, d_head_pad
    M = BT * L

    x = x_ref[...].reshape(M, Ep)                      # f32, pad cols are zero
    pos = pos_ref[...].reshape(M, Ep)
    qk_in = (x + pos).astype(jnp.bfloat16)             # query_base == key_base
    xv = x.astype(jnp.bfloat16)                        # val_base == src

    # mask over the real E columns for the masked LayerNorms (hoisted once)
    mask = (lax.broadcasted_iota(jnp.int32, (1, Ep), 1) < e_model).astype(jnp.float32)
    inv_e = 1.0 / float(e_model)

    # --- fused Q|K projection (one wide matmul, scale folded in) + V projection ---
    qk = jnp.dot(qk_in, wqk_ref[...], preferred_element_type=jnp.float32) + bqk_ref[...]
    v = jnp.dot(xv, wv_ref[...], preferred_element_type=jnp.float32) + bv_ref[...]
    qk = qk.astype(jnp.bfloat16)                       # (M, 2*H*Dp)
    v = v.astype(jnp.bfloat16)                         # (M, H*Dp)

    # --- per-head attention, 128-lane aligned slices, output proj folded per head ---
    attn_out = jnp.zeros((M, Ep), jnp.float32)
    for h in range(H):                                 # static; dense 128-wide slices
        qh = qk[:, h * Dp:(h + 1) * Dp].reshape(BT, L, Dp)
        kh = qk[:, H * Dp + h * Dp:H * Dp + (h + 1) * Dp].reshape(BT, L, Dp)
        vh = v[:, h * Dp:(h + 1) * Dp].reshape(BT, L, Dp)
        # scores: batched over the batch-tile dim, contract head dim (no k transpose)
        s = lax.dot_general(qh, kh, (((2,), (2,)), ((0,), (0,))),
                            preferred_element_type=jnp.float32)       # (BT, L, L)
        s = s - jnp.max(s, axis=-1, keepdims=True)                    # f32 softmax
        p = jnp.exp(s)
        p = p * pl.reciprocal(jnp.sum(p, axis=-1, keepdims=True), approx=True)
        oh = lax.dot_general(p.astype(jnp.bfloat16), vh, (((2,), (1,)), ((0,), (0,))),
                             preferred_element_type=jnp.float32)      # (BT, L, Dp)
        oh = oh.reshape(M, Dp).astype(jnp.bfloat16)
        # fold this head straight into the output projection (no concat)
        attn_out = attn_out + jnp.dot(oh, wo_ref[h],
                                      preferred_element_type=jnp.float32)
    attn_out = attn_out + bo_ref[...]

    # --- residual + LayerNorm1 (masked over real E cols) ---
    h1 = _layernorm_masked(x + attn_out, g1_ref[...], b1_ref[...], mask, inv_e, eps)

    # --- FFN + residual + LayerNorm2 (fused epilogue) ---
    hidden = jnp.dot(h1.astype(jnp.bfloat16), w1_ref[...],
                     preferred_element_type=jnp.float32) + bf1_ref[...]
    hidden = jnp.maximum(hidden, 0.0)
    ffn = jnp.dot(hidden.astype(jnp.bfloat16), w2_ref[...],
                  preferred_element_type=jnp.float32) + bf2_ref[...]
    out = _layernorm_masked(h1 + ffn, g2_ref[...], b2_ref[...], mask, inv_e, eps)
    o_ref[...] = out.reshape(BT, L, Ep)


# ---------------------------------------------------------------------------
# Wrapper: TransformerEncoderLayer forward (default config: self-attn only)
# ---------------------------------------------------------------------------
def _pick_batch_tile(n, l):
    """Aim for >=256 rows per grid step, but keep >=2 steps when the batch allows."""
    bt = max(1, min(n, -(-256 // max(l, 1))))
    while n % bt:
        bt -= 1
    while bt > 1 and n // bt < 2:
        bt -= 1
        while n % bt:
            bt -= 1
    return bt


def transformer_encoder_layer_forward(image_features, image_pos, params, num_heads,
                                      eps=1e-5):
    """image_features, image_pos: (L, N, E). Returns (L, N, E)."""
    L, N, E = image_features.shape
    H = num_heads
    assert E % H == 0, "embed dim must be divisible by num_heads"
    Dh = E // H
    scale = 1.0 / math.sqrt(Dh)
    Dff = params["mlp_w1"].shape[0]

    Dp = _round_up(Dh, 128)       # padded per-head dim  (lane-dense head slices)
    Ep = _round_up(E, 128)        # padded model dim     (lane-dense output stores)
    Dffp = _round_up(Dff, 128)    # padded FFN dim
    HDp = H * Dp
    bf16 = jnp.bfloat16

    # --- one-time weight prep: (out,in)->(in,out), head-pad, fold softmax scale ---
    wq, wk, wv = jnp.split(params["in_proj_weight"], 3, axis=0)   # each (E, E)
    bq, bk, bv = jnp.split(params["in_proj_bias"], 3, axis=0)     # each (E,)

    def prep_qkv_w(w):            # (E_out, E_in) -> (Ep, H*Dp), zero-padded
        wt = w.T.reshape(E, H, Dh)
        wt = jnp.pad(wt, ((0, Ep - E), (0, 0), (0, Dp - Dh)))
        return wt.reshape(Ep, HDp)

    def prep_qkv_b(b):            # (E,) -> (1, H*Dp), zero-padded
        bh = jnp.pad(b.reshape(H, Dh), ((0, 0), (0, Dp - Dh)))
        return bh.reshape(1, HDp)

    wqk = jnp.concatenate([prep_qkv_w(wq * scale), prep_qkv_w(wk)], axis=1).astype(bf16)
    bqk = jnp.concatenate([prep_qkv_b(bq * scale), prep_qkv_b(bk)], axis=1)
    wv_p = prep_qkv_w(wv).astype(bf16)
    bv_p = prep_qkv_b(bv)

    wo = params["out_proj_weight"].T.reshape(H, Dh, E)            # (H, Dh, E)
    wo_p = jnp.pad(wo, ((0, 0), (0, Dp - Dh), (0, Ep - E))).astype(bf16)  # (H, Dp, Ep)
    bo_p = jnp.pad(params["out_proj_bias"], (0, Ep - E)).reshape(1, Ep)

    def pad_vec(v, n):
        return jnp.pad(v, (0, n - v.shape[0])).reshape(1, n)

    g1 = pad_vec(params["norm1_weight"], Ep)
    b1 = pad_vec(params["norm1_bias"], Ep)
    g2 = pad_vec(params["norm2_weight"], Ep)
    b2 = pad_vec(params["norm2_bias"], Ep)

    w1_p = jnp.pad(params["mlp_w1"].T, ((0, Ep - E), (0, Dffp - Dff))).astype(bf16)
    bf1 = pad_vec(params["mlp_b1"], Dffp)
    w2_p = jnp.pad(params["mlp_w2"].T, ((0, Dffp - Dff), (0, Ep - E))).astype(bf16)
    bf2 = pad_vec(params["mlp_b2"], Ep)

    # --- activations: (L,N,E) -> (N,L,Ep), zero-padded (kept for small E; see header) ---
    x_nle = jnp.pad(jnp.transpose(image_features, (1, 0, 2)), ((0, 0), (0, 0), (0, Ep - E)))
    pos_nle = jnp.pad(jnp.transpose(image_pos, (1, 0, 2)), ((0, 0), (0, 0), (0, Ep - E)))

    BT = _pick_batch_tile(N, L)
    grid = (N // BT,)

    batch_spec = lambda: pl.BlockSpec((BT, L, Ep), lambda n: (n, 0, 0))
    pinned2 = lambda shape: pl.BlockSpec(shape, lambda n: (0, 0))
    pinned3 = lambda shape: pl.BlockSpec(shape, lambda n: (0, 0, 0))

    # --- VMEM budget (weights double-buffered + activation blocks + live temporaries) ---
    w_bytes = int((wqk.size + wv_p.size + wo_p.size + w1_p.size + w2_p.size) * 2
                  + (bqk.size + bv_p.size + bo_p.size + g1.size + b1.size
                     + bf1.size + bf2.size + g2.size + b2.size) * 4)
    act_bytes = int(3 * BT * L * Ep * 4)
    tmp_bytes = int(BT * L * (3 * HDp + 3 * Ep + Dffp) * 4)
    vmem_limit = int(min(128 * 2**20,
                         max(32 * 2**20, 2 * (w_bytes + act_bytes) + tmp_bytes + (8 << 20))))

    flops_per_b = (2 * L * Ep * (2 * HDp) + 2 * L * Ep * HDp          # Q|K, V proj
                   + 4 * H * L * L * Dp                               # scores + P@V
                   + 2 * L * HDp * Ep                                 # out proj
                   + 4 * L * Ep * Dffp)                               # FFN
    cost = pl.CostEstimate(flops=int(N * flops_per_b),
                           transcendentals=int(N * H * L * L + 8 * N * L),
                           bytes_accessed=int(w_bytes + 3 * N * L * Ep * 4))

    kern = functools.partial(_encoder_layer_kernel,
                             num_heads=H, d_head_pad=Dp, e_model=E, eps=eps)
    out = pl.pallas_call(
        kern,
        out_shape=jax.ShapeDtypeStruct((N, L, Ep), jnp.float32),
        grid=grid,
        in_specs=[
            batch_spec(), batch_spec(),
            pinned2((Ep, 2 * HDp)), pinned2((1, 2 * HDp)),
            pinned2((Ep, HDp)), pinned2((1, HDp)),
            pinned3((H, Dp, Ep)), pinned2((1, Ep)),
            pinned2((1, Ep)), pinned2((1, Ep)),
            pinned2((Ep, Dffp)), pinned2((1, Dffp)),
            pinned2((Dffp, Ep)), pinned2((1, Ep)),
            pinned2((1, Ep)), pinned2((1, Ep)),
        ],
        out_specs=batch_spec(),
        compiler_params=pltpu.CompilerParams(
            dimension_semantics=("parallel",),
            vmem_limit_bytes=vmem_limit),
        cost_estimate=cost,
    )(x_nle, pos_nle, wqk, bqk, wv_p, bv_p, wo_p, bo_p,
      g1, b1, w1_p, bf1, w2_p, bf2, g2, b2)

    # back to (L, N, E): drop the zero pad columns, undo the batch-major layout
    return jnp.transpose(out[:, :, :E], (1, 0, 2))


# ---------------------------------------------------------------------------
# Pure-JAX reference (matches the PyTorch module in eval mode) + init
# ---------------------------------------------------------------------------
def _reference_forward(x, pos, params, H, eps=1e-5):
    L, N, E = x.shape
    Dh = E // H
    scale = 1.0 / math.sqrt(Dh)
    wq, wk, wv = jnp.split(params["in_proj_weight"], 3, axis=0)
    bq, bk, bv = jnp.split(params["in_proj_bias"], 3, axis=0)
    qk_in = x + pos
    q = (qk_in @ wq.T + bq) * scale
    k = qk_in @ wk.T + bk
    v = x @ wv.T + bv

    def heads(t):                                   # (L,N,E) -> (N*H, L, Dh)
        return t.reshape(L, N * H, Dh).transpose(1, 0, 2)

    s = jnp.einsum("bld,bmd->blm", heads(q), heads(k))
    p = jax.nn.softmax(s, axis=-1)
    o = jnp.einsum("blm,bmd->bld", p, heads(v)).transpose(1, 0, 2).reshape(L, N, E)
    attn = o @ params["out_proj_weight"].T + params["out_proj_bias"]

    def ln(z, g, b):
        mu = jnp.mean(z, -1, keepdims=True)
        var = jnp.mean((z - mu) ** 2, -1, keepdims=True)
        return (z - mu) * jax.lax.rsqrt(var + eps) * g + b

    h1 = ln(x + attn, params["norm1_weight"], params["norm1_bias"])
    hidden = jnp.maximum(h1 @ params["mlp_w1"].T + params["mlp_b1"], 0.0)
    ffn = hidden @ params["mlp_w2"].T + params["mlp_b2"]
    return ln(h1 + ffn, params["norm2_weight"], params["norm2_bias"])


def init_params(key, Dsrc, Dff):
    ks = jax.random.split(key, 8)
    s = 0.02
    return {
        "in_proj_weight": s * jax.random.normal(ks[0], (3 * Dsrc, Dsrc), jnp.float32),
        "in_proj_bias": s * jax.random.normal(ks[1], (3 * Dsrc,), jnp.float32),
        "out_proj_weight": s * jax.random.normal(ks[2], (Dsrc, Dsrc), jnp.float32),
        "out_proj_bias": jnp.zeros((Dsrc,), jnp.float32),
        "norm1_weight": jnp.ones((Dsrc,), jnp.float32),
        "norm1_bias": jnp.zeros((Dsrc,), jnp.float32),
        "mlp_w1": s * jax.random.normal(ks[3], (Dff, Dsrc), jnp.float32),
        "mlp_b1": s * jax.random.normal(ks[4], (Dff,), jnp.float32),
        "mlp_w2": s * jax.random.normal(ks[5], (Dsrc, Dff), jnp.float32),
        "mlp_b2": s * jax.random.normal(ks[6], (Dsrc,), jnp.float32),
        "norm2_weight": jnp.ones((Dsrc,), jnp.float32),
        "norm2_bias": jnp.zeros((Dsrc,), jnp.float32),
    }


if __name__ == "__main__":
    Dsrc, num_heads, Dff = 32, 4, 64
    L, N = 8, 2   # seq length, batch

    key = jax.random.PRNGKey(0)
    kp, k1, k2 = jax.random.split(key, 3)

    params = init_params(kp, Dsrc, Dff)
    image_features = jax.random.normal(k1, (L, N, Dsrc), jnp.float32)
    image_pos = jax.random.normal(k2, (L, N, Dsrc), jnp.float32)

    out = transformer_encoder_layer_forward(image_features, image_pos, params, num_heads)
    jax.block_until_ready(out)
    assert out.shape == (L, N, Dsrc)

    ref = _reference_forward(image_features, image_pos, params, num_heads)
    max_err = float(jnp.max(jnp.abs(out - ref)))
    assert max_err < 1e-1, f"mismatch vs reference: {max_err}"
    print("KERNEL_OK")
</pallas_src>

<mosaic_0001>
module attributes {stable_mosaic.version = 11 : i64} {
  func.func @_encoder_layer_kernel(%arg0: i32, %arg1: memref<1x8x128xf32, #tpu.memory_space<vmem>>, %arg2: memref<1x8x128xf32, #tpu.memory_space<vmem>>, %arg3: memref<128x1024xbf16, #tpu.memory_space<vmem>>, %arg4: memref<1x1024xf32, #tpu.memory_space<vmem>>, %arg5: memref<128x512xbf16, #tpu.memory_space<vmem>>, %arg6: memref<1x512xf32, #tpu.memory_space<vmem>>, %arg7: memref<4x128x128xbf16, #tpu.memory_space<vmem>>, %arg8: memref<1x128xf32, #tpu.memory_space<vmem>>, %arg9: memref<1x128xf32, #tpu.memory_space<vmem>>, %arg10: memref<1x128xf32, #tpu.memory_space<vmem>>, %arg11: memref<128x128xbf16, #tpu.memory_space<vmem>>, %arg12: memref<1x128xf32, #tpu.memory_space<vmem>>, %arg13: memref<128x128xbf16, #tpu.memory_space<vmem>>, %arg14: memref<1x128xf32, #tpu.memory_space<vmem>>, %arg15: memref<1x128xf32, #tpu.memory_space<vmem>>, %arg16: memref<1x128xf32, #tpu.memory_space<vmem>>, %arg17: memref<1x8x128xf32, #tpu.memory_space<vmem>>) attributes {dimension_semantics = [#tpu.dimension_semantics<parallel>], iteration_bounds = array<i64: 2>, scalar_prefetch = 0 : i64, scratch_operands = 0 : i64, tpu.core_type = #tpu.core_type<tc>, window_params = [{transform_indices = @transform_0, window_bounds = array<i64: 1, 8, 128>}, {transform_indices = @transform_1, window_bounds = array<i64: 1, 8, 128>}, {pipeline_mode = #tpu.pipeline_mode<synchronous>, transform_indices = @transform_2, window_bounds = array<i64: 128, 1024>}, {pipeline_mode = #tpu.pipeline_mode<synchronous>, transform_indices = @transform_3, window_bounds = array<i64: 1, 1024>}, {pipeline_mode = #tpu.pipeline_mode<synchronous>, transform_indices = @transform_4, window_bounds = array<i64: 128, 512>}, {pipeline_mode = #tpu.pipeline_mode<synchronous>, transform_indices = @transform_5, window_bounds = array<i64: 1, 512>}, {pipeline_mode = #tpu.pipeline_mode<synchronous>, transform_indices = @transform_6, window_bounds = array<i64: 4, 128, 128>}, {pipeline_mode = #tpu.pipeline_mode<synchronous>, transform_indices = @transform_7, window_bounds = array<i64: 1, 128>}, {pipeline_mode = #tpu.pipeline_mode<synchronous>, transform_indices = @transform_8, window_bounds = array<i64: 1, 128>}, {pipeline_mode = #tpu.pipeline_mode<synchronous>, transform_indices = @transform_9, window_bounds = array<i64: 1, 128>}, {pipeline_mode = #tpu.pipeline_mode<synchronous>, transform_indices = @transform_10, window_bounds = array<i64: 128, 128>}, {pipeline_mode = #tpu.pipeline_mode<synchronous>, transform_indices = @transform_11, window_bounds = array<i64: 1, 128>}, {pipeline_mode = #tpu.pipeline_mode<synchronous>, transform_indices = @transform_12, window_bounds = array<i64: 128, 128>}, {pipeline_mode = #tpu.pipeline_mode<synchronous>, transform_indices = @transform_13, window_bounds = array<i64: 1, 128>}, {pipeline_mode = #tpu.pipeline_mode<synchronous>, transform_indices = @transform_14, window_bounds = array<i64: 1, 128>}, {pipeline_mode = #tpu.pipeline_mode<synchronous>, transform_indices = @transform_15, window_bounds = array<i64: 1, 128>}, {transform_indices = @transform_16, window_bounds = array<i64: 1, 8, 128>}]} {
    %c0 = arith.constant 0 : index
    %c0_0 = arith.constant 0 : index
    %c0_1 = arith.constant 0 : index
    %0 = vector.load %arg1[%c0, %c0_0, %c0_1] : memref<1x8x128xf32, #tpu.memory_space<vmem>>, vector<1x8x128xf32>
    %1 = vector.shape_cast %0 : vector<1x8x128xf32> to vector<8x128xf32>
    %c0_2 = arith.constant 0 : index
    %c0_3 = arith.constant 0 : index
    %c0_4 = arith.constant 0 : index
    %2 = vector.load %arg2[%c0_2, %c0_3, %c0_4] : memref<1x8x128xf32, #tpu.memory_space<vmem>>, vector<1x8x128xf32>
    %3 = vector.shape_cast %2 : vector<1x8x128xf32> to vector<8x128xf32>
    %4 = arith.addf %1, %3 : vector<8x128xf32>
    %5 = arith.truncf %4 : vector<8x128xf32> to vector<8x128xbf16>
    %6 = arith.truncf %1 : vector<8x128xf32> to vector<8x128xbf16>
    %7 = tpu.iota {dimensions = array<i32: 1>} : vector<1x128xi32>
    %c32_i32 = arith.constant 32 : i32
    %8 = vector.broadcast %c32_i32 : i32 to vector<1x128xi32>
    %9 = arith.cmpi slt, %7, %8 : vector<1x128xi32>
    %10 = arith.extui %9 : vector<1x128xi1> to vector<1x128xi32>
    %11 = arith.sitofp %10 : vector<1x128xi32> to vector<1x128xf32>
    %c0_5 = arith.constant 0 : index
    %c0_6 = arith.constant 0 : index
    %12 = vector.load %arg3[%c0_5, %c0_6] : memref<128x1024xbf16, #tpu.memory_space<vmem>>, vector<128x1024xbf16>
    %cst = arith.constant dense<0.000000e+00> : vector<8x1024xf32>
    %13 = tpu.matmul %5, %12, %cst {dimension_numbers = #tpu.dot_dimension_numbers<[1], [0], [0], [1], [0, 0, 1, 1], [], []>} : vector<8x128xbf16>, vector<128x1024xbf16>, vector<8x1024xf32> -> vector<8x1024xf32>
    %c0_7 = arith.constant 0 : index
    %c0_8 = arith.constant 0 : index
    %14 = vector.load %arg4[%c0_7, %c0_8] : memref<1x1024xf32, #tpu.memory_space<vmem>>, vector<1x1024xf32>
    %15 = vector.broadcast %14 : vector<1x1024xf32> to vector<8x1024xf32>
    %16 = arith.addf %13, %15 : vector<8x1024xf32>
    %c0_9 = arith.constant 0 : index
    %c0_10 = arith.constant 0 : index
    %17 = vector.load %arg5[%c0_9, %c0_10] : memref<128x512xbf16, #tpu.memory_space<vmem>>, vector<128x512xbf16>
    %cst_11 = arith.constant dense<0.000000e+00> : vector<8x512xf32>
    %18 = tpu.matmul %6, %17, %cst_11 {dimension_numbers = #tpu.dot_dimension_numbers<[1], [0], [0], [1], [0, 0, 1, 1], [], []>} : vector<8x128xbf16>, vector<128x512xbf16>, vector<8x512xf32> -> vector<8x512xf32>
    %c0_12 = arith.constant 0 : index
    %c0_13 = arith.constant 0 : index
    %19 = vector.load %arg6[%c0_12, %c0_13] : memref<1x512xf32, #tpu.memory_space<vmem>>, vector<1x512xf32>
    %20 = vector.broadcast %19 : vector<1x512xf32> to vector<8x512xf32>
    %21 = arith.addf %18, %20 : vector<8x512xf32>
    %22 = arith.truncf %16 : vector<8x1024xf32> to vector<8x1024xbf16>
    %23 = arith.truncf %21 : vector<8x512xf32> to vector<8x512xbf16>
    %cst_14 = arith.constant 0.000000e+00 : f32
    %24 = vector.broadcast %cst_14 : f32 to vector<8x128xf32>
    %25 = vector.extract_strided_slice %22 {offsets = [0, 0], sizes = [8, 128], strides = [1, 1]} : vector<8x1024xbf16> to vector<8x128xbf16>
    %26 = vector.shape_cast %25 : vector<8x128xbf16> to vector<1x8x128xbf16>
    %27 = vector.extract_strided_slice %22 {offsets = [0, 512], sizes = [8, 128], strides = [1, 1]} : vector<8x1024xbf16> to vector<8x128xbf16>
    %28 = vector.shape_cast %27 : vector<8x128xbf16> to vector<1x8x128xbf16>
    %29 = vector.extract_strided_slice %23 {offsets = [0, 0], sizes = [8, 128], strides = [1, 1]} : vector<8x512xbf16> to vector<8x128xbf16>
    %30 = vector.shape_cast %29 : vector<8x128xbf16> to vector<1x8x128xbf16>
    %cst_15 = arith.constant dense<0.000000e+00> : vector<1x8x8xf32>
    %31 = tpu.matmul %26, %28, %cst_15 {dimension_numbers = #tpu.dot_dimension_numbers<[2], [2], [1], [1], [0, 0, 0, 1, 1, 1], [0], [0]>} : vector<1x8x128xbf16>, vector<1x8x128xbf16>, vector<1x8x8xf32> -> vector<1x8x8xf32>
    %cst_16 = arith.constant dense<0xFF800000> : vector<1x8xf32>
    %32 = vector.multi_reduction <maximumf>, %31, %cst_16 [2] : vector<1x8x8xf32> to vector<1x8xf32>
    %33 = vector.shape_cast %32 : vector<1x8xf32> to vector<1x8x1xf32>
    %34 = vector.broadcast %33 : vector<1x8x1xf32> to vector<1x8x8xf32>
    %35 = arith.subf %31, %34 : vector<1x8x8xf32>
    %36 = math.exp %35 : vector<1x8x8xf32>
    %cst_17 = arith.constant dense<0.000000e+00> : vector<1x8xf32>
    %37 = vector.multi_reduction <add>, %36, %cst_17 [2] : vector<1x8x8xf32> to vector<1x8xf32>
    %38 = vector.shape_cast %37 : vector<1x8xf32> to vector<1x8x1xf32>
    %39 = tpu.reciprocal %38 {approx = true} : vector<1x8x1xf32> -> vector<1x8x1xf32>
    %40 = vector.broadcast %39 : vector<1x8x1xf32> to vector<1x8x8xf32>
    %41 = arith.mulf %36, %40 : vector<1x8x8xf32>
    %42 = arith.truncf %41 : vector<1x8x8xf32> to vector<1x8x8xbf16>
    %cst_18 = arith.constant dense<0.000000e+00> : vector<1x8x128xf32>
    %43 = tpu.matmul %42, %30, %cst_18 {dimension_numbers = #tpu.dot_dimension_numbers<[2], [1], [1], [2], [0, 0, 0, 1, 1, 2], [0], [0]>} : vector<1x8x8xbf16>, vector<1x8x128xbf16>, vector<1x8x128xf32> -> vector<1x8x128xf32>
    %44 = vector.shape_cast %43 : vector<1x8x128xf32> to vector<8x128xf32>
    %45 = arith.truncf %44 : vector<8x128xf32> to vector<8x128xbf16>
    %c0_19 = arith.constant 0 : index
    %c0_20 = arith.constant 0 : index
    %c0_21 = arith.constant 0 : index
    %46 = vector.load %arg7[%c0_19, %c0_20, %c0_21] : memref<4x128x128xbf16, #tpu.memory_space<vmem>>, vector<1x128x128xbf16>
    %47 = vector.shape_cast %46 : vector<1x128x128xbf16> to vector<128x128xbf16>
    %cst_22 = arith.constant dense<0.000000e+00> : vector<8x128xf32>
    %48 = tpu.matmul %45, %47, %cst_22 {dimension_numbers = #tpu.dot_dimension_numbers<[1], [0], [0], [1], [0, 0, 1, 1], [], []>} : vector<8x128xbf16>, vector<128x128xbf16>, vector<8x128xf32> -> vector<8x128xf32>
    %49 = arith.addf %24, %48 : vector<8x128xf32>
    %50 = vector.extract_strided_slice %22 {offsets = [0, 128], sizes = [8, 128], strides = [1, 1]} : vector<8x1024xbf16> to vector<8x128xbf16>
    %51 = vector.shape_cast %50 : vector<8x128xbf16> to vector<1x8x128xbf16>
    %52 = vector.extract_strided_slice %22 {offsets = [0, 640], sizes = [8, 128], strides = [1, 1]} : vector<8x1024xbf16> to vector<8x128xbf16>
    %53 = vector.shape_cast %52 : vector<8x128xbf16> to vector<1x8x128xbf16>
    %54 = vector.extract_strided_slice %23 {offsets = [0, 128], sizes = [8, 128], strides = [1, 1]} : vector<8x512xbf16> to vector<8x128xbf16>
    %55 = vector.shape_cast %54 : vector<8x128xbf16> to vector<1x8x128xbf16>
    %cst_23 = arith.constant dense<0.000000e+00> : vector<1x8x8xf32>
    %56 = tpu.matmul %51, %53, %cst_23 {dimension_numbers = #tpu.dot_dimension_numbers<[2], [2], [1], [1], [0, 0, 0, 1, 1, 1], [0], [0]>} : vector<1x8x128xbf16>, vector<1x8x128xbf16>, vector<1x8x8xf32> -> vector<1x8x8xf32>
    %cst_24 = arith.constant dense<0xFF800000> : vector<1x8xf32>
    %57 = vector.multi_reduction <maximumf>, %56, %cst_24 [2] : vector<1x8x8xf32> to vector<1x8xf32>
    %58 = vector.shape_cast %57 : vector<1x8xf32> to vector<1x8x1xf32>
    %59 = vector.broadcast %58 : vector<1x8x1xf32> to vector<1x8x8xf32>
    %60 = arith.subf %56, %59 : vector<1x8x8xf32>
    %61 = math.exp %60 : vector<1x8x8xf32>
    %cst_25 = arith.constant dense<0.000000e+00> : vector<1x8xf32>
    %62 = vector.multi_reduction <add>, %61, %cst_25 [2] : vector<1x8x8xf32> to vector<1x8xf32>
    %63 = vector.shape_cast %62 : vector<1x8xf32> to vector<1x8x1xf32>
    %64 = tpu.reciprocal %63 {approx = true} : vector<1x8x1xf32> -> vector<1x8x1xf32>
    %65 = vector.broadcast %64 : vector<1x8x1xf32> to vector<1x8x8xf32>
    %66 = arith.mulf %61, %65 : vector<1x8x8xf32>
    %67 = arith.truncf %66 : vector<1x8x8xf32> to vector<1x8x8xbf16>
    %cst_26 = arith.constant dense<0.000000e+00> : vector<1x8x128xf32>
    %68 = tpu.matmul %67, %55, %cst_26 {dimension_numbers = #tpu.dot_dimension_numbers<[2], [1], [1], [2], [0, 0, 0, 1, 1, 2], [0], [0]>} : vector<1x8x8xbf16>, vector<1x8x128xbf16>, vector<1x8x128xf32> -> vector<1x8x128xf32>
    %69 = vector.shape_cast %68 : vector<1x8x128xf32> to vector<8x128xf32>
    %70 = arith.truncf %69 : vector<8x128xf32> to vector<8x128xbf16>
    %c1 = arith.constant 1 : index
    %c0_27 = arith.constant 0 : index
    %c0_28 = arith.constant 0 : index
    %71 = vector.load %arg7[%c1, %c0_27, %c0_28] : memref<4x128x128xbf16, #tpu.memory_space<vmem>>, vector<1x128x128xbf16>
    %72 = vector.shape_cast %71 : vector<1x128x128xbf16> to vector<128x128xbf16>
    %cst_29 = arith.constant dense<0.000000e+00> : vector<8x128xf32>
    %73 = tpu.matmul %70, %72, %cst_29 {dimension_numbers = #tpu.dot_dimension_numbers<[1], [0], [0], [1], [0, 0, 1, 1], [], []>} : vector<8x128xbf16>, vector<128x128xbf16>, vector<8x128xf32> -> vector<8x128xf32>
    %74 = arith.addf %49, %73 : vector<8x128xf32>
    %75 = vector.extract_strided_slice %22 {offsets = [0, 256], sizes = [8, 128], strides = [1, 1]} : vector<8x1024xbf16> to vector<8x128xbf16>
    %76 = vector.shape_cast %75 : vector<8x128xbf16> to vector<1x8x128xbf16>
    %77 = vector.extract_strided_slice %22 {offsets = [0, 768], sizes = [8, 128], strides = [1, 1]} : vector<8x1024xbf16> to vector<8x128xbf16>
    %78 = vector.shape_cast %77 : vector<8x128xbf16> to vector<1x8x128xbf16>
    %79 = vector.extract_strided_slice %23 {offsets = [0, 256], sizes = [8, 128], strides = [1, 1]} : vector<8x512xbf16> to vector<8x128xbf16>
    %80 = vector.shape_cast %79 : vector<8x128xbf16> to vector<1x8x128xbf16>
    %cst_30 = arith.constant dense<0.000000e+00> : vector<1x8x8xf32>
    %81 = tpu.matmul %76, %78, %cst_30 {dimension_numbers = #tpu.dot_dimension_numbers<[2], [2], [1], [1], [0, 0, 0, 1, 1, 1], [0], [0]>} : vector<1x8x128xbf16>, vector<1x8x128xbf16>, vector<1x8x8xf32> -> vector<1x8x8xf32>
    %cst_31 = arith.constant dense<0xFF800000> : vector<1x8xf32>
    %82 = vector.multi_reduction <maximumf>, %81, %cst_31 [2] : vector<1x8x8xf32> to vector<1x8xf32>
    %83 = vector.shape_cast %82 : vector<1x8xf32> to vector<1x8x1xf32>
    %84 = vector.broadcast %83 : vector<1x8x1xf32> to vector<1x8x8xf32>
    %85 = arith.subf %81, %84 : vector<1x8x8xf32>
    %86 = math.exp %85 : vector<1x8x8xf32>
    %cst_32 = arith.constant dense<0.000000e+00> : vector<1x8xf32>
    %87 = vector.multi_reduction <add>, %86, %cst_32 [2] : vector<1x8x8xf32> to vector<1x8xf32>
    %88 = vector.shape_cast %87 : vector<1x8xf32> to vector<1x8x1xf32>
    %89 = tpu.reciprocal %88 {approx = true} : vector<1x8x1xf32> -> vector<1x8x1xf32>
    %90 = vector.broadcast %89 : vector<1x8x1xf32> to vector<1x8x8xf32>
    %91 = arith.mulf %86, %90 : vector<1x8x8xf32>
    %92 = arith.truncf %91 : vector<1x8x8xf32> to vector<1x8x8xbf16>
    %cst_33 = arith.constant dense<0.000000e+00> : vector<1x8x128xf32>
    %93 = tpu.matmul %92, %80, %cst_33 {dimension_numbers = #tpu.dot_dimension_numbers<[2], [1], [1], [2], [0, 0, 0, 1, 1, 2], [0], [0]>} : vector<1x8x8xbf16>, vector<1x8x128xbf16>, vector<1x8x128xf32> -> vector<1x8x128xf32>
    %94 = vector.shape_cast %93 : vector<1x8x128xf32> to vector<8x128xf32>
    %95 = arith.truncf %94 : vector<8x128xf32> to vector<8x128xbf16>
    %c2 = arith.constant 2 : index
    %c0_34 = arith.constant 0 : index
    %c0_35 = arith.constant 0 : index
    %96 = vector.load %arg7[%c2, %c0_34, %c0_35] : memref<4x128x128xbf16, #tpu.memory_space<vmem>>, vector<1x128x128xbf16>
    %97 = vector.shape_cast %96 : vector<1x128x128xbf16> to vector<128x128xbf16>
    %cst_36 = arith.constant dense<0.000000e+00> : vector<8x128xf32>
    %98 = tpu.matmul %95, %97, %cst_36 {dimension_numbers = #tpu.dot_dimension_numbers<[1], [0], [0], [1], [0, 0, 1, 1], [], []>} : vector<8x128xbf16>, vector<128x128xbf16>, vector<8x128xf32> -> vector<8x128xf32>
    %99 = arith.addf %74, %98 : vector<8x128xf32>
    %100 = vector.extract_strided_slice %22 {offsets = [0, 384], sizes = [8, 128], strides = [1, 1]} : vector<8x1024xbf16> to vector<8x128xbf16>
    %101 = vector.shape_cast %100 : vector<8x128xbf16> to vector<1x8x128xbf16>
    %102 = vector.extract_strided_slice %22 {offsets = [0, 896], sizes = [8, 128], strides = [1, 1]} : vector<8x1024xbf16> to vector<8x128xbf16>
    %103 = vector.shape_cast %102 : vector<8x128xbf16> to vector<1x8x128xbf16>
    %104 = vector.extract_strided_slice %23 {offsets = [0, 384], sizes = [8, 128], strides = [1, 1]} : vector<8x512xbf16> to vector<8x128xbf16>
    %105 = vector.shape_cast %104 : vector<8x128xbf16> to vector<1x8x128xbf16>
    %cst_37 = arith.constant dense<0.000000e+00> : vector<1x8x8xf32>
    %106 = tpu.matmul %101, %103, %cst_37 {dimension_numbers = #tpu.dot_dimension_numbers<[2], [2], [1], [1], [0, 0, 0, 1, 1, 1], [0], [0]>} : vector<1x8x128xbf16>, vector<1x8x128xbf16>, vector<1x8x8xf32> -> vector<1x8x8xf32>
    %cst_38 = arith.constant dense<0xFF800000> : vector<1x8xf32>
    %107 = vector.multi_reduction <maximumf>, %106, %cst_38 [2] : vector<1x8x8xf32> to vector<1x8xf32>
    %108 = vector.shape_cast %107 : vector<1x8xf32> to vector<1x8x1xf32>
    %109 = vector.broadcast %108 : vector<1x8x1xf32> to vector<1x8x8xf32>
    %110 = arith.subf %106, %109 : vector<1x8x8xf32>
    %111 = math.exp %110 : vector<1x8x8xf32>
    %cst_39 = arith.constant dense<0.000000e+00> : vector<1x8xf32>
    %112 = vector.multi_reduction <add>, %111, %cst_39 [2] : vector<1x8x8xf32> to vector<1x8xf32>
    %113 = vector.shape_cast %112 : vector<1x8xf32> to vector<1x8x1xf32>
    %114 = tpu.reciprocal %113 {approx = true} : vector<1x8x1xf32> -> vector<1x8x1xf32>
    %115 = vector.broadcast %114 : vector<1x8x1xf32> to vector<1x8x8xf32>
    %116 = arith.mulf %111, %115 : vector<1x8x8xf32>
    %117 = arith.truncf %116 : vector<1x8x8xf32> to vector<1x8x8xbf16>
    %cst_40 = arith.constant dense<0.000000e+00> : vector<1x8x128xf32>
    %118 = tpu.matmul %117, %105, %cst_40 {dimension_numbers = #tpu.dot_dimension_numbers<[2], [1], [1], [2], [0, 0, 0, 1, 1, 2], [0], [0]>} : vector<1x8x8xbf16>, vector<1x8x128xbf16>, vector<1x8x128xf32> -> vector<1x8x128xf32>
    %119 = vector.shape_cast %118 : vector<1x8x128xf32> to vector<8x128xf32>
    %120 = arith.truncf %119 : vector<8x128xf32> to vector<8x128xbf16>
    %c3 = arith.constant 3 : index
    %c0_41 = arith.constant 0 : index
    %c0_42 = arith.constant 0 : index
    %121 = vector.load %arg7[%c3, %c0_41, %c0_42] : memref<4x128x128xbf16, #tpu.memory_space<vmem>>, vector<1x128x128xbf16>
    %122 = vector.shape_cast %121 : vector<1x128x128xbf16> to vector<128x128xbf16>
    %cst_43 = arith.constant dense<0.000000e+00> : vector<8x128xf32>
    %123 = tpu.matmul %120, %122, %cst_43 {dimension_numbers = #tpu.dot_dimension_numbers<[1], [0], [0], [1], [0, 0, 1, 1], [], []>} : vector<8x128xbf16>, vector<128x128xbf16>, vector<8x128xf32> -> vector<8x128xf32>
    %124 = arith.addf %99, %123 : vector<8x128xf32>
    %c0_44 = arith.constant 0 : index
    %c0_45 = arith.constant 0 : index
    %125 = vector.load %arg8[%c0_44, %c0_45] : memref<1x128xf32, #tpu.memory_space<vmem>>, vector<1x128xf32>
    %126 = vector.broadcast %125 : vector<1x128xf32> to vector<8x128xf32>
    %127 = arith.addf %124, %126 : vector<8x128xf32>
    %128 = arith.addf %1, %127 : vector<8x128xf32>
    %c0_46 = arith.constant 0 : index
    %c0_47 = arith.constant 0 : index
    %129 = vector.load %arg9[%c0_46, %c0_47] : memref<1x128xf32, #tpu.memory_space<vmem>>, vector<1x128xf32>
    %c0_48 = arith.constant 0 : index
    %c0_49 = arith.constant 0 : index
    %130 = vector.load %arg10[%c0_48, %c0_49] : memref<1x128xf32, #tpu.memory_space<vmem>>, vector<1x128xf32>
    %cst_50 = arith.constant dense<0.000000e+00> : vector<8xf32>
    %131 = vector.multi_reduction <add>, %128, %cst_50 [1] : vector<8x128xf32> to vector<8xf32>
    %132 = vector.shape_cast %131 : vector<8xf32> to vector<8x1xf32>
    %cst_51 = arith.constant 3.125000e-02 : f32
    %133 = vector.broadcast %cst_51 : f32 to vector<8x1xf32>
    %134 = arith.mulf %132, %133 : vector<8x1xf32>
    %135 = vector.broadcast %134 : vector<8x1xf32> to vector<8x128xf32>
    %136 = arith.subf %128, %135 : vector<8x128xf32>
    %137 = vector.broadcast %11 : vector<1x128xf32> to vector<8x128xf32>
    %138 = arith.mulf %136, %137 : vector<8x128xf32>
    %139 = arith.mulf %138, %138 : vector<8x128xf32>
    %cst_52 = arith.constant dense<0.000000e+00> : vector<8xf32>
    %140 = vector.multi_reduction <add>, %139, %cst_52 [1] : vector<8x128xf32> to vector<8xf32>
    %141 = vector.shape_cast %140 : vector<8xf32> to vector<8x1xf32>
    %cst_53 = arith.constant 3.125000e-02 : f32
    %142 = vector.broadcast %cst_53 : f32 to vector<8x1xf32>
    %143 = arith.mulf %141, %142 : vector<8x1xf32>
    %cst_54 = arith.constant 9.99999974E-6 : f32
    %144 = vector.broadcast %cst_54 : f32 to vector<8x1xf32>
    %145 = arith.addf %143, %144 : vector<8x1xf32>
    %146 = math.rsqrt %145 : vector<8x1xf32>
    %147 = vector.broadcast %146 : vector<8x1xf32> to vector<8x128xf32>
    %148 = arith.mulf %138, %147 : vector<8x128xf32>
    %149 = vector.broadcast %129 : vector<1x128xf32> to vector<8x128xf32>
    %150 = arith.mulf %148, %149 : vector<8x128xf32>
    %151 = vector.broadcast %130 : vector<1x128xf32> to vector<8x128xf32>
    %152 = arith.addf %150, %151 : vector<8x128xf32>
    %153 = arith.truncf %152 : vector<8x128xf32> to vector<8x128xbf16>
    %c0_55 = arith.constant 0 : index
    %c0_56 = arith.constant 0 : index
    %154 = vector.load %arg11[%c0_55, %c0_56] : memref<128x128xbf16, #tpu.memory_space<vmem>>, vector<128x128xbf16>
    %cst_57 = arith.constant dense<0.000000e+00> : vector<8x128xf32>
    %155 = tpu.matmul %153, %154, %cst_57 {dimension_numbers = #tpu.dot_dimension_numbers<[1], [0], [0], [1], [0, 0, 1, 1], [], []>} : vector<8x128xbf16>, vector<128x128xbf16>, vector<8x128xf32> -> vector<8x128xf32>
    %c0_58 = arith.constant 0 : index
    %c0_59 = arith.constant 0 : index
    %156 = vector.load %arg12[%c0_58, %c0_59] : memref<1x128xf32, #tpu.memory_space<vmem>>, vector<1x128xf32>
    %157 = vector.broadcast %156 : vector<1x128xf32> to vector<8x128xf32>
    %158 = arith.addf %155, %157 : vector<8x128xf32>
    %cst_60 = arith.constant 0.000000e+00 : f32
    %159 = vector.broadcast %cst_60 : f32 to vector<8x128xf32>
    %160 = arith.maximumf %158, %159 : vector<8x128xf32>
    %161 = arith.truncf %160 : vector<8x128xf32> to vector<8x128xbf16>
    %c0_61 = arith.constant 0 : index
    %c0_62 = arith.constant 0 : index
    %162 = vector.load %arg13[%c0_61, %c0_62] : memref<128x128xbf16, #tpu.memory_space<vmem>>, vector<128x128xbf16>
    %cst_63 = arith.constant dense<0.000000e+00> : vector<8x128xf32>
    %163 = tpu.matmul %161, %162, %cst_63 {dimension_numbers = #tpu.dot_dimension_numbers<[1], [0], [0], [1], [0, 0, 1, 1], [], []>} : vector<8x128xbf16>, vector<128x128xbf16>, vector<8x128xf32> -> vector<8x128xf32>
    %c0_64 = arith.constant 0 : index
    %c0_65 = arith.constant 0 : index
    %164 = vector.load %arg14[%c0_64, %c0_65] : memref<1x128xf32, #tpu.memory_space<vmem>>, vector<1x128xf32>
    %165 = vector.broadcast %164 : vector<1x128xf32> to vector<8x128xf32>
    %166 = arith.addf %163, %165 : vector<8x128xf32>
    %167 = arith.addf %152, %166 : vector<8x128xf32>
    %c0_66 = arith.constant 0 : index
    %c0_67 = arith.constant 0 : index
    %168 = vector.load %arg15[%c0_66, %c0_67] : memref<1x128xf32, #tpu.memory_space<vmem>>, vector<1x128xf32>
    %c0_68 = arith.constant 0 : index
    %c0_69 = arith.constant 0 : index
    %169 = vector.load %arg16[%c0_68, %c0_69] : memref<1x128xf32, #tpu.memory_space<vmem>>, vector<1x128xf32>
    %cst_70 = arith.constant dense<0.000000e+00> : vector<8xf32>
    %170 = vector.multi_reduction <add>, %167, %cst_70 [1] : vector<8x128xf32> to vector<8xf32>
    %171 = vector.shape_cast %170 : vector<8xf32> to vector<8x1xf32>
    %cst_71 = arith.constant 3.125000e-02 : f32
    %172 = vector.broadcast %cst_71 : f32 to vector<8x1xf32>
    %173 = arith.mulf %171, %172 : vector<8x1xf32>
    %174 = vector.broadcast %173 : vector<8x1xf32> to vector<8x128xf32>
    %175 = arith.subf %167, %174 : vector<8x128xf32>
    %176 = vector.broadcast %11 : vector<1x128xf32> to vector<8x128xf32>
    %177 = arith.mulf %175, %176 : vector<8x128xf32>
    %178 = arith.mulf %177, %177 : vector<8x128xf32>
    %cst_72 = arith.constant dense<0.000000e+00> : vector<8xf32>
    %179 = vector.multi_reduction <add>, %178, %cst_72 [1] : vector<8x128xf32> to vector<8xf32>
    %180 = vector.shape_cast %179 : vector<8xf32> to vector<8x1xf32>
    %cst_73 = arith.constant 3.125000e-02 : f32
    %181 = vector.broadcast %cst_73 : f32 to vector<8x1xf32>
    %182 = arith.mulf %180, %181 : vector<8x1xf32>
    %cst_74 = arith.constant 9.99999974E-6 : f32
    %183 = vector.broadcast %cst_74 : f32 to vector<8x1xf32>
    %184 = arith.addf %182, %183 : vector<8x1xf32>
    %185 = math.rsqrt %184 : vector<8x1xf32>
    %186 = vector.broadcast %185 : vector<8x1xf32> to vector<8x128xf32>
    %187 = arith.mulf %177, %186 : vector<8x128xf32>
    %188 = vector.broadcast %168 : vector<1x128xf32> to vector<8x128xf32>
    %189 = arith.mulf %187, %188 : vector<8x128xf32>
    %190 = vector.broadcast %169 : vector<1x128xf32> to vector<8x128xf32>
    %191 = arith.addf %189, %190 : vector<8x128xf32>
    %192 = vector.shape_cast %191 : vector<8x128xf32> to vector<1x8x128xf32>
    %c0_75 = arith.constant 0 : index
    %c0_76 = arith.constant 0 : index
    %c0_77 = arith.constant 0 : index
    %193 = vector.load %arg17[%c0_75, %c0_76, %c0_77] : memref<1x8x128xf32, #tpu.memory_space<vmem>>, vector<1x8x128xf32>
    tpu.vector_store %arg17[%c0_75, %c0_76, %c0_77], %192 {strides = array<i32>} : memref<1x8x128xf32, #tpu.memory_space<vmem>>, vector<1x8x128xf32>,
    return
  }
  func.func @transform_0(%arg0: i32) -> (i32, i32, i32) {
    %c0_i32 = arith.constant 0 : i32
    %c0_i32_0 = arith.constant 0 : i32
    %c0_i32_1 = arith.constant 0 : i32
    return %arg0, %c0_i32, %c0_i32_0 : i32, i32, i32
  }
  func.func @transform_1(%arg0: i32) -> (i32, i32, i32) {
    %c0_i32 = arith.constant 0 : i32
    %c0_i32_0 = arith.constant 0 : i32
    %c0_i32_1 = arith.constant 0 : i32
    return %arg0, %c0_i32, %c0_i32_0 : i32, i32, i32
  }
  func.func @transform_2(%arg0: i32) -> (i32, i32) {
    %c0_i32 = arith.constant 0 : i32
    %c0_i32_0 = arith.constant 0 : i32
    %c0_i32_1 = arith.constant 0 : i32
    return %c0_i32, %c0_i32_0 : i32, i32
  }
  func.func @transform_3(%arg0: i32) -> (i32, i32) {
    %c0_i32 = arith.constant 0 : i32
    %c0_i32_0 = arith.constant 0 : i32
    %c0_i32_1 = arith.constant 0 : i32
    return %c0_i32, %c0_i32_0 : i32, i32
  }
  func.func @transform_4(%arg0: i32) -> (i32, i32) {
    %c0_i32 = arith.constant 0 : i32
    %c0_i32_0 = arith.constant 0 : i32
    %c0_i32_1 = arith.constant 0 : i32
    return %c0_i32, %c0_i32_0 : i32, i32
  }
  func.func @transform_5(%arg0: i32) -> (i32, i32) {
    %c0_i32 = arith.constant 0 : i32
    %c0_i32_0 = arith.constant 0 : i32
    %c0_i32_1 = arith.constant 0 : i32
    return %c0_i32, %c0_i32_0 : i32, i32
  }
  func.func @transform_6(%arg0: i32) -> (i32, i32, i32) {
    %c0_i32 = arith.constant 0 : i32
    %c0_i32_0 = arith.constant 0 : i32
    %c0_i32_1 = arith.constant 0 : i32
    %c0_i32_2 = arith.constant 0 : i32
    return %c0_i32, %c0_i32_0, %c0_i32_1 : i32, i32, i32
  }
  func.func @transform_7(%arg0: i32) -> (i32, i32) {
    %c0_i32 = arith.constant 0 : i32
    %c0_i32_0 = arith.constant 0 : i32
    %c0_i32_1 = arith.constant 0 : i32
    return %c0_i32, %c0_i32_0 : i32, i32
  }
  func.func @transform_8(%arg0: i32) -> (i32, i32) {
    %c0_i32 = arith.constant 0 : i32
    %c0_i32_0 = arith.constant 0 : i32
    %c0_i32_1 = arith.constant 0 : i32
    return %c0_i32, %c0_i32_0 : i32, i32
  }
  func.func @transform_9(%arg0: i32) -> (i32, i32) {
    %c0_i32 = arith.constant 0 : i32
    %c0_i32_0 = arith.constant 0 : i32
    %c0_i32_1 = arith.constant 0 : i32
    return %c0_i32, %c0_i32_0 : i32, i32
  }
  func.func @transform_10(%arg0: i32) -> (i32, i32) {
    %c0_i32 = arith.constant 0 : i32
    %c0_i32_0 = arith.constant 0 : i32
    %c0_i32_1 = arith.constant 0 : i32
    return %c0_i32, %c0_i32_0 : i32, i32
  }
  func.func @transform_11(%arg0: i32) -> (i32, i32) {
    %c0_i32 = arith.constant 0 : i32
    %c0_i32_0 = arith.constant 0 : i32
    %c0_i32_1 = arith.constant 0 : i32
    return %c0_i32, %c0_i32_0 : i32, i32
  }
  func.func @transform_12(%arg0: i32) -> (i32, i32) {
    %c0_i32 = arith.constant 0 : i32
    %c0_i32_0 = arith.constant 0 : i32
    %c0_i32_1 = arith.constant 0 : i32
    return %c0_i32, %c0_i32_0 : i32, i32
  }
  func.func @transform_13(%arg0: i32) -> (i32, i32) {
    %c0_i32 = arith.constant 0 : i32
    %c0_i32_0 = arith.constant 0 : i32
    %c0_i32_1 = arith.constant 0 : i32
    return %c0_i32, %c0_i32_0 : i32, i32
  }
  func.func @transform_14(%arg0: i32) -> (i32, i32) {
    %c0_i32 = arith.constant 0 : i32
    %c0_i32_0 = arith.constant 0 : i32
    %c0_i32_1 = arith.constant 0 : i32
    return %c0_i32, %c0_i32_0 : i32, i32
  }
  func.func @transform_15(%arg0: i32) -> (i32, i32) {
    %c0_i32 = arith.constant 0 : i32
    %c0_i32_0 = arith.constant 0 : i32
    %c0_i32_1 = arith.constant 0 : i32
    return %c0_i32, %c0_i32_0 : i32, i32
  }
  func.func @transform_16(%arg0: i32) -> (i32, i32, i32) {
    %c0_i32 = arith.constant 0 : i32
    %c0_i32_0 = arith.constant 0 : i32
    %c0_i32_1 = arith.constant 0 : i32
    return %arg0, %c0_i32, %c0_i32_0 : i32, i32, i32
  }
}

</mosaic_0001>

<llo_original>
// kernel: tpu_custom_call.1
$region0: #{tpu_custom_call.1}
  #allocation0 [shape = 'u32[]', space=smem, size = 0x4, offset = 0x4, fixed_abs, tag = 'smem constant byte address 0x4 - core index']
  #allocation1 [shape = 'u32[144,128]{1,0:T(1,128)}', space=vmem, size = 0x12000, scoped, tag = 'internal scratch']
  %s0 = inlined_call_operand.hbm [shape: f32[2,8,128], index: 0, kind: input, shape index: {}]
  %s1 = inlined_call_operand.hbm [shape: f32[2,8,128], index: 1, kind: input, shape index: {}]
  %s2 = inlined_call_operand.hbm [shape: bf16[128,1024], index: 2, kind: input, shape index: {}]
  %s3 = inlined_call_operand.hbm [shape: f32[1,1024], index: 3, kind: input, shape index: {}]
  %s4 = inlined_call_operand.hbm [shape: bf16[128,512], index: 4, kind: input, shape index: {}]
  %s5 = inlined_call_operand.vmem [shape: f32[1,512], index: 5, kind: input, shape index: {}]
  %s6 = inlined_call_operand.hbm [shape: bf16[4,128,128], index: 6, kind: input, shape index: {}]
  %s7 = inlined_call_operand.vmem [shape: f32[1,128], index: 7, kind: input, shape index: {}]
  %s8 = inlined_call_operand.vmem [shape: f32[1,128], index: 8, kind: input, shape index: {}]
  %s9 = inlined_call_operand.vmem [shape: f32[1,128], index: 9, kind: input, shape index: {}]
  %s10 = inlined_call_operand.hbm [shape: bf16[128,128], index: 10, kind: input, shape index: {}]
  %s11 = inlined_call_operand.vmem [shape: f32[1,128], index: 11, kind: input, shape index: {}]
  %s12 = inlined_call_operand.hbm [shape: bf16[128,128], index: 12, kind: input, shape index: {}]
  %s13 = inlined_call_operand.vmem [shape: f32[1,128], index: 13, kind: input, shape index: {}]
  %s14 = inlined_call_operand.vmem [shape: f32[1,128], index: 14, kind: input, shape index: {}]
  %s15 = inlined_call_operand.vmem [shape: f32[1,128], index: 15, kind: input, shape index: {}]
  %s16 = inlined_call_operand.hbm [shape: f32[2,8,128], index: 16, kind: output, shape index: {}]
  %s17 = sld [smem:[#allocation0]]
  $region129: #{tpu_custom_call.1} parent=0
    _
  %s19 = ssub.s32 1, %s17
  %s20 = scalar_select 0, %s19, %s17
  $region1: #{tpu_custom_call.1} parent=0
    #allocation2 [shape = 'u8[8192]{0}', space=vmem, size = 0x2000, scoped, tag = 'input window, operand 0']
    #allocation3 [shape = 's32[2]{0}', space=sflag, size = 0x8, scoped, tag = 'scoped memory for tpu_custom_call.1']
    #allocation4 [shape = 's32[2]{0}', space=sflag, size = 0x8, scoped, tag = 'scoped memory for tpu_custom_call.1']
    #allocation5 [shape = 'u8[8192]{0}', space=vmem, size = 0x2000, scoped, tag = 'input window, operand 1']
    #allocation6 [shape = 's32[2]{0}', space=sflag, size = 0x8, scoped, tag = 'scoped memory for tpu_custom_call.1']
    #allocation7 [shape = 'u8[262144]{0}', space=vmem, size = 0x40000, scoped, tag = 'input window, operand 2, single buffered']
    #allocation8 [shape = 'u8[4096]{0}', space=vmem, size = 0x1000, scoped, tag = 'input window, operand 3, single buffered']
    #allocation9 [shape = 's32[1]{0}', space=sflag, size = 0x4, scoped, tag = 'scoped memory for tpu_custom_call.1']
    #allocation10 [shape = 'u8[131072]{0}', space=vmem, size = 0x20000, scoped, tag = 'input window, operand 4, single buffered']
    #allocation11 [shape = 'u8[131072]{0}', space=vmem, size = 0x20000, scoped, tag = 'input window, operand 6, single buffered']
    #allocation12 [shape = 's32[1]{0}', space=sflag, size = 0x4, scoped, tag = 'scoped memory for tpu_custom_call.1']
    #allocation13 [shape = 'u8[32768]{0}', space=vmem, size = 0x8000, scoped, tag = 'input window, operand 10, single buffered']
    #allocation14 [shape = 'u8[32768]{0}', space=vmem, size = 0x8000, scoped, tag = 'input window, operand 12, single buffered']
    #allocation15 [shape = 's32[1]{0}', space=sflag, size = 0x4, scoped, tag = 'scoped memory for tpu_custom_call.1']
    #allocation16 [shape = 'u8[8192]{0}', space=vmem, size = 0x2000, scoped, tag = 'output window, operand 0']
    %21 = vsyncpa [#allocation3], 0
    %s22 = scalar_lea.sflag [#allocation3], 1
    %23 = vsyncpa %s22, 0
    %24 = vsyncpa [#allocation6], 0
    %s25 = scalar_lea.sflag [#allocation6], 1
    %26 = vsyncpa %s25, 0
    %27 = vsyncpa [#allocation9], 0
    %28 = vsyncpa [#allocation12], 0
    %29 = vsyncpa [#allocation15], 0
    %30 = vsyncpa [#allocation4], 0
    %s31 = scalar_lea.sflag [#allocation4], 1
    %32 = vsyncpa %s31, 0
    loop: start=0, step=1, limit=4
    $region2: #{tpu_custom_call.1} parent=1 // loop_pre_header
      _
    $region3: #{tpu_custom_call.1} parent=1 // loop_header
      %s34 = sphi 0, %s38
      %p35 = scmp.ge.s32.totalorder %s34, 4
      %s44 = sphi 0, %s46
      %s47 = sphi 0, %s44
      %s48 = sphi 0, %s47
      %s64 = sphi 0, %s48
      %s70 = sphi 0, %s72
      %s73 = sphi 0, %s70
      %s74 = sphi 0, %s73
      %s90 = sphi 0, %s74
      %s94 = sphi 0, %s94
      %s96 = sphi 0, %s94
      %s97 = sphi 0, %s96
      %s111 = sphi 0, %s97
      %s115 = sphi 0, %s115
      %s117 = sphi 0, %s115
      %s118 = sphi 0, %s117
      %s132 = sphi 0, %s118
      %s136 = sphi 0, %s136
      %s138 = sphi 0, %s136
      %s139 = sphi 0, %s138
      %s153 = sphi 0, %s139
      %s157 = sphi 0, %s157
      %s159 = sphi 0, %s157
      %s160 = sphi 0, %s159
      %s174 = sphi 0, %s160
      %s178 = sphi 0, %s178
      %s180 = sphi 0, %s178
      %s181 = sphi 0, %s180
      %s195 = sphi 0, %s181
      %s199 = sphi 0, %s199
      %s201 = sphi 0, %s199
      %s202 = sphi 0, %s201
      %s216 = sphi 0, %s202
      %s220 = sphi 0, %s220
      %s222 = sphi 0, %s220
      %s223 = sphi 0, %s222
      %s237 = sphi 0, %s223
      %s241 = sphi 0, %s241
      %s243 = sphi 0, %s241
      %s244 = sphi 0, %s243
      %s258 = sphi 0, %s244
      %s262 = sphi 0, %s262
      %s264 = sphi 0, %s262
      %s265 = sphi 0, %s264
      %s279 = sphi 0, %s265
      %s283 = sphi 0, %s283
      %s285 = sphi 0, %s283
      %s286 = sphi 0, %s285
      %s300 = sphi 0, %s286
      %s304 = sphi 0, %s304
      %s306 = sphi 0, %s304
      %s307 = sphi 0, %s306
      %s321 = sphi 0, %s307
      %s325 = sphi 0, %s325
      %s327 = sphi 0, %s325
      %s328 = sphi 0, %s327
      %s342 = sphi 0, %s328
      %s346 = sphi 0, %s346
      %s348 = sphi 0, %s346
      %s349 = sphi 0, %s348
      %s363 = sphi 0, %s349
      %s367 = sphi 0, %s367
      %s369 = sphi 0, %s367
      %s370 = sphi 0, %s369
      %s384 = sphi 0, %s370
      %s390 = sphi 0, %s392
      %s393 = sphi 0, %s390
      %s394 = sphi 0, %s393
      %s410 = sphi 0, %s394
    $region4: #{tpu_custom_call.1} parent=1 // loop_header_branch
      %37 = sbr.rel (%p35) target = $region8
    $region5: #{tpu_custom_call.1} parent=1 // loop_body
      %s39 = ssub.s32 %s34, 1
      %s40 = ssub.s32 %s34, 2
      %s41 = sadd.s32 %s34, 1
      %s42 = ssub.s32 %s34, %s41
      %p43 = scmp.eq.s32.totalorder %s42, 0
      %s45 = sadd.s32 %s44, 1
      %s46 = scalar_select %p43, %s44, %s45
      %p49 = pneg %p43
      %p50 = scmp.eq.s32.totalorder %s34, 1
      %p51 = por %p49, %p50
      %p52 = scmp.ne.s32.totalorder %s44, %s47
      %p53 = scmp.eq.s32.totalorder %s34, 0
      %p54 = por %p52, %p53
      %p55 = scmp.ne.s32.totalorder %s44, %s47
      %p56 = scmp.eq.s32.totalorder %s39, 1
      %p57 = por %p55, %p56
      %p58 = scmp.ne.s32.totalorder %s47, %s48
      %p59 = scmp.eq.s32.totalorder %s39, 0
      %p60 = por %p58, %p59
      %p61 = scmp.ne.s32.totalorder %s47, %s48
      %p62 = scmp.eq.s32.totalorder %s40, 1
      %p63 = por %p61, %p62
      %p65 = scmp.ne.s32.totalorder %s48, %s64
      %p66 = scmp.eq.s32.totalorder %s40, 0
      %p67 = por %p65, %p66
      %s68 = ssub.s32 %s34, %s41
      %p69 = scmp.eq.s32.totalorder %s68, 0
      %s71 = sadd.s32 %s70, 1
      %s72 = scalar_select %p69, %s70, %s71
      %p75 = pneg %p69
      %p76 = scmp.eq.s32.totalorder %s34, 1
      %p77 = por %p75, %p76
      %p78 = scmp.ne.s32.totalorder %s70, %s73
      %p79 = scmp.eq.s32.totalorder %s34, 0
      %p80 = por %p78, %p79
      %p81 = scmp.ne.s32.totalorder %s70, %s73
      %p82 = scmp.eq.s32.totalorder %s39, 1
      %p83 = por %p81, %p82
      %p84 = scmp.ne.s32.totalorder %s73, %s74
      %p85 = scmp.eq.s32.totalorder %s39, 0
      %p86 = por %p84, %p85
      %p87 = scmp.ne.s32.totalorder %s73, %s74
      %p88 = scmp.eq.s32.totalorder %s40, 1
      %p89 = por %p87, %p88
      %p91 = scmp.ne.s32.totalorder %s74, %s90
      %p92 = scmp.eq.s32.totalorder %s40, 0
      %p93 = por %p91, %p92
      %s95 = sadd.s32 %s94, 1
      %p98 = scmp.eq.s32.totalorder %s34, 1
      %p99 = scmp.ne.s32.totalorder %s94, %s96
      %p100 = scmp.eq.s32.totalorder %s34, 0
      %p101 = por %p99, %p100
      %p102 = scmp.ne.s32.totalorder %s94, %s96
      %p103 = scmp.eq.s32.totalorder %s39, 1
      %p104 = por %p102, %p103
      %p105 = scmp.ne.s32.totalorder %s96, %s97
      %p106 = scmp.eq.s32.totalorder %s39, 0
      %p107 = por %p105, %p106
      %p108 = scmp.ne.s32.totalorder %s96, %s97
      %p109 = scmp.eq.s32.totalorder %s40, 1
      %p110 = por %p108, %p109
      %p112 = scmp.ne.s32.totalorder %s97, %s111
      %p113 = scmp.eq.s32.totalorder %s40, 0
      %p114 = por %p112, %p113
      %s116 = sadd.s32 %s115, 1
      %p119 = scmp.eq.s32.totalorder %s34, 1
      %p120 = scmp.ne.s32.totalorder %s115, %s117
      %p121 = scmp.eq.s32.totalorder %s34, 0
      %p122 = por %p120, %p121
      %p123 = scmp.ne.s32.totalorder %s115, %s117
      %p124 = scmp.eq.s32.totalorder %s39, 1
      %p125 = por %p123, %p124
      %p126 = scmp.ne.s32.totalorder %s117, %s118
      %p127 = scmp.eq.s32.totalorder %s39, 0
      %p128 = por %p126, %p127
      %p129 = scmp.ne.s32.totalorder %s117, %s118
      %p130 = scmp.eq.s32.totalorder %s40, 1
      %p131 = por %p129, %p130
      %p133 = scmp.ne.s32.totalorder %s118, %s132
      %p134 = scmp.eq.s32.totalorder %s40, 0
      %p135 = por %p133, %p134
      %s137 = sadd.s32 %s136, 1
      %p140 = scmp.eq.s32.totalorder %s34, 1
      %p141 = scmp.ne.s32.totalorder %s136, %s138
      %p142 = scmp.eq.s32.totalorder %s34, 0
      %p143 = por %p141, %p142
      %p144 = scmp.ne.s32.totalorder %s136, %s138
      %p145 = scmp.eq.s32.totalorder %s39, 1
      %p146 = por %p144, %p145
      %p147 = scmp.ne.s32.totalorder %s138, %s139
      %p148 = scmp.eq.s32.totalorder %s39, 0
      %p149 = por %p147, %p148
      %p150 = scmp.ne.s32.totalorder %s138, %s139
      %p151 = scmp.eq.s32.totalorder %s40, 1
      %p152 = por %p150, %p151
      %p154 = scmp.ne.s32.totalorder %s139, %s153
      %p155 = scmp.eq.s32.totalorder %s40, 0
      %p156 = por %p154, %p155
      %s158 = sadd.s32 %s157, 1
      %p161 = scmp.eq.s32.totalorder %s34, 1
      %p162 = scmp.ne.s32.totalorder %s157, %s159
      %p163 = scmp.eq.s32.totalorder %s34, 0
      %p164 = por %p162, %p163
      %p165 = scmp.ne.s32.totalorder %s157, %s159
      %p166 = scmp.eq.s32.totalorder %s39, 1
      %p167 = por %p165, %p166
      %p168 = scmp.ne.s32.totalorder %s159, %s160
      %p169 = scmp.eq.s32.totalorder %s39, 0
      %p170 = por %p168, %p169
      %p171 = scmp.ne.s32.totalorder %s159, %s160
      %p172 = scmp.eq.s32.totalorder %s40, 1
      %p173 = por %p171, %p172
      %p175 = scmp.ne.s32.totalorder %s160, %s174
      %p176 = scmp.eq.s32.totalorder %s40, 0
      %p177 = por %p175, %p176
      %s179 = sadd.s32 %s178, 1
      %p182 = scmp.eq.s32.totalorder %s34, 1
      %p183 = scmp.ne.s32.totalorder %s178, %s180
      %p184 = scmp.eq.s32.totalorder %s34, 0
      %p185 = por %p183, %p184
      %p186 = scmp.ne.s32.totalorder %s178, %s180
      %p187 = scmp.eq.s32.totalorder %s39, 1
      %p188 = por %p186, %p187
      %p189 = scmp.ne.s32.totalorder %s180, %s181
      %p190 = scmp.eq.s32.totalorder %s39, 0
      %p191 = por %p189, %p190
      %p192 = scmp.ne.s32.totalorder %s180, %s181
      %p193 = scmp.eq.s32.totalorder %s40, 1
      %p194 = por %p192, %p193
      %p196 = scmp.ne.s32.totalorder %s181, %s195
      %p197 = scmp.eq.s32.totalorder %s40, 0
      %p198 = por %p196, %p197
      %s200 = sadd.s32 %s199, 1
      %p203 = scmp.eq.s32.totalorder %s34, 1
      %p204 = scmp.ne.s32.totalorder %s199, %s201
      %p205 = scmp.eq.s32.totalorder %s34, 0
      %p206 = por %p204, %p205
      %p207 = scmp.ne.s32.totalorder %s199, %s201
      %p208 = scmp.eq.s32.totalorder %s39, 1
      %p209 = por %p207, %p208
      %p210 = scmp.ne.s32.totalorder %s201, %s202
      %p211 = scmp.eq.s32.totalorder %s39, 0
      %p212 = por %p210, %p211
      %p213 = scmp.ne.s32.totalorder %s201, %s202
      %p214 = scmp.eq.s32.totalorder %s40, 1
      %p215 = por %p213, %p214
      %p217 = scmp.ne.s32.totalorder %s202, %s216
      %p218 = scmp.eq.s32.totalorder %s40, 0
      %p219 = por %p217, %p218
      %s221 = sadd.s32 %s220, 1
      %p224 = scmp.eq.s32.totalorder %s34, 1
      %p225 = scmp.ne.s32.totalorder %s220, %s222
      %p226 = scmp.eq.s32.totalorder %s34, 0
      %p227 = por %p225, %p226
      %p228 = scmp.ne.s32.totalorder %s220, %s222
      %p229 = scmp.eq.s32.totalorder %s39, 1
      %p230 = por %p228, %p229
      %p231 = scmp.ne.s32.totalorder %s222, %s223
      %p232 = scmp.eq.s32.totalorder %s39, 0
      %p233 = por %p231, %p232
      %p234 = scmp.ne.s32.totalorder %s222, %s223
      %p235 = scmp.eq.s32.totalorder %s40, 1
      %p236 = por %p234, %p235
      %p238 = scmp.ne.s32.totalorder %s223, %s237
      %p239 = scmp.eq.s32.totalorder %s40, 0
      %p240 = por %p238, %p239
      %s242 = sadd.s32 %s241, 1
      %p245 = scmp.eq.s32.totalorder %s34, 1
      %p246 = scmp.ne.s32.totalorder %s241, %s243
      %p247 = scmp.eq.s32.totalorder %s34, 0
      %p248 = por %p246, %p247
      %p249 = scmp.ne.s32.totalorder %s241, %s243
      %p250 = scmp.eq.s32.totalorder %s39, 1
      %p251 = por %p249, %p250
      %p252 = scmp.ne.s32.totalorder %s243, %s244
      %p253 = scmp.eq.s32.totalorder %s39, 0
      %p254 = por %p252, %p253
      %p255 = scmp.ne.s32.totalorder %s243, %s244
      %p256 = scmp.eq.s32.totalorder %s40, 1
      %p257 = por %p255, %p256
      %p259 = scmp.ne.s32.totalorder %s244, %s258
      %p260 = scmp.eq.s32.totalorder %s40, 0
      %p261 = por %p259, %p260
      %s263 = sadd.s32 %s262, 1
      %p266 = scmp.eq.s32.totalorder %s34, 1
      %p267 = scmp.ne.s32.totalorder %s262, %s264
      %p268 = scmp.eq.s32.totalorder %s34, 0
      %p269 = por %p267, %p268
      %p270 = scmp.ne.s32.totalorder %s262, %s264
      %p271 = scmp.eq.s32.totalorder %s39, 1
      %p272 = por %p270, %p271
      %p273 = scmp.ne.s32.totalorder %s264, %s265
      %p274 = scmp.eq.s32.totalorder %s39, 0
      %p275 = por %p273, %p274
      %p276 = scmp.ne.s32.totalorder %s264, %s265
      %p277 = scmp.eq.s32.totalorder %s40, 1
      %p278 = por %p276, %p277
      %p280 = scmp.ne.s32.totalorder %s265, %s279
      %p281 = scmp.eq.s32.totalorder %s40, 0
      %p282 = por %p280, %p281
      %s284 = sadd.s32 %s283, 1
      %p287 = scmp.eq.s32.totalorder %s34, 1
      %p288 = scmp.ne.s32.totalorder %s283, %s285
      %p289 = scmp.eq.s32.totalorder %s34, 0
      %p290 = por %p288, %p289
      %p291 = scmp.ne.s32.totalorder %s283, %s285
      %p292 = scmp.eq.s32.totalorder %s39, 1
      %p293 = por %p291, %p292
      %p294 = scmp.ne.s32.totalorder %s285, %s286
      %p295 = scmp.eq.s32.totalorder %s39, 0
      %p296 = por %p294, %p295
      %p297 = scmp.ne.s32.totalorder %s285, %s286
      %p298 = scmp.eq.s32.totalorder %s40, 1
      %p299 = por %p297, %p298
      %p301 = scmp.ne.s32.totalorder %s286, %s300
      %p302 = scmp.eq.s32.totalorder %s40, 0
      %p303 = por %p301, %p302
      %s305 = sadd.s32 %s304, 1
      %p308 = scmp.eq.s32.totalorder %s34, 1
      %p309 = scmp.ne.s32.totalorder %s304, %s306
      %p310 = scmp.eq.s32.totalorder %s34, 0
      %p311 = por %p309, %p310
      %p312 = scmp.ne.s32.totalorder %s304, %s306
      %p313 = scmp.eq.s32.totalorder %s39, 1
      %p314 = por %p312, %p313
      %p315 = scmp.ne.s32.totalorder %s306, %s307
      %p316 = scmp.eq.s32.totalorder %s39, 0
      %p317 = por %p315, %p316
      %p318 = scmp.ne.s32.totalorder %s306, %s307
      %p319 = scmp.eq.s32.totalorder %s40, 1
      %p320 = por %p318, %p319
      %p322 = scmp.ne.s32.totalorder %s307, %s321
      %p323 = scmp.eq.s32.totalorder %s40, 0
      %p324 = por %p322, %p323
      %s326 = sadd.s32 %s325, 1
      %p329 = scmp.eq.s32.totalorder %s34, 1
      %p330 = scmp.ne.s32.totalorder %s325, %s327
      %p331 = scmp.eq.s32.totalorder %s34, 0
      %p332 = por %p330, %p331
      %p333 = scmp.ne.s32.totalorder %s325, %s327
      %p334 = scmp.eq.s32.totalorder %s39, 1
      %p335 = por %p333, %p334
      %p336 = scmp.ne.s32.totalorder %s327, %s328
      %p337 = scmp.eq.s32.totalorder %s39, 0
      %p338 = por %p336, %p337
      %p339 = scmp.ne.s32.totalorder %s327, %s328
      %p340 = scmp.eq.s32.totalorder %s40, 1
      %p341 = por %p339, %p340
      %p343 = scmp.ne.s32.totalorder %s328, %s342
      %p344 = scmp.eq.s32.totalorder %s40, 0
      %p345 = por %p343, %p344
      %s347 = sadd.s32 %s346, 1
      %p350 = scmp.eq.s32.totalorder %s34, 1
      %p351 = scmp.ne.s32.totalorder %s346, %s348
      %p352 = scmp.eq.s32.totalorder %s34, 0
      %p353 = por %p351, %p352
      %p354 = scmp.ne.s32.totalorder %s346, %s348
      %p355 = scmp.eq.s32.totalorder %s39, 1
      %p356 = por %p354, %p355
      %p357 = scmp.ne.s32.totalorder %s348, %s349
      %p358 = scmp.eq.s32.totalorder %s39, 0
      %p359 = por %p357, %p358
      %p360 = scmp.ne.s32.totalorder %s348, %s349
      %p361 = scmp.eq.s32.totalorder %s40, 1
      %p362 = por %p360, %p361
      %p364 = scmp.ne.s32.totalorder %s349, %s363
      %p365 = scmp.eq.s32.totalorder %s40, 0
      %p366 = por %p364, %p365
      %s368 = sadd.s32 %s367, 1
      %p371 = scmp.eq.s32.totalorder %s34, 1
      %p372 = scmp.ne.s32.totalorder %s367, %s369
      %p373 = scmp.eq.s32.totalorder %s34, 0
      %p374 = por %p372, %p373
      %p375 = scmp.ne.s32.totalorder %s367, %s369
      %p376 = scmp.eq.s32.totalorder %s39, 1
      %p377 = por %p375, %p376
      %p378 = scmp.ne.s32.totalorder %s369, %s370
      %p379 = scmp.eq.s32.totalorder %s39, 0
      %p380 = por %p378, %p379
      %p381 = scmp.ne.s32.totalorder %s369, %s370
      %p382 = scmp.eq.s32.totalorder %s40, 1
      %p383 = por %p381, %p382
      %p385 = scmp.ne.s32.totalorder %s370, %s384
      %p386 = scmp.eq.s32.totalorder %s40, 0
      %p387 = por %p385, %p386
      %s388 = ssub.s32 %s34, %s41
      %p389 = scmp.eq.s32.totalorder %s388, 0
      %s391 = sadd.s32 %s390, 1
      %s392 = scalar_select %p389, %s390, %s391
      %p395 = pneg %p389
      %p396 = scmp.eq.s32.totalorder %s34, 1
      %p397 = por %p395, %p396
      %p398 = scmp.ne.s32.totalorder %s390, %s393
      %p399 = scmp.eq.s32.totalorder %s34, 0
      %p400 = por %p398, %p399
      %p401 = scmp.ne.s32.totalorder %s390, %s393
      %p402 = scmp.eq.s32.totalorder %s39, 1
      %p403 = por %p401, %p402
      %p404 = scmp.ne.s32.totalorder %s393, %s394
      %p405 = scmp.eq.s32.totalorder %s39, 0
      %p406 = por %p404, %p405
      %p407 = scmp.ne.s32.totalorder %s393, %s394
      %p408 = scmp.eq.s32.totalorder %s40, 1
      %p409 = por %p407, %p408
      %p411 = scmp.ne.s32.totalorder %s394, %s410
      %p412 = scmp.eq.s32.totalorder %s40, 0
      %p413 = por %p411, %p412
      %p414 = scmp.le.s32.totalorder 1, %s34
      %p415 = scmp.lt.s32.totalorder %s34, 3
      %p416 = pnand %p414, %p415
      %p417 = pneg %p416
      // Predicated region
      $region9: #{tpu_custom_call.1} parent=5 // pred_check
        _
      $region10: #{tpu_custom_call.1} parent=5 // pred_check_branch
        %419 = sbr.rel (%p416) target = $region12
      $region11: #{tpu_custom_call.1} parent=5 // pred_region
        %s420 = ssub.s32 %s34, 1
        // Predicated region
        $region13: #{tpu_custom_call.1} parent=11 // pred_check
          %p421 = pneg %p107
        $region14: #{tpu_custom_call.1} parent=11 // pred_check_branch
          %423 = sbr.rel (%p421) target = $region16
        $region15: #{tpu_custom_call.1} parent=11 // pred_region
          %s425 = ssub.s32 8192, 8192
          %426 = vsyncadd [#allocation6], %s425
          %s427 = sshll.u32 [#allocation7], 4
          %s428 = int_to_ptr.vmem [resolvable:$true] %s427
          %433 = dma.hbm_to_vmem [thread:$0]  %s2, 8192, %s428, [#allocation6], 512, 512, 32
        $region16: #{tpu_custom_call.1} parent=11 // pred_fallthru
          _
        // Predicated region
        $region17: #{tpu_custom_call.1} parent=11 // pred_check
          %p434 = pneg %p128
        $region18: #{tpu_custom_call.1} parent=11 // pred_check_branch
          %436 = sbr.rel (%p434) target = $region20
        $region19: #{tpu_custom_call.1} parent=11 // pred_region
          %s438 = ssub.s32 128, 128
          %439 = vsyncadd [#allocation9], %s438
          %s441 = sshll.u32 [#allocation8], 4
          %s442 = int_to_ptr.vmem [resolvable:$true] %s441
          %444 = dma.hbm_to_vmem [thread:$0]  %s3, 128, %s442, [#allocation9]
        $region20: #{tpu_custom_call.1} parent=11 // pred_fallthru
          _
        // Predicated region
        $region21: #{tpu_custom_call.1} parent=11 // pred_check
          %p445 = pneg %p149
        $region22: #{tpu_custom_call.1} parent=11 // pred_check_branch
          %447 = sbr.rel (%p445) target = $region24
        $region23: #{tpu_custom_call.1} parent=11 // pred_region
          %s449 = ssub.s32 4096, 4096
          %450 = vsyncadd [#allocation9], %s449
          %s451 = sshll.u32 [#allocation10], 4
          %s452 = int_to_ptr.vmem [resolvable:$true] %s451
          %457 = dma.hbm_to_vmem [thread:$0]  %s4, 4096, %s452, [#allocation9], 256, 256, 16
        $region24: #{tpu_custom_call.1} parent=11 // pred_fallthru
          _
        // Predicated region
        $region25: #{tpu_custom_call.1} parent=11 // pred_check
          %p458 = pneg %p170
        $region26: #{tpu_custom_call.1} parent=11 // pred_check_branch
          %460 = sbr.rel (%p458) target = $region28
        $region27: #{tpu_custom_call.1} parent=11 // pred_region
          _
        $region28: #{tpu_custom_call.1} parent=11 // pred_fallthru
          _
        // Predicated region
        $region29: #{tpu_custom_call.1} parent=11 // pred_check
          %p461 = pneg %p191
        $region30: #{tpu_custom_call.1} parent=11 // pred_check_branch
          %463 = sbr.rel (%p461) target = $region32
        $region31: #{tpu_custom_call.1} parent=11 // pred_region
          %s465 = ssub.s32 4096, 4096
          %466 = vsyncadd [#allocation12], %s465
          %s467 = sshll.u32 [#allocation11], 4
          %s468 = int_to_ptr.vmem [resolvable:$true] %s467
          %473 = dma.hbm_to_vmem [thread:$0]  %s6, 4096, %s468, [#allocation12], 64, 64, 4
        $region32: #{tpu_custom_call.1} parent=11 // pred_fallthru
          _
        // Predicated region
        $region33: #{tpu_custom_call.1} parent=11 // pred_check
          %p474 = pneg %p212
        $region34: #{tpu_custom_call.1} parent=11 // pred_check_branch
          %476 = sbr.rel (%p474) target = $region36
        $region35: #{tpu_custom_call.1} parent=11 // pred_region
          _
        $region36: #{tpu_custom_call.1} parent=11 // pred_fallthru
          _
        // Predicated region
        $region37: #{tpu_custom_call.1} parent=11 // pred_check
          %p477 = pneg %p233
        $region38: #{tpu_custom_call.1} parent=11 // pred_check_branch
          %479 = sbr.rel (%p477) target = $region40
        $region39: #{tpu_custom_call.1} parent=11 // pred_region
          _
        $region40: #{tpu_custom_call.1} parent=11 // pred_fallthru
          _
        // Predicated region
        $region41: #{tpu_custom_call.1} parent=11 // pred_check
          %p480 = pneg %p254
        $region42: #{tpu_custom_call.1} parent=11 // pred_check_branch
          %482 = sbr.rel (%p480) target = $region44
        $region43: #{tpu_custom_call.1} parent=11 // pred_region
          _
        $region44: #{tpu_custom_call.1} parent=11 // pred_fallthru
          _
        // Predicated region
        $region45: #{tpu_custom_call.1} parent=11 // pred_check
          %p483 = pneg %p275
        $region46: #{tpu_custom_call.1} parent=11 // pred_check_branch
          %485 = sbr.rel (%p483) target = $region48
        $region47: #{tpu_custom_call.1} parent=11 // pred_region
          %s487 = ssub.s32 1024, 1024
          %488 = vsyncadd [#allocation12], %s487
          %s489 = sshll.u32 [#allocation13], 4
          %s490 = int_to_ptr.vmem [resolvable:$true] %s489
          %495 = dma.hbm_to_vmem [thread:$0]  %s10, 1024, %s490, [#allocation12], 64, 64, 4
        $region48: #{tpu_custom_call.1} parent=11 // pred_fallthru
          _
        // Predicated region
        $region49: #{tpu_custom_call.1} parent=11 // pred_check
          %p496 = pneg %p296
        $region50: #{tpu_custom_call.1} parent=11 // pred_check_branch
          %498 = sbr.rel (%p496) target = $region52
        $region51: #{tpu_custom_call.1} parent=11 // pred_region
          _
        $region52: #{tpu_custom_call.1} parent=11 // pred_fallthru
          _
        // Predicated region
        $region53: #{tpu_custom_call.1} parent=11 // pred_check
          %p499 = pneg %p317
        $region54: #{tpu_custom_call.1} parent=11 // pred_check_branch
          %501 = sbr.rel (%p499) target = $region56
        $region55: #{tpu_custom_call.1} parent=11 // pred_region
          %s503 = ssub.s32 1024, 1024
          %504 = vsyncadd [#allocation15], %s503
          %s505 = sshll.u32 [#allocation14], 4
          %s506 = int_to_ptr.vmem [resolvable:$true] %s505
          %511 = dma.hbm_to_vmem [thread:$0]  %s12, 1024, %s506, [#allocation15], 64, 64, 4
        $region56: #{tpu_custom_call.1} parent=11 // pred_fallthru
          _
        // Predicated region
        $region57: #{tpu_custom_call.1} parent=11 // pred_check
          %p512 = pneg %p338
        $region58: #{tpu_custom_call.1} parent=11 // pred_check_branch
          %514 = sbr.rel (%p512) target = $region60
        $region59: #{tpu_custom_call.1} parent=11 // pred_region
          _
        $region60: #{tpu_custom_call.1} parent=11 // pred_fallthru
          _
        // Predicated region
        $region61: #{tpu_custom_call.1} parent=11 // pred_check
          %p515 = pneg %p359
        $region62: #{tpu_custom_call.1} parent=11 // pred_check_branch
          %517 = sbr.rel (%p515) target = $region64
        $region63: #{tpu_custom_call.1} parent=11 // pred_region
          _
        $region64: #{tpu_custom_call.1} parent=11 // pred_fallthru
          _
        // Predicated region
        $region65: #{tpu_custom_call.1} parent=11 // pred_check
          %p518 = pneg %p380
        $region66: #{tpu_custom_call.1} parent=11 // pred_check_branch
          %520 = sbr.rel (%p518) target = $region68
        $region67: #{tpu_custom_call.1} parent=11 // pred_region
          _
        $region68: #{tpu_custom_call.1} parent=11 // pred_fallthru
          _
      $region12: #{tpu_custom_call.1} parent=5 // pred_fallthru
        _
      %p521 = scmp.lt.s32.totalorder %s34, 2
      // Predicated region
      $region69: #{tpu_custom_call.1} parent=5 // pred_check
        %p522 = pneg %p521
      $region70: #{tpu_custom_call.1} parent=5 // pred_check_branch
        %524 = sbr.rel (%p522) target = $region72
      $region71: #{tpu_custom_call.1} parent=5 // pred_region
        // Predicated region
        $region73: #{tpu_custom_call.1} parent=71 // pred_check
          %p525 = pneg %p54
        $region74: #{tpu_custom_call.1} parent=71 // pred_check_branch
          %527 = sbr.rel (%p525) target = $region76
        $region75: #{tpu_custom_call.1} parent=71 // pred_region
          %s528 = sand.u32 %s44, 1
          %s529 = scalar_lea.sflag [#allocation3], %s528
          %s530 = sand.u32 %s44, 1
          %s531 = smul.addr %s530, 8
          %s532 = scalar_lea.vmem [#allocation2], %s531
          %s534 = ssub.s32 128, 128
          %535 = vsyncadd %s529, %s534
          %s536 = smul.addr %s34, 128
          %s537 = scalar_lea.hbm %s0, %s536
          %s539 = sshll.u32 %s532, 4
          %s540 = int_to_ptr.vmem [resolvable:$true] %s539
          %542 = dma.hbm_to_vmem [thread:$0]  %s537, 128, %s540, %s529
        $region76: #{tpu_custom_call.1} parent=71 // pred_fallthru
          _
        // Predicated region
        $region77: #{tpu_custom_call.1} parent=71 // pred_check
          %p543 = pneg %p80
        $region78: #{tpu_custom_call.1} parent=71 // pred_check_branch
          %545 = sbr.rel (%p543) target = $region80
        $region79: #{tpu_custom_call.1} parent=71 // pred_region
          %s546 = sand.u32 %s34, 1
          %s547 = scalar_lea.sflag [#allocation6], %s546
          %s548 = sand.u32 %s70, 1
          %s549 = smul.addr %s548, 8
          %s550 = scalar_lea.vmem [#allocation5], %s549
          %s552 = ssub.s32 128, 128
          %553 = vsyncadd %s547, %s552
          %s554 = smul.addr %s34, 128
          %s555 = scalar_lea.hbm %s1, %s554
          %s557 = sshll.u32 %s550, 4
          %s558 = int_to_ptr.vmem [resolvable:$true] %s557
          %560 = dma.hbm_to_vmem [thread:$0]  %s555, 128, %s558, %s547
        $region80: #{tpu_custom_call.1} parent=71 // pred_fallthru
          _
      $region72: #{tpu_custom_call.1} parent=5 // pred_fallthru
        _
      %p561 = scmp.le.s32.totalorder 1, %s34
      %p562 = scmp.lt.s32.totalorder %s34, 3
      %p563 = pnand %p561, %p562
      %p564 = pneg %p563
      // Predicated region
      $region81: #{tpu_custom_call.1} parent=5 // pred_check
        _
      $region82: #{tpu_custom_call.1} parent=5 // pred_check_branch
        %566 = sbr.rel (%p563) target = $region84
      $region83: #{tpu_custom_call.1} parent=5 // pred_region
        %s567 = ssub.s32 %s34, 1
        %s568 = sand.u32 %s47, 1
        %s569 = scalar_lea.sflag [#allocation3], %s568
        %s570 = sand.u32 %s47, 1
        %s571 = smul.addr %s570, 8
        %s572 = scalar_lea.vmem [#allocation2], %s571
        // Predicated region
        $region85: #{tpu_custom_call.1} parent=83 // pred_check
          %p573 = pneg %p60
        $region86: #{tpu_custom_call.1} parent=83 // pred_check_branch
          %575 = sbr.rel (%p573) target = $region88
        $region87: #{tpu_custom_call.1} parent=83 // pred_region
          %576 = dma.done %s569, 128
        $region88: #{tpu_custom_call.1} parent=83 // pred_fallthru
          _
        %s577 = sand.u32 %s39, 1
        %s578 = scalar_lea.sflag [#allocation6], %s577
        %s579 = sand.u32 %s73, 1
        %s580 = smul.addr %s579, 8
        %s581 = scalar_lea.vmem [#allocation5], %s580
        // Predicated region
        $region89: #{tpu_custom_call.1} parent=83 // pred_check
          %p582 = pneg %p86
        $region90: #{tpu_custom_call.1} parent=83 // pred_check_branch
          %584 = sbr.rel (%p582) target = $region92
        $region91: #{tpu_custom_call.1} parent=83 // pred_region
          %585 = dma.done %s578, 128
        $region92: #{tpu_custom_call.1} parent=83 // pred_fallthru
          _
        // Predicated region
        $region93: #{tpu_custom_call.1} parent=83 // pred_check
          %p586 = pneg %p107
        $region94: #{tpu_custom_call.1} parent=83 // pred_check_branch
          %588 = sbr.rel (%p586) target = $region96
        $region95: #{tpu_custom_call.1} parent=83 // pred_region
          %589 = dma.done [#allocation6], 8192
        $region96: #{tpu_custom_call.1} parent=83 // pred_fallthru
          _
        // Predicated region
        $region97: #{tpu_custom_call.1} parent=83 // pred_check
          %p590 = pneg %p128
        $region98: #{tpu_custom_call.1} parent=83 // pred_check_branch
          %592 = sbr.rel (%p590) target = $region100
        $region99: #{tpu_custom_call.1} parent=83 // pred_region
          %593 = dma.done [#allocation9], 128
        $region100: #{tpu_custom_call.1} parent=83 // pred_fallthru
          _
        // Predicated region
        $region101: #{tpu_custom_call.1} parent=83 // pred_check
          %p594 = pneg %p149
        $region102: #{tpu_custom_call.1} parent=83 // pred_check_branch
          %596 = sbr.rel (%p594) target = $region104
        $region103: #{tpu_custom_call.1} parent=83 // pred_region
          %597 = dma.done [#allocation9], 4096
        $region104: #{tpu_custom_call.1} parent=83 // pred_fallthru
          _
        // Predicated region
        $region105: #{tpu_custom_call.1} parent=83 // pred_check
          %p598 = pneg %p191
        $region106: #{tpu_custom_call.1} parent=83 // pred_check_branch
          %600 = sbr.rel (%p598) target = $region108
        $region107: #{tpu_custom_call.1} parent=83 // pred_region
          %601 = dma.done [#allocation12], 4096
        $region108: #{tpu_custom_call.1} parent=83 // pred_fallthru
          _
        // Predicated region
        $region109: #{tpu_custom_call.1} parent=83 // pred_check
          %p602 = pneg %p275
        $region110: #{tpu_custom_call.1} parent=83 // pred_check_branch
          %604 = sbr.rel (%p602) target = $region112
        $region111: #{tpu_custom_call.1} parent=83 // pred_region
          %605 = dma.done [#allocation12], 1024
        $region112: #{tpu_custom_call.1} parent=83 // pred_fallthru
          _
        // Predicated region
        $region113: #{tpu_custom_call.1} parent=83 // pred_check
          %p606 = pneg %p317
        $region114: #{tpu_custom_call.1} parent=83 // pred_check_branch
          %608 = sbr.rel (%p606) target = $region116
        $region115: #{tpu_custom_call.1} parent=83 // pred_region
          %609 = dma.done [#allocation15], 1024
        $region116: #{tpu_custom_call.1} parent=83 // pred_fallthru
          _
        %s610 = sand.u32 %s47, 1
        %s611 = scalar_lea.sflag [#allocation3], %s610
        %s612 = sand.u32 %s47, 1
        %s613 = smul.addr %s612, 8
        %s614 = scalar_lea.vmem [#allocation2], %s613
        %p615 = pneg %p60
        %p616 = pneg %p57
        %s617 = sand.u32 %s39, 1
        %s618 = scalar_lea.sflag [#allocation6], %s617
        %s619 = sand.u32 %s73, 1
        %s620 = smul.addr %s619, 8
        %s621 = scalar_lea.vmem [#allocation5], %s620
        %p622 = pneg %p86
        %p623 = pneg %p83
        %p624 = pneg %p107
        %p625 = pneg %p104
        %p626 = pneg %p128
        %p627 = pneg %p125
        %p628 = pneg %p149
        %p629 = pneg %p146
        %p630 = pneg %p170
        %p631 = pneg %p167
        %p632 = pneg %p191
        %p633 = pneg %p188
        %p634 = pneg %p212
        %p635 = pneg %p209
        %p636 = pneg %p233
        %p637 = pneg %p230
        %p638 = pneg %p254
        %p639 = pneg %p251
        %p640 = pneg %p275
        %p641 = pneg %p272
        %p642 = pneg %p296
        %p643 = pneg %p293
        %p644 = pneg %p317
        %p645 = pneg %p314
        %p646 = pneg %p338
        %p647 = pneg %p335
        %p648 = pneg %p359
        %p649 = pneg %p356
        %p650 = pneg %p380
        %p651 = pneg %p377
        %p652 = pneg %p406
        %p653 = pneg %p403
        %s654 = sand.u32 %s393, 1
        %s655 = scalar_lea.sflag [#allocation4], %s654
        %s656 = sand.u32 %s393, 1
        %s657 = smul.addr %s656, 8
        %s658 = scalar_lea.vmem [#allocation16], %s657
        %v660 = vld [vmem:[%s572] sm:$0xff]
        %v661 = vld [vmem:[%s581] sm:$0xff]
        %v662 = vadd.f32 %v660, %v661
        %v663 = vpack.c.bf16 %v662, %v662
        %v664 = vpack.c.bf16 %v660, %v660
        %v665 = vlaneseq
        %v666 = vand.u32 %v665, 127
        %vm667 = vcmp.lt.s32.totalorder %v666, 32
        %v668 = vsel %vm667, 1, 0
        %v669 = vcvt.s32.f32 %v668
        %v670 = vld [vmem:[#allocation7] sm:$0xff]
        %v671 = vld [vmem:[#allocation7 + $0x8] sm:$0xff]
        %v672 = vld [vmem:[#allocation7 + $0x10] sm:$0xff]
        %v673 = vld [vmem:[#allocation7 + $0x18] sm:$0xff]
        %v674 = vld [vmem:[#allocation7 + $0x20] sm:$0xff]
        %v675 = vld [vmem:[#allocation7 + $0x28] sm:$0xff]
        %v676 = vld [vmem:[#allocation7 + $0x30] sm:$0xff]
        %v677 = vld [vmem:[#allocation7 + $0x38] sm:$0xff]
        %v678 = vld [vmem:[#allocation7 + $0x40] sm:$0xff]
        %v679 = vld [vmem:[#allocation7 + $0x48] sm:$0xff]
        %v680 = vld [vmem:[#allocation7 + $0x50] sm:$0xff]
        %v681 = vld [vmem:[#allocation7 + $0x58] sm:$0xff]
        %v682 = vld [vmem:[#allocation7 + $0x60] sm:$0xff]
        %v683 = vld [vmem:[#allocation7 + $0x68] sm:$0xff]
        %v684 = vld [vmem:[#allocation7 + $0x70] sm:$0xff]
        %v685 = vld [vmem:[#allocation7 + $0x78] sm:$0xff]
        %v686 = vld [vmem:[#allocation7 + $0x80] sm:$0xff]
        %v687 = vld [vmem:[#allocation7 + $0x88] sm:$0xff]
        %v688 = vld [vmem:[#allocation7 + $0x90] sm:$0xff]
        %v689 = vld [vmem:[#allocation7 + $0x98] sm:$0xff]
        %v690 = vld [vmem:[#allocation7 + $0xa0] sm:$0xff]
        %v691 = vld [vmem:[#allocation7 + $0xa8] sm:$0xff]
        %v692 = vld [vmem:[#allocation7 + $0xb0] sm:$0xff]
        %v693 = vld [vmem:[#allocation7 + $0xb8] sm:$0xff]
        %v694 = vld [vmem:[#allocation7 + $0xc0] sm:$0xff]
        %v695 = vld [vmem:[#allocation7 + $0xc8] sm:$0xff]
        %v696 = vld [vmem:[#allocation7 + $0xd0] sm:$0xff]
        %v697 = vld [vmem:[#allocation7 + $0xd8] sm:$0xff]
        %v698 = vld [vmem:[#allocation7 + $0xe0] sm:$0xff]
        %v699 = vld [vmem:[#allocation7 + $0xe8] sm:$0xff]
        %v700 = vld [vmem:[#allocation7 + $0xf0] sm:$0xff]
        %v701 = vld [vmem:[#allocation7 + $0xf8] sm:$0xff]
        %v702 = vld [vmem:[#allocation7 + $0x100] sm:$0xff]
        %v703 = vld [vmem:[#allocation7 + $0x108] sm:$0xff]
        %v704 = vld [vmem:[#allocation7 + $0x110] sm:$0xff]
        %v705 = vld [vmem:[#allocation7 + $0x118] sm:$0xff]
        %v706 = vld [vmem:[#allocation7 + $0x120] sm:$0xff]
        %v707 = vld [vmem:[#allocation7 + $0x128] sm:$0xff]
        %v708 = vld [vmem:[#allocation7 + $0x130] sm:$0xff]
        %v709 = vld [vmem:[#allocation7 + $0x138] sm:$0xff]
        %v710 = vld [vmem:[#allocation7 + $0x140] sm:$0xff]
        %v711 = vld [vmem:[#allocation7 + $0x148] sm:$0xff]
        %v712 = vld [vmem:[#allocation7 + $0x150] sm:$0xff]
        %v713 = vld [vmem:[#allocation7 + $0x158] sm:$0xff]
        %v714 = vld [vmem:[#allocation7 + $0x160] sm:$0xff]
        %v715 = vld [vmem:[#allocation7 + $0x168] sm:$0xff]
        %v716 = vld [vmem:[#allocation7 + $0x170] sm:$0xff]
        %v717 = vld [vmem:[#allocation7 + $0x178] sm:$0xff]
        %v718 = vld [vmem:[#allocation7 + $0x180] sm:$0xff]
        %v719 = vld [vmem:[#allocation7 + $0x188] sm:$0xff]
        %v720 = vld [vmem:[#allocation7 + $0x190] sm:$0xff]
        %v721 = vld [vmem:[#allocation7 + $0x198] sm:$0xff]
        %v722 = vld [vmem:[#allocation7 + $0x1a0] sm:$0xff]
        %v723 = vld [vmem:[#allocation7 + $0x1a8] sm:$0xff]
        %v724 = vld [vmem:[#allocation7 + $0x1b0] sm:$0xff]
        %v725 = vld [vmem:[#allocation7 + $0x1b8] sm:$0xff]
        %v726 = vld [vmem:[#allocation7 + $0x1c0] sm:$0xff]
        %v727 = vld [vmem:[#allocation7 + $0x1c8] sm:$0xff]
        %v728 = vld [vmem:[#allocation7 + $0x1d0] sm:$0xff]
        %v729 = vld [vmem:[#allocation7 + $0x1d8] sm:$0xff]
        %v730 = vld [vmem:[#allocation7 + $0x1e0] sm:$0xff]
        %v731 = vld [vmem:[#allocation7 + $0x1e8] sm:$0xff]
        %v732 = vld [vmem:[#allocation7 + $0x1f0] sm:$0xff]
        %v733 = vld [vmem:[#allocation7 + $0x1f8] sm:$0xff]
        %v734 = vld [vmem:[#allocation8] sm:$0xff]
        %v736 = vlaneseq
        %v737 = vshrl.u32 %v736, 7
        %v738 = vsub.s32 0, %v737
        %v739 = vrot.slane %v734, %v738
        %v740 = vlaneseq
        %v741 = vshrl.u32 %v740, 7
        %v742 = vsub.s32 1, %v741
        %v743 = vrot.slane %v734, %v742
        %v744 = vlaneseq
        %v745 = vshrl.u32 %v744, 7
        %v746 = vsub.s32 2, %v745
        %v747 = vrot.slane %v734, %v746
        %v748 = vlaneseq
        %v749 = vshrl.u32 %v748, 7
        %v750 = vsub.s32 3, %v749
        %v751 = vrot.slane %v734, %v750
        %v752 = vlaneseq
        %v753 = vshrl.u32 %v752, 7
        %v754 = vsub.s32 4, %v753
        %v755 = vrot.slane %v734, %v754
        %v756 = vlaneseq
        %v757 = vshrl.u32 %v756, 7
        %v758 = vsub.s32 5, %v757
        %v759 = vrot.slane %v734, %v758
        %v760 = vlaneseq
        %v761 = vshrl.u32 %v760, 7
        %v762 = vsub.s32 6, %v761
        %v763 = vrot.slane %v734, %v762
        %v764 = vlaneseq
        %v765 = vshrl.u32 %v764, 7
        %v766 = vsub.s32 7, %v765
        %v767 = vrot.slane %v734, %v766
        %v840 = vunpack.c.l.b16 %v670
        %v841 = vunpack.c.h.b16 %v670
        %v842 = vunpack.c.l.b16 %v671
        %v843 = vunpack.c.h.b16 %v671
        %v844 = vunpack.c.l.b16 %v672
        %v845 = vunpack.c.h.b16 %v672
        %v846 = vunpack.c.l.b16 %v673
        %v847 = vunpack.c.h.b16 %v673
        %v848 = vunpack.c.l.b16 %v674
        %v849 = vunpack.c.h.b16 %v674
        %v850 = vunpack.c.l.b16 %v675
        %v851 = vunpack.c.h.b16 %v675
        %v852 = vunpack.c.l.b16 %v676
        %v853 = vunpack.c.h.b16 %v676
        %v854 = vunpack.c.l.b16 %v677
        %v855 = vunpack.c.h.b16 %v677
        %v856 = vunpack.c.l.b16 %v678
        %v857 = vunpack.c.h.b16 %v678
        %v858 = vunpack.c.l.b16 %v679
        %v859 = vunpack.c.h.b16 %v679
        %v860 = vunpack.c.l.b16 %v680
        %v861 = vunpack.c.h.b16 %v680
        %v862 = vunpack.c.l.b16 %v681
        %v863 = vunpack.c.h.b16 %v681
        %v864 = vunpack.c.l.b16 %v682
        %v865 = vunpack.c.h.b16 %v682
        %v866 = vunpack.c.l.b16 %v683
        %v867 = vunpack.c.h.b16 %v683
        %v868 = vunpack.c.l.b16 %v684
        %v869 = vunpack.c.h.b16 %v684
        %v870 = vunpack.c.l.b16 %v685
        %v871 = vunpack.c.h.b16 %v685
        %v872 = vunpack.c.l.b16 %v686
        %v873 = vunpack.c.h.b16 %v686
        %v874 = vunpack.c.l.b16 %v687
        %v875 = vunpack.c.h.b16 %v687
        %v876 = vunpack.c.l.b16 %v688
        %v877 = vunpack.c.h.b16 %v688
        %v878 = vunpack.c.l.b16 %v689
        %v879 = vunpack.c.h.b16 %v689
        %v880 = vunpack.c.l.b16 %v690
        %v881 = vunpack.c.h.b16 %v690
        %v882 = vunpack.c.l.b16 %v691
        %v883 = vunpack.c.h.b16 %v691
        %v884 = vunpack.c.l.b16 %v692
        %v885 = vunpack.c.h.b16 %v692
        %v886 = vunpack.c.l.b16 %v693
        %v887 = vunpack.c.h.b16 %v693
        %v888 = vunpack.c.l.b16 %v694
        %v889 = vunpack.c.h.b16 %v694
        %v890 = vunpack.c.l.b16 %v695
        %v891 = vunpack.c.h.b16 %v695
        %v892 = vunpack.c.l.b16 %v696
        %v893 = vunpack.c.h.b16 %v696
        %v894 = vunpack.c.l.b16 %v697
        %v895 = vunpack.c.h.b16 %v697
        %v896 = vunpack.c.l.b16 %v698
        %v897 = vunpack.c.h.b16 %v698
        %v898 = vunpack.c.l.b16 %v699
        %v899 = vunpack.c.h.b16 %v699
        %v900 = vunpack.c.l.b16 %v700
        %v901 = vunpack.c.h.b16 %v700
        %v902 = vunpack.c.l.b16 %v701
        %v903 = vunpack.c.h.b16 %v701
        %v904 = vunpack.c.l.b16 %v702
        %v905 = vunpack.c.h.b16 %v702
        %v906 = vunpack.c.l.b16 %v703
        %v907 = vunpack.c.h.b16 %v703
        %v908 = vunpack.c.l.b16 %v704
        %v909 = vunpack.c.h.b16 %v704
        %v910 = vunpack.c.l.b16 %v705
        %v911 = vunpack.c.h.b16 %v705
        %v912 = vunpack.c.l.b16 %v706
        %v913 = vunpack.c.h.b16 %v706
        %v914 = vunpack.c.l.b16 %v707
        %v915 = vunpack.c.h.b16 %v707
        %v916 = vunpack.c.l.b16 %v708
        %v917 = vunpack.c.h.b16 %v708
        %v918 = vunpack.c.l.b16 %v709
        %v919 = vunpack.c.h.b16 %v709
        %v920 = vunpack.c.l.b16 %v710
        %v921 = vunpack.c.h.b16 %v710
        %v922 = vunpack.c.l.b16 %v711
        %v923 = vunpack.c.h.b16 %v711
        %v924 = vunpack.c.l.b16 %v712
        %v925 = vunpack.c.h.b16 %v712
        %v926 = vunpack.c.l.b16 %v713
        %v927 = vunpack.c.h.b16 %v713
        %v928 = vunpack.c.l.b16 %v714
        %v929 = vunpack.c.h.b16 %v714
        %v930 = vunpack.c.l.b16 %v715
        %v931 = vunpack.c.h.b16 %v715
        %v932 = vunpack.c.l.b16 %v716
        %v933 = vunpack.c.h.b16 %v716
        %v934 = vunpack.c.l.b16 %v717
        %v935 = vunpack.c.h.b16 %v717
        %v936 = vunpack.c.l.b16 %v718
        %v937 = vunpack.c.h.b16 %v718
        %v938 = vunpack.c.l.b16 %v719
        %v939 = vunpack.c.h.b16 %v719
        %v940 = vunpack.c.l.b16 %v720
        %v941 = vunpack.c.h.b16 %v720
        %v942 = vunpack.c.l.b16 %v721
        %v943 = vunpack.c.h.b16 %v721
        %v944 = vunpack.c.l.b16 %v722
        %v945 = vunpack.c.h.b16 %v722
        %v946 = vunpack.c.l.b16 %v723
        %v947 = vunpack.c.h.b16 %v723
        %v948 = vunpack.c.l.b16 %v724
        %v949 = vunpack.c.h.b16 %v724
        %v950 = vunpack.c.l.b16 %v725
        %v951 = vunpack.c.h.b16 %v725
        %v952 = vunpack.c.l.b16 %v726
        %v953 = vunpack.c.h.b16 %v726
        %v954 = vunpack.c.l.b16 %v727
        %v955 = vunpack.c.h.b16 %v727
        %v956 = vunpack.c.l.b16 %v728
        %v957 = vunpack.c.h.b16 %v728
        %v958 = vunpack.c.l.b16 %v729
        %v959 = vunpack.c.h.b16 %v729
        %v960 = vunpack.c.l.b16 %v730
        %v961 = vunpack.c.h.b16 %v730
        %v962 = vunpack.c.l.b16 %v731
        %v963 = vunpack.c.h.b16 %v731
        %v964 = vunpack.c.l.b16 %v732
        %v965 = vunpack.c.h.b16 %v732
        %v966 = vunpack.c.l.b16 %v733
        %v967 = vunpack.c.h.b16 %v733
        %v968 = vpack.c.b16 %v848, %v840
        %v969 = vpack.c.b16 %v849, %v841
        %v970 = vpack.c.b16 %v850, %v842
        %v971 = vpack.c.b16 %v851, %v843
        %v972 = vpack.c.b16 %v852, %v844
        %v973 = vpack.c.b16 %v853, %v845
        %v974 = vpack.c.b16 %v854, %v846
        %v975 = vpack.c.b16 %v855, %v847
        %v976 = vpack.c.b16 %v864, %v856
        %v977 = vpack.c.b16 %v865, %v857
        %v978 = vpack.c.b16 %v866, %v858
        %v979 = vpack.c.b16 %v867, %v859
        %v980 = vpack.c.b16 %v868, %v860
        %v981 = vpack.c.b16 %v869, %v861
        %v982 = vpack.c.b16 %v870, %v862
        %v983 = vpack.c.b16 %v871, %v863
        %v984 = vpack.c.b16 %v880, %v872
        %v985 = vpack.c.b16 %v881, %v873
        %v986 = vpack.c.b16 %v882, %v874
        %v987 = vpack.c.b16 %v883, %v875
        %v988 = vpack.c.b16 %v884, %v876
        %v989 = vpack.c.b16 %v885, %v877
        %v990 = vpack.c.b16 %v886, %v878
        %v991 = vpack.c.b16 %v887, %v879
        %v992 = vpack.c.b16 %v896, %v888
        %v993 = vpack.c.b16 %v897, %v889
        %v994 = vpack.c.b16 %v898, %v890
        %v995 = vpack.c.b16 %v899, %v891
        %v996 = vpack.c.b16 %v900, %v892
        %v997 = vpack.c.b16 %v901, %v893
        %v998 = vpack.c.b16 %v902, %v894
        %v999 = vpack.c.b16 %v903, %v895
        %v1000 = vpack.c.b16 %v912, %v904
        %v1001 = vpack.c.b16 %v913, %v905
        %v1002 = vpack.c.b16 %v914, %v906
        %v1003 = vpack.c.b16 %v915, %v907
        %v1004 = vpack.c.b16 %v916, %v908
        %v1005 = vpack.c.b16 %v917, %v909
        %v1006 = vpack.c.b16 %v918, %v910
        %v1007 = vpack.c.b16 %v919, %v911
        %v1008 = vpack.c.b16 %v928, %v920
        %v1009 = vpack.c.b16 %v929, %v921
        %v1010 = vpack.c.b16 %v930, %v922
        %v1011 = vpack.c.b16 %v931, %v923
        %v1012 = vpack.c.b16 %v932, %v924
        %v1013 = vpack.c.b16 %v933, %v925
        %v1014 = vpack.c.b16 %v934, %v926
        %v1015 = vpack.c.b16 %v935, %v927
        %v1016 = vpack.c.b16 %v944, %v936
        %v1017 = vpack.c.b16 %v945, %v937
        %v1018 = vpack.c.b16 %v946, %v938
        %v1019 = vpack.c.b16 %v947, %v939
        %v1020 = vpack.c.b16 %v948, %v940
        %v1021 = vpack.c.b16 %v949, %v941
        %v1022 = vpack.c.b16 %v950, %v942
        %v1023 = vpack.c.b16 %v951, %v943
        %v1024 = vpack.c.b16 %v960, %v952
        %v1025 = vpack.c.b16 %v961, %v953
        %v1026 = vpack.c.b16 %v962, %v954
        %v1027 = vpack.c.b16 %v963, %v955
        %v1028 = vpack.c.b16 %v964, %v956
        %v1029 = vpack.c.b16 %v965, %v957
        %v1030 = vpack.c.b16 %v966, %v958
        %v1031 = vpack.c.b16 %v967, %v959
        %1096 = vmatprep.subr.bf16.mxu0 %v1025
        %1097 = vmatpush1.bf16.msra.mxu0 %v1024
        %1098 = vmatprep.subr.bf16.mxu0 %v1017
        %1099 = vmatpush1.bf16.msra.mxu0 %v1016
        %1100 = vmatprep.subr.bf16.mxu0 %v1009
        %1101 = vmatpush1.bf16.msra.mxu0 %v1008
        %1102 = vmatprep.subr.bf16.mxu0 %v1001
        %1103 = vmatpush1.bf16.msra.mxu0 %v1000
        %1104 = vmatprep.subr.bf16.mxu0 %v993
        %1105 = vmatpush1.bf16.msra.mxu0 %v992
        %1106 = vmatprep.subr.bf16.mxu0 %v985
        %1107 = vmatpush1.bf16.msra.mxu0 %v984
        %1108 = vmatprep.subr.bf16.mxu0 %v977
        %1109 = vmatpush1.bf16.msra.mxu0 %v976
        %1110 = vmatprep.subr.bf16.mxu0 %v969
        %1111 = vmatpush1.bf16.msra.mxu0 %v968
        %1112 = vmatprep.subr.bf16.mxu0 0
        %1113 = vmatpush2.bf16.msra.mxu0 0
        %1114 = vmatprep.subr.bf16.mxu0 0
        %1115 = vmatpush2.bf16.msra.mxu0 0
        %1116 = vmatprep.subr.bf16.mxu0 0
        %1117 = vmatpush2.bf16.msra.mxu0 0
        %1118 = vmatprep.subr.bf16.mxu0 0
        %1119 = vmatpush2.bf16.msra.mxu0 0
        %1120 = vmatprep.subr.bf16.mxu0 0
        %1121 = vmatpush2.bf16.msra.mxu0 0
        %1122 = vmatprep.subr.bf16.mxu0 0
        %1123 = vmatpush2.bf16.msra.mxu0 0
        %1124 = vmatprep.subr.bf16.mxu0 0
        %1125 = vmatpush2.bf16.msra.mxu0 0
        %1126 = vmatprep.subr.bf16.mxu0 0
        %1127 = vmatpush2.bf16.msra.mxu0 0
        %1128 = vmatprep.mubr.bf16.mxu0 0
        %1129 = vmatmul.mubr.bf16.gmra.mxu0 %v663
        %v1130 = vpop.f32.mrf.mxu0
        %v1131 = vadd.f32 %v739, %v1130
        %v1132 = vpop.f32.mrf.mxu0
        %v1133 = vadd.f32 %v743, %v1132
        %v1134 = vpop.f32.mrf.mxu0
        %v1135 = vpop.f32.mrf.mxu0
        %1136 = vdwg.mxu0
        %1137 = vmatprep.subr.bf16.mxu0 %v1027
        %1138 = vmatpush1.bf16.msra.mxu0 %v1026
        %1139 = vmatprep.subr.bf16.mxu0 %v1019
        %1140 = vmatpush1.bf16.msra.mxu0 %v1018
        %1141 = vmatprep.subr.bf16.mxu0 %v1011
        %1142 = vmatpush1.bf16.msra.mxu0 %v1010
        %1143 = vmatprep.subr.bf16.mxu0 %v1003
        %1144 = vmatpush1.bf16.msra.mxu0 %v1002
        %1145 = vmatprep.subr.bf16.mxu0 %v995
        %1146 = vmatpush1.bf16.msra.mxu0 %v994
        %1147 = vmatprep.subr.bf16.mxu0 %v987
        %1148 = vmatpush1.bf16.msra.mxu0 %v986
        %1149 = vmatprep.subr.bf16.mxu0 %v979
        %1150 = vmatpush1.bf16.msra.mxu0 %v978
        %1151 = vmatprep.subr.bf16.mxu0 %v971
        %1152 = vmatpush1.bf16.msra.mxu0 %v970
        %1153 = vmatprep.subr.bf16.mxu0 0
        %1154 = vmatpush2.bf16.msra.mxu0 0
        %1155 = vmatprep.subr.bf16.mxu0 0
        %1156 = vmatpush2.bf16.msra.mxu0 0
        %1157 = vmatprep.subr.bf16.mxu0 0
        %1158 = vmatpush2.bf16.msra.mxu0 0
        %1159 = vmatprep.subr.bf16.mxu0 0
        %1160 = vmatpush2.bf16.msra.mxu0 0
        %1161 = vmatprep.subr.bf16.mxu0 0
        %1162 = vmatpush2.bf16.msra.mxu0 0
        %1163 = vmatprep.subr.bf16.mxu0 0
        %1164 = vmatpush2.bf16.msra.mxu0 0
        %1165 = vmatprep.subr.bf16.mxu0 0
        %1166 = vmatpush2.bf16.msra.mxu0 0
        %1167 = vmatprep.subr.bf16.mxu0 0
        %1168 = vmatpush2.bf16.msra.mxu0 0
        %1169 = vmatprep.mubr.bf16.mxu0 0
        %1170 = vmatmul.mubr.bf16.gmra.mxu0 %v663
        %v1171 = vpop.f32.mrf.mxu0
        %v1172 = vadd.f32 %v747, %v1171
        %v1173 = vpop.f32.mrf.mxu0
        %v1174 = vadd.f32 %v751, %v1173
        %v1175 = vpop.f32.mrf.mxu0
        %v1176 = vpop.f32.mrf.mxu0
        %1177 = vdwg.mxu0
        %1178 = vmatprep.subr.bf16.mxu0 %v1029
        %1179 = vmatpush1.bf16.msra.mxu0 %v1028
        %1180 = vmatprep.subr.bf16.mxu0 %v1021
        %1181 = vmatpush1.bf16.msra.mxu0 %v1020
        %1182 = vmatprep.subr.bf16.mxu0 %v1013
        %1183 = vmatpush1.bf16.msra.mxu0 %v1012
        %1184 = vmatprep.subr.bf16.mxu0 %v1005
        %1185 = vmatpush1.bf16.msra.mxu0 %v1004
        %1186 = vmatprep.subr.bf16.mxu0 %v997
        %1187 = vmatpush1.bf16.msra.mxu0 %v996
        %1188 = vmatprep.subr.bf16.mxu0 %v989
        %1189 = vmatpush1.bf16.msra.mxu0 %v988
        %1190 = vmatprep.subr.bf16.mxu0 %v981
        %1191 = vmatpush1.bf16.msra.mxu0 %v980
        %1192 = vmatprep.subr.bf16.mxu0 %v973
        %1193 = vmatpush1.bf16.msra.mxu0 %v972
        %1194 = vmatprep.subr.bf16.mxu0 0
        %1195 = vmatpush2.bf16.msra.mxu0 0
        %1196 = vmatprep.subr.bf16.mxu0 0
        %1197 = vmatpush2.bf16.msra.mxu0 0
        %1198 = vmatprep.subr.bf16.mxu0 0
        %1199 = vmatpush2.bf16.msra.mxu0 0
        %1200 = vmatprep.subr.bf16.mxu0 0
        %1201 = vmatpush2.bf16.msra.mxu0 0
        %1202 = vmatprep.subr.bf16.mxu0 0
        %1203 = vmatpush2.bf16.msra.mxu0 0
        %1204 = vmatprep.subr.bf16.mxu0 0
        %1205 = vmatpush2.bf16.msra.mxu0 0
        %1206 = vmatprep.subr.bf16.mxu0 0
        %1207 = vmatpush2.bf16.msra.mxu0 0
        %1208 = vmatprep.subr.bf16.mxu0 0
        %1209 = vmatpush2.bf16.msra.mxu0 0
        %1210 = vmatprep.mubr.bf16.mxu0 0
        %1211 = vmatmul.mubr.bf16.gmra.mxu0 %v663
        %v1212 = vpop.f32.mrf.mxu0
        %v1213 = vadd.f32 %v755, %v1212
        %v1214 = vpop.f32.mrf.mxu0
        %v1215 = vadd.f32 %v759, %v1214
        %v1216 = vpop.f32.mrf.mxu0
        %v1217 = vpop.f32.mrf.mxu0
        %1218 = vdwg.mxu0
        %1219 = vmatprep.subr.bf16.mxu0 %v1031
        %1220 = vmatpush1.bf16.msra.mxu0 %v1030
        %1221 = vmatprep.subr.bf16.mxu0 %v1023
        %1222 = vmatpush1.bf16.msra.mxu0 %v1022
        %1223 = vmatprep.subr.bf16.mxu0 %v1015
        %1224 = vmatpush1.bf16.msra.mxu0 %v1014
        %1225 = vmatprep.subr.bf16.mxu0 %v1007
        %1226 = vmatpush1.bf16.msra.mxu0 %v1006
        %1227 = vmatprep.subr.bf16.mxu0 %v999
        %1228 = vmatpush1.bf16.msra.mxu0 %v998
        %1229 = vmatprep.subr.bf16.mxu0 %v991
        %1230 = vmatpush1.bf16.msra.mxu0 %v990
        %1231 = vmatprep.subr.bf16.mxu0 %v983
        %1232 = vmatpush1.bf16.msra.mxu0 %v982
        %1233 = vmatprep.subr.bf16.mxu0 %v975
        %1234 = vmatpush1.bf16.msra.mxu0 %v974
        %1235 = vmatprep.subr.bf16.mxu0 0
        %1236 = vmatpush2.bf16.msra.mxu0 0
        %1237 = vmatprep.subr.bf16.mxu0 0
        %1238 = vmatpush2.bf16.msra.mxu0 0
        %1239 = vmatprep.subr.bf16.mxu0 0
        %1240 = vmatpush2.bf16.msra.mxu0 0
        %1241 = vmatprep.subr.bf16.mxu0 0
        %1242 = vmatpush2.bf16.msra.mxu0 0
        %1243 = vmatprep.subr.bf16.mxu0 0
        %1244 = vmatpush2.bf16.msra.mxu0 0
        %1245 = vmatprep.subr.bf16.mxu0 0
        %1246 = vmatpush2.bf16.msra.mxu0 0
        %1247 = vmatprep.subr.bf16.mxu0 0
        %1248 = vmatpush2.bf16.msra.mxu0 0
        %1249 = vmatprep.subr.bf16.mxu0 0
        %1250 = vmatpush2.bf16.msra.mxu0 0
        %1251 = vmatprep.mubr.bf16.mxu0 0
        %1252 = vmatmul.mubr.bf16.gmra.mxu0 %v663
        %v1253 = vpop.f32.mrf.mxu0
        %v1254 = vadd.f32 %v763, %v1253
        %v1255 = vpop.f32.mrf.mxu0
        %v1256 = vadd.f32 %v767, %v1255
        %v1257 = vpop.f32.mrf.mxu0
        %v1258 = vpop.f32.mrf.mxu0
        %1259 = vdwg.mxu0
        %v1260 = vld [vmem:[#allocation10] sm:$0xff]
        %v1261 = vld [vmem:[#allocation10 + $0x8] sm:$0xff]
        %v1262 = vld [vmem:[#allocation10 + $0x10] sm:$0xff]
        %v1263 = vld [vmem:[#allocation10 + $0x18] sm:$0xff]
        %v1264 = vld [vmem:[#allocation10 + $0x20] sm:$0xff]
        %v1265 = vld [vmem:[#allocation10 + $0x28] sm:$0xff]
        %v1266 = vld [vmem:[#allocation10 + $0x30] sm:$0xff]
        %v1267 = vld [vmem:[#allocation10 + $0x38] sm:$0xff]
        %v1268 = vld [vmem:[#allocation10 + $0x40] sm:$0xff]
        %v1269 = vld [vmem:[#allocation10 + $0x48] sm:$0xff]
        %v1270 = vld [vmem:[#allocation10 + $0x50] sm:$0xff]
        %v1271 = vld [vmem:[#allocation10 + $0x58] sm:$0xff]
        %v1272 = vld [vmem:[#allocation10 + $0x60] sm:$0xff]
        %v1273 = vld [vmem:[#allocation10 + $0x68] sm:$0xff]
        %v1274 = vld [vmem:[#allocation10 + $0x70] sm:$0xff]
        %v1275 = vld [vmem:[#allocation10 + $0x78] sm:$0xff]
        %v1276 = vld [vmem:[#allocation10 + $0x80] sm:$0xff]
        %v1277 = vld [vmem:[#allocation10 + $0x88] sm:$0xff]
        %v1278 = vld [vmem:[#allocation10 + $0x90] sm:$0xff]
        %v1279 = vld [vmem:[#allocation10 + $0x98] sm:$0xff]
        %v1280 = vld [vmem:[#allocation10 + $0xa0] sm:$0xff]
        %v1281 = vld [vmem:[#allocation10 + $0xa8] sm:$0xff]
        %v1282 = vld [vmem:[#allocation10 + $0xb0] sm:$0xff]
        %v1283 = vld [vmem:[#allocation10 + $0xb8] sm:$0xff]
        %v1284 = vld [vmem:[#allocation10 + $0xc0] sm:$0xff]
        %v1285 = vld [vmem:[#allocation10 + $0xc8] sm:$0xff]
        %v1286 = vld [vmem:[#allocation10 + $0xd0] sm:$0xff]
        %v1287 = vld [vmem:[#allocation10 + $0xd8] sm:$0xff]
        %v1288 = vld [vmem:[#allocation10 + $0xe0] sm:$0xff]
        %v1289 = vld [vmem:[#allocation10 + $0xe8] sm:$0xff]
        %v1290 = vld [vmem:[#allocation10 + $0xf0] sm:$0xff]
        %v1291 = vld [vmem:[#allocation10 + $0xf8] sm:$0xff]
        %v1292 = vld [vmem:[%s5] sm:$0xf]
        %v1294 = vlaneseq
        %v1295 = vshrl.u32 %v1294, 7
        %v1296 = vsub.s32 0, %v1295
        %v1297 = vrot.slane %v1292, %v1296
        %v1298 = vlaneseq
        %v1299 = vshrl.u32 %v1298, 7
        %v1300 = vsub.s32 1, %v1299
        %v1301 = vrot.slane %v1292, %v1300
        %v1302 = vlaneseq
        %v1303 = vshrl.u32 %v1302, 7
        %v1304 = vsub.s32 2, %v1303
        %v1305 = vrot.slane %v1292, %v1304
        %v1306 = vlaneseq
        %v1307 = vshrl.u32 %v1306, 7
        %v1308 = vsub.s32 3, %v1307
        %v1309 = vrot.slane %v1292, %v1308
        %v1346 = vunpack.c.l.b16 %v1260
        %v1347 = vunpack.c.h.b16 %v1260
        %v1348 = vunpack.c.l.b16 %v1261
        %v1349 = vunpack.c.h.b16 %v1261
        %v1350 = vunpack.c.l.b16 %v1262
        %v1351 = vunpack.c.h.b16 %v1262
        %v1352 = vunpack.c.l.b16 %v1263
        %v1353 = vunpack.c.h.b16 %v1263
        %v1354 = vunpack.c.l.b16 %v1264
        %v1355 = vunpack.c.h.b16 %v1264
        %v1356 = vunpack.c.l.b16 %v1265
        %v1357 = vunpack.c.h.b16 %v1265
        %v1358 = vunpack.c.l.b16 %v1266
        %v1359 = vunpack.c.h.b16 %v1266
        %v1360 = vunpack.c.l.b16 %v1267
        %v1361 = vunpack.c.h.b16 %v1267
        %v1362 = vunpack.c.l.b16 %v1268
        %v1363 = vunpack.c.h.b16 %v1268
        %v1364 = vunpack.c.l.b16 %v1269
        %v1365 = vunpack.c.h.b16 %v1269
        %v1366 = vunpack.c.l.b16 %v1270
        %v1367 = vunpack.c.h.b16 %v1270
        %v1368 = vunpack.c.l.b16 %v1271
        %v1369 = vunpack.c.h.b16 %v1271
        %v1370 = vunpack.c.l.b16 %v1272
        %v1371 = vunpack.c.h.b16 %v1272
        %v1372 = vunpack.c.l.b16 %v1273
        %v1373 = vunpack.c.h.b16 %v1273
        %v1374 = vunpack.c.l.b16 %v1274
        %v1375 = vunpack.c.h.b16 %v1274
        %v1376 = vunpack.c.l.b16 %v1275
        %v1377 = vunpack.c.h.b16 %v1275
        %v1378 = vunpack.c.l.b16 %v1276
        %v1379 = vunpack.c.h.b16 %v1276
        %v1380 = vunpack.c.l.b16 %v1277
        %v1381 = vunpack.c.h.b16 %v1277
        %v1382 = vunpack.c.l.b16 %v1278
        %v1383 = vunpack.c.h.b16 %v1278
        %v1384 = vunpack.c.l.b16 %v1279
        %v1385 = vunpack.c.h.b16 %v1279
        %v1386 = vunpack.c.l.b16 %v1280
        %v1387 = vunpack.c.h.b16 %v1280
        %v1388 = vunpack.c.l.b16 %v1281
        %v1389 = vunpack.c.h.b16 %v1281
        %v1390 = vunpack.c.l.b16 %v1282
        %v1391 = vunpack.c.h.b16 %v1282
        %v1392 = vunpack.c.l.b16 %v1283
        %v1393 = vunpack.c.h.b16 %v1283
        %v1394 = vunpack.c.l.b16 %v1284
        %v1395 = vunpack.c.h.b16 %v1284
        %v1396 = vunpack.c.l.b16 %v1285
        %v1397 = vunpack.c.h.b16 %v1285
        %v1398 = vunpack.c.l.b16 %v1286
        %v1399 = vunpack.c.h.b16 %v1286
        %v1400 = vunpack.c.l.b16 %v1287
        %v1401 = vunpack.c.h.b16 %v1287
        %v1402 = vunpack.c.l.b16 %v1288
        %v1403 = vunpack.c.h.b16 %v1288
        %v1404 = vunpack.c.l.b16 %v1289
        %v1405 = vunpack.c.h.b16 %v1289
        %v1406 = vunpack.c.l.b16 %v1290
        %v1407 = vunpack.c.h.b16 %v1290
        %v1408 = vunpack.c.l.b16 %v1291
        %v1409 = vunpack.c.h.b16 %v1291
        %v1410 = vpack.c.b16 %v1350, %v1346
        %v1411 = vpack.c.b16 %v1351, %v1347
        %v1412 = vpack.c.b16 %v1352, %v1348
        %v1413 = vpack.c.b16 %v1353, %v1349
        %v1414 = vpack.c.b16 %v1358, %v1354
        %v1415 = vpack.c.b16 %v1359, %v1355
        %v1416 = vpack.c.b16 %v1360, %v1356
        %v1417 = vpack.c.b16 %v1361, %v1357
        %v1418 = vpack.c.b16 %v1366, %v1362
        %v1419 = vpack.c.b16 %v1367, %v1363
        %v1420 = vpack.c.b16 %v1368, %v1364
        %v1421 = vpack.c.b16 %v1369, %v1365
        %v1422 = vpack.c.b16 %v1374, %v1370
        %v1423 = vpack.c.b16 %v1375, %v1371
        %v1424 = vpack.c.b16 %v1376, %v1372
        %v1425 = vpack.c.b16 %v1377, %v1373
        %v1426 = vpack.c.b16 %v1382, %v1378
        %v1427 = vpack.c.b16 %v1383, %v1379
        %v1428 = vpack.c.b16 %v1384, %v1380
        %v1429 = vpack.c.b16 %v1385, %v1381
        %v1430 = vpack.c.b16 %v1390, %v1386
        %v1431 = vpack.c.b16 %v1391, %v1387
        %v1432 = vpack.c.b16 %v1392, %v1388
        %v1433 = vpack.c.b16 %v1393, %v1389
        %v1434 = vpack.c.b16 %v1398, %v1394
        %v1435 = vpack.c.b16 %v1399, %v1395
        %v1436 = vpack.c.b16 %v1400, %v1396
        %v1437 = vpack.c.b16 %v1401, %v1397
        %v1438 = vpack.c.b16 %v1406, %v1402
        %v1439 = vpack.c.b16 %v1407, %v1403
        %v1440 = vpack.c.b16 %v1408, %v1404
        %v1441 = vpack.c.b16 %v1409, %v1405
        %1474 = vmatprep.subr.bf16.mxu0 %v1439
        %1475 = vmatpush1.bf16.msra.mxu0 %v1438
        %1476 = vmatprep.subr.bf16.mxu0 %v1435
        %1477 = vmatpush1.bf16.msra.mxu0 %v1434
        %1478 = vmatprep.subr.bf16.mxu0 %v1431
        %1479 = vmatpush1.bf16.msra.mxu0 %v1430
        %1480 = vmatprep.subr.bf16.mxu0 %v1427
        %1481 = vmatpush1.bf16.msra.mxu0 %v1426
        %1482 = vmatprep.subr.bf16.mxu0 %v1423
        %1483 = vmatpush1.bf16.msra.mxu0 %v1422
        %1484 = vmatprep.subr.bf16.mxu0 %v1419
        %1485 = vmatpush1.bf16.msra.mxu0 %v1418
        %1486 = vmatprep.subr.bf16.mxu0 %v1415
        %1487 = vmatpush1.bf16.msra.mxu0 %v1414
        %1488 = vmatprep.subr.bf16.mxu0 %v1411
        %1489 = vmatpush1.bf16.msra.mxu0 %v1410
        %1490 = vmatprep.subr.bf16.mxu0 0
        %1491 = vmatpush2.bf16.msra.mxu0 0
        %1492 = vmatprep.subr.bf16.mxu0 0
        %1493 = vmatpush2.bf16.msra.mxu0 0
        %1494 = vmatprep.subr.bf16.mxu0 0
        %1495 = vmatpush2.bf16.msra.mxu0 0
        %1496 = vmatprep.subr.bf16.mxu0 0
        %1497 = vmatpush2.bf16.msra.mxu0 0
        %1498 = vmatprep.subr.bf16.mxu0 0
        %1499 = vmatpush2.bf16.msra.mxu0 0
        %1500 = vmatprep.subr.bf16.mxu0 0
        %1501 = vmatpush2.bf16.msra.mxu0 0
        %1502 = vmatprep.subr.bf16.mxu0 0
        %1503 = vmatpush2.bf16.msra.mxu0 0
        %1504 = vmatprep.subr.bf16.mxu0 0
        %1505 = vmatpush2.bf16.msra.mxu0 0
        %1506 = vmatprep.mubr.bf16.mxu0 0
        %1507 = vmatmul.mubr.bf16.gmra.mxu0 %v664
        %v1508 = vpop.f32.mrf.mxu0
        %v1509 = vadd.f32 %v1297, %v1508
        %v1510 = vpop.f32.mrf.mxu0
        %v1511 = vadd.f32 %v1301, %v1510
        %v1512 = vpop.f32.mrf.mxu0
        %v1513 = vpop.f32.mrf.mxu0
        %1514 = vdwg.mxu0
        %1515 = vmatprep.subr.bf16.mxu0 %v1441
        %1516 = vmatpush1.bf16.msra.mxu0 %v1440
        %1517 = vmatprep.subr.bf16.mxu0 %v1437
        %1518 = vmatpush1.bf16.msra.mxu0 %v1436
        %1519 = vmatprep.subr.bf16.mxu0 %v1433
        %1520 = vmatpush1.bf16.msra.mxu0 %v1432
        %1521 = vmatprep.subr.bf16.mxu0 %v1429
        %1522 = vmatpush1.bf16.msra.mxu0 %v1428
        %1523 = vmatprep.subr.bf16.mxu0 %v1425
        %1524 = vmatpush1.bf16.msra.mxu0 %v1424
        %1525 = vmatprep.subr.bf16.mxu0 %v1421
        %1526 = vmatpush1.bf16.msra.mxu0 %v1420
        %1527 = vmatprep.subr.bf16.mxu0 %v1417
        %1528 = vmatpush1.bf16.msra.mxu0 %v1416
        %1529 = vmatprep.subr.bf16.mxu0 %v1413
        %1530 = vmatpush1.bf16.msra.mxu0 %v1412
        %1531 = vmatprep.subr.bf16.mxu0 0
        %1532 = vmatpush2.bf16.msra.mxu0 0
        %1533 = vmatprep.subr.bf16.mxu0 0
        %1534 = vmatpush2.bf16.msra.mxu0 0
        %1535 = vmatprep.subr.bf16.mxu0 0
        %1536 = vmatpush2.bf16.msra.mxu0 0
        %1537 = vmatprep.subr.bf16.mxu0 0
        %1538 = vmatpush2.bf16.msra.mxu0 0
        %1539 = vmatprep.subr.bf16.mxu0 0
        %1540 = vmatpush2.bf16.msra.mxu0 0
        %1541 = vmatprep.subr.bf16.mxu0 0
        %1542 = vmatpush2.bf16.msra.mxu0 0
        %1543 = vmatprep.subr.bf16.mxu0 0
        %1544 = vmatpush2.bf16.msra.mxu0 0
        %1545 = vmatprep.subr.bf16.mxu0 0
        %1546 = vmatpush2.bf16.msra.mxu0 0
        %1547 = vmatprep.mubr.bf16.mxu0 0
        %1548 = vmatmul.mubr.bf16.gmra.mxu0 %v664
        %v1549 = vpop.f32.mrf.mxu0
        %v1550 = vadd.f32 %v1305, %v1549
        %v1551 = vpop.f32.mrf.mxu0
        %v1552 = vadd.f32 %v1309, %v1551
        %v1553 = vpop.f32.mrf.mxu0
        %v1554 = vpop.f32.mrf.mxu0
        %1555 = vdwg.mxu0
        %v1556 = vpack.c.bf16 %v1131, %v1131
        %v1557 = vpack.c.bf16 %v1133, %v1133
        %v1558 = vpack.c.bf16 %v1172, %v1172
        %v1559 = vpack.c.bf16 %v1174, %v1174
        %v1560 = vpack.c.bf16 %v1213, %v1213
        %v1561 = vpack.c.bf16 %v1215, %v1215
        %v1562 = vpack.c.bf16 %v1254, %v1254
        %v1563 = vpack.c.bf16 %v1256, %v1256
        %v1564 = vpack.c.bf16 %v1509, %v1509
        %v1565 = vpack.c.bf16 %v1511, %v1511
        %v1566 = vpack.c.bf16 %v1550, %v1550
        %v1567 = vpack.c.bf16 %v1552, %v1552
        %1568 = vmatprep.subr.bf16.mxu0 0
        %1569 = vmatpush1.bf16.xpose.msra.mxu0 0
        %1570 = vmatprep.subr.bf16.mxu0 0
        %1571 = vmatpush1.bf16.xpose.msra.mxu0 0
        %1572 = vmatprep.subr.bf16.mxu0 0
        %1573 = vmatpush1.bf16.xpose.msra.mxu0 0
        %1574 = vmatprep.subr.bf16.mxu0 0
        %1575 = vmatpush1.bf16.xpose.msra.mxu0 0
        %1576 = vmatprep.subr.bf16.mxu0 0
        %1577 = vmatpush1.bf16.xpose.msra.mxu0 0
        %1578 = vmatprep.subr.bf16.mxu0 0
        %1579 = vmatpush1.bf16.xpose.msra.mxu0 0
        %1580 = vmatprep.subr.bf16.mxu0 0
        %1581 = vmatpush1.bf16.xpose.msra.mxu0 0
        %1582 = vmatprep.subr.bf16.mxu0 0
        %1583 = vmatpush1.bf16.xpose.msra.mxu0 %v1560
        %1584 = vmatprep.subr.bf16.mxu0 0
        %1585 = vmatpush2.bf16.xpose.msra.mxu0 0
        %1586 = vmatprep.subr.bf16.mxu0 0
        %1587 = vmatpush2.bf16.xpose.msra.mxu0 0
        %1588 = vmatprep.subr.bf16.mxu0 0
        %1589 = vmatpush2.bf16.xpose.msra.mxu0 0
        %1590 = vmatprep.subr.bf16.mxu0 0
        %1591 = vmatpush2.bf16.xpose.msra.mxu0 0
        %1592 = vmatprep.subr.bf16.mxu0 0
        %1593 = vmatpush2.bf16.xpose.msra.mxu0 0
        %1594 = vmatprep.subr.bf16.mxu0 0
        %1595 = vmatpush2.bf16.xpose.msra.mxu0 0
        %1596 = vmatprep.subr.bf16.mxu0 0
        %1597 = vmatpush2.bf16.xpose.msra.mxu0 0
        %1598 = vmatprep.subr.bf16.mxu0 0
        %1599 = vmatpush2.bf16.xpose.msra.mxu0 0
        %1600 = vmatprep.mubr.bf16.mxu0 0
        %1601 = vmatmul.mubr.bf16.gmra.mxu0 %v1556
        %v1602 = vpop.f32.mrf.mxu0
        %v1603 = vadd.f32 0.0, %v1602
        %v1604 = vpop.f32.mrf.mxu0
        %v1605 = vpop.f32.mrf.mxu0
        %v1606 = vpop.f32.mrf.mxu0
        %1607 = vdwg.mxu0
        %vm1608 = vcmask 64512
        %v1609 = vsel %vm1608, %v1603, -inf
        %1610 = vmax.xlane.f32.xlu0 %v1609
        %v1611 = vpop.xlane.xlu0 %1610
        %v1612 = vsub.f32 %v1603, %v1611
        %v1613 = vmul.f32 %v1612, 1.442695
        %v1614 = vpow.pop %v1613
        %v1615 = vsel %vm1608, %v1614, 0.0
        %1616 = vadd.xlane.f32.xlu0 %v1615
        %v1617 = vpop.xlane.xlu0 %1616
        %v1618 = vrcp.pop %v1617
        %v1619 = vmul.f32 %v1614, %v1618
        %v1620 = vpack.c.bf16 %v1619, %v1619
        %v1622 = vsel %vm1608, %v1620, 0
        %vm1624 = vcmask 1043456
        %v1626 = vsel %vm1624, %v1564, 0
        %1628 = vmatprep.subr.bf16.mxu0 0
        %1629 = vmatpush1.bf16.msra.mxu0 0
        %1630 = vmatprep.subr.bf16.mxu0 0
        %1631 = vmatpush1.bf16.msra.mxu0 0
        %1632 = vmatprep.subr.bf16.mxu0 0
        %1633 = vmatpush1.bf16.msra.mxu0 0
        %1634 = vmatprep.subr.bf16.mxu0 0
        %1635 = vmatpush1.bf16.msra.mxu0 0
        %1636 = vmatprep.subr.bf16.mxu0 0
        %1637 = vmatpush1.bf16.msra.mxu0 0
        %1638 = vmatprep.subr.bf16.mxu0 0
        %1639 = vmatpush1.bf16.msra.mxu0 0
        %1640 = vmatprep.subr.bf16.mxu0 0
        %1641 = vmatpush1.bf16.msra.mxu0 0
        %1642 = vmatprep.subr.bf16.mxu0 0
        %1643 = vmatpush1.bf16.msra.mxu0 %v1626
        %1644 = vmatprep.subr.bf16.mxu0 0
        %1645 = vmatpush2.bf16.msra.mxu0 0
        %1646 = vmatprep.subr.bf16.mxu0 0
        %1647 = vmatpush2.bf16.msra.mxu0 0
        %1648 = vmatprep.subr.bf16.mxu0 0
        %1649 = vmatpush2.bf16.msra.mxu0 0
        %1650 = vmatprep.subr.bf16.mxu0 0
        %1651 = vmatpush2.bf16.msra.mxu0 0
        %1652 = vmatprep.subr.bf16.mxu0 0
        %1653 = vmatpush2.bf16.msra.mxu0 0
        %1654 = vmatprep.subr.bf16.mxu0 0
        %1655 = vmatpush2.bf16.msra.mxu0 0
        %1656 = vmatprep.subr.bf16.mxu0 0
        %1657 = vmatpush2.bf16.msra.mxu0 0
        %1658 = vmatprep.subr.bf16.mxu0 0
        %1659 = vmatpush2.bf16.msra.mxu0 0
        %1660 = vmatprep.mubr.bf16.mxu0 0
        %1661 = vmatmul.mubr.bf16.gmra.mxu0 %v1622
        %v1662 = vpop.f32.mrf.mxu0
        %v1663 = vadd.f32 0.0, %v1662
        %v1664 = vpop.f32.mrf.mxu0
        %v1665 = vpop.f32.mrf.mxu0
        %v1666 = vpop.f32.mrf.mxu0
        %1667 = vdwg.mxu0
        %v1668 = vpack.c.bf16 %v1663, %v1663
        %v1669 = vld [vmem:[#allocation11] sm:$0xf]
        %v1670 = vld [vmem:[#allocation11 + $0x4] sm:$0xf]
        %v1671 = vld [vmem:[#allocation11 + $0x8] sm:$0xf]
        %v1672 = vld [vmem:[#allocation11 + $0xc] sm:$0xf]
        %v1673 = vld [vmem:[#allocation11 + $0x10] sm:$0xf]
        %v1674 = vld [vmem:[#allocation11 + $0x14] sm:$0xf]
        %v1675 = vld [vmem:[#allocation11 + $0x18] sm:$0xf]
        %v1676 = vld [vmem:[#allocation11 + $0x1c] sm:$0xf]
        %v1677 = vld [vmem:[#allocation11 + $0x20] sm:$0xf]
        %v1678 = vld [vmem:[#allocation11 + $0x24] sm:$0xf]
        %v1679 = vld [vmem:[#allocation11 + $0x28] sm:$0xf]
        %v1680 = vld [vmem:[#allocation11 + $0x2c] sm:$0xf]
        %v1681 = vld [vmem:[#allocation11 + $0x30] sm:$0xf]
        %v1682 = vld [vmem:[#allocation11 + $0x34] sm:$0xf]
        %v1683 = vld [vmem:[#allocation11 + $0x38] sm:$0xf]
        %v1684 = vld [vmem:[#allocation11 + $0x3c] sm:$0xf]
        %1685 = vmatprep.subr.bf16.mxu0 0
        %1686 = vmatpush1.bf16.xpose.msra.mxu0 0
        %1687 = vmatprep.subr.bf16.mxu0 0
        %1688 = vmatpush1.bf16.xpose.msra.mxu0 0
        %1689 = vmatprep.subr.bf16.mxu0 0
        %1690 = vmatpush1.bf16.xpose.msra.mxu0 0
        %1691 = vmatprep.subr.bf16.mxu0 0
        %1692 = vmatpush1.bf16.xpose.msra.mxu0 0
        %1693 = vmatprep.subr.bf16.mxu0 0
        %1694 = vmatpush1.bf16.xpose.msra.mxu0 0
        %1695 = vmatprep.subr.bf16.mxu0 0
        %1696 = vmatpush1.bf16.xpose.msra.mxu0 0
        %1697 = vmatprep.subr.bf16.mxu0 0
        %1698 = vmatpush1.bf16.xpose.msra.mxu0 0
        %1699 = vmatprep.subr.bf16.mxu0 0
        %1700 = vmatpush1.bf16.xpose.msra.mxu0 %v1561
        %1701 = vmatprep.subr.bf16.mxu0 0
        %1702 = vmatpush2.bf16.xpose.msra.mxu0 0
        %1703 = vmatprep.subr.bf16.mxu0 0
        %1704 = vmatpush2.bf16.xpose.msra.mxu0 0
        %1705 = vmatprep.subr.bf16.mxu0 0
        %1706 = vmatpush2.bf16.xpose.msra.mxu0 0
        %1707 = vmatprep.subr.bf16.mxu0 0
        %1708 = vmatpush2.bf16.xpose.msra.mxu0 0
        %1709 = vmatprep.subr.bf16.mxu0 0
        %1710 = vmatpush2.bf16.xpose.msra.mxu0 0
        %1711 = vmatprep.subr.bf16.mxu0 0
        %1712 = vmatpush2.bf16.xpose.msra.mxu0 0
        %1713 = vmatprep.subr.bf16.mxu0 0
        %1714 = vmatpush2.bf16.xpose.msra.mxu0 0
        %1715 = vmatprep.subr.bf16.mxu0 0
        %1716 = vmatpush2.bf16.xpose.msra.mxu0 0
        %1717 = vmatprep.mubr.bf16.mxu0 0
        %1718 = vmatmul.mubr.bf16.gmra.mxu0 %v1557
        %v1719 = vpop.f32.mrf.mxu0
        %v1720 = vadd.f32 0.0, %v1719
        %v1721 = vpop.f32.mrf.mxu0
        %v1722 = vpop.f32.mrf.mxu0
        %v1723 = vpop.f32.mrf.mxu0
        %1724 = vdwg.mxu0
        %v1725 = vsel %vm1608, %v1720, -inf
        %1726 = vmax.xlane.f32.xlu0 %v1725
        %v1727 = vpop.xlane.xlu0 %1726
        %v1728 = vsub.f32 %v1720, %v1727
        %v1729 = vmul.f32 %v1728, 1.442695
        %v1730 = vpow.pop %v1729
        %v1731 = vsel %vm1608, %v1730, 0.0
        %1732 = vadd.xlane.f32.xlu0 %v1731
        %v1733 = vpop.xlane.xlu0 %1732
        %v1734 = vrcp.pop %v1733
        %v1735 = vmul.f32 %v1730, %v1734
        %v1736 = vpack.c.bf16 %v1735, %v1735
        %v1738 = vsel %vm1608, %v1736, 0
        %v1741 = vsel %vm1624, %v1565, 0
        %1743 = vmatprep.subr.bf16.mxu0 0
        %1744 = vmatpush1.bf16.msra.mxu0 0
        %1745 = vmatprep.subr.bf16.mxu0 0
        %1746 = vmatpush1.bf16.msra.mxu0 0
        %1747 = vmatprep.subr.bf16.mxu0 0
        %1748 = vmatpush1.bf16.msra.mxu0 0
        %1749 = vmatprep.subr.bf16.mxu0 0
        %1750 = vmatpush1.bf16.msra.mxu0 0
        %1751 = vmatprep.subr.bf16.mxu0 0
        %1752 = vmatpush1.bf16.msra.mxu0 0
        %1753 = vmatprep.subr.bf16.mxu0 0
        %1754 = vmatpush1.bf16.msra.mxu0 0
        %1755 = vmatprep.subr.bf16.mxu0 0
        %1756 = vmatpush1.bf16.msra.mxu0 0
        %1757 = vmatprep.subr.bf16.mxu0 0
        %1758 = vmatpush1.bf16.msra.mxu0 %v1741
        %1759 = vmatprep.subr.bf16.mxu0 0
        %1760 = vmatpush2.bf16.msra.mxu0 0
        %1761 = vmatprep.subr.bf16.mxu0 0
        %1762 = vmatpush2.bf16.msra.mxu0 0
        %1763 = vmatprep.subr.bf16.mxu0 0
        %1764 = vmatpush2.bf16.msra.mxu0 0
        %1765 = vmatprep.subr.bf16.mxu0 0
        %1766 = vmatpush2.bf16.msra.mxu0 0
        %1767 = vmatprep.subr.bf16.mxu0 0
        %1768 = vmatpush2.bf16.msra.mxu0 0
        %1769 = vmatprep.subr.bf16.mxu0 0
        %1770 = vmatpush2.bf16.msra.mxu0 0
        %1771 = vmatprep.subr.bf16.mxu0 0
        %1772 = vmatpush2.bf16.msra.mxu0 0
        %1773 = vmatprep.subr.bf16.mxu0 0
        %1774 = vmatpush2.bf16.msra.mxu0 0
        %1775 = vmatprep.mubr.bf16.mxu0 0
        %1776 = vmatmul.mubr.bf16.gmra.mxu0 %v1738
        %v1777 = vpop.f32.mrf.mxu0
        %v1778 = vadd.f32 0.0, %v1777
        %v1779 = vpop.f32.mrf.mxu0
        %v1780 = vpop.f32.mrf.mxu0
        %v1781 = vpop.f32.mrf.mxu0
        %1782 = vdwg.mxu0
        %v1783 = vpack.c.bf16 %v1778, %v1778
        %s1784 = scalar_lea.vmem [#allocation11], 64
        %v1785 = vld [vmem:[%s1784] sm:$0xf]
        %v1786 = vld [vmem:[%s1784 + $0x4] sm:$0xf]
        %v1787 = vld [vmem:[%s1784 + $0x8] sm:$0xf]
        %v1788 = vld [vmem:[%s1784 + $0xc] sm:$0xf]
        %v1789 = vld [vmem:[%s1784 + $0x10] sm:$0xf]
        %v1790 = vld [vmem:[%s1784 + $0x14] sm:$0xf]
        %v1791 = vld [vmem:[%s1784 + $0x18] sm:$0xf]
        %v1792 = vld [vmem:[%s1784 + $0x1c] sm:$0xf]
        %v1793 = vld [vmem:[%s1784 + $0x20] sm:$0xf]
        %v1794 = vld [vmem:[%s1784 + $0x24] sm:$0xf]
        %v1795 = vld [vmem:[%s1784 + $0x28] sm:$0xf]
        %v1796 = vld [vmem:[%s1784 + $0x2c] sm:$0xf]
        %v1797 = vld [vmem:[%s1784 + $0x30] sm:$0xf]
        %v1798 = vld [vmem:[%s1784 + $0x34] sm:$0xf]
        %v1799 = vld [vmem:[%s1784 + $0x38] sm:$0xf]
        %v1800 = vld [vmem:[%s1784 + $0x3c] sm:$0xf]
        %v1817 = vunpack.c.l.b16 %v1785
        %v1818 = vunpack.c.l.b16 %v1786
        %v1819 = vunpack.c.l.b16 %v1787
        %v1820 = vunpack.c.l.b16 %v1788
        %v1821 = vunpack.c.l.b16 %v1789
        %v1822 = vunpack.c.l.b16 %v1790
        %v1823 = vunpack.c.l.b16 %v1791
        %v1824 = vunpack.c.l.b16 %v1792
        %v1825 = vunpack.c.l.b16 %v1793
        %v1826 = vunpack.c.l.b16 %v1794
        %v1827 = vunpack.c.l.b16 %v1795
        %v1828 = vunpack.c.l.b16 %v1796
        %v1829 = vunpack.c.l.b16 %v1797
        %v1830 = vunpack.c.l.b16 %v1798
        %v1831 = vunpack.c.l.b16 %v1799
        %v1832 = vunpack.c.l.b16 %v1800
        %v1833 = vpack.c.b16 %v1818, %v1817
        %v1834 = vpack.c.b16 %v1820, %v1819
        %v1835 = vpack.c.b16 %v1822, %v1821
        %v1836 = vpack.c.b16 %v1824, %v1823
        %v1837 = vpack.c.b16 %v1826, %v1825
        %v1838 = vpack.c.b16 %v1828, %v1827
        %v1839 = vpack.c.b16 %v1830, %v1829
        %v1840 = vpack.c.b16 %v1832, %v1831
        %1849 = vmatprep.subr.bf16.mxu0 0
        %1850 = vmatpush1.bf16.msra.mxu0 %v1840
        %1851 = vmatprep.subr.bf16.mxu0 0
        %1852 = vmatpush1.bf16.msra.mxu0 %v1839
        %1853 = vmatprep.subr.bf16.mxu0 0
        %1854 = vmatpush1.bf16.msra.mxu0 %v1838
        %1855 = vmatprep.subr.bf16.mxu0 0
        %1856 = vmatpush1.bf16.msra.mxu0 %v1837
        %1857 = vmatprep.subr.bf16.mxu0 0
        %1858 = vmatpush1.bf16.msra.mxu0 %v1836
        %1859 = vmatprep.subr.bf16.mxu0 0
        %1860 = vmatpush1.bf16.msra.mxu0 %v1835
        %1861 = vmatprep.subr.bf16.mxu0 0
        %1862 = vmatpush1.bf16.msra.mxu0 %v1834
        %1863 = vmatprep.subr.bf16.mxu0 0
        %1864 = vmatpush1.bf16.msra.mxu0 %v1833
        %1865 = vmatprep.subr.bf16.mxu0 0
        %1866 = vmatpush2.bf16.msra.mxu0 0
        %1867 = vmatprep.subr.bf16.mxu0 0
        %1868 = vmatpush2.bf16.msra.mxu0 0
        %1869 = vmatprep.subr.bf16.mxu0 0
        %1870 = vmatpush2.bf16.msra.mxu0 0
        %1871 = vmatprep.subr.bf16.mxu0 0
        %1872 = vmatpush2.bf16.msra.mxu0 0
        %1873 = vmatprep.subr.bf16.mxu0 0
        %1874 = vmatpush2.bf16.msra.mxu0 0
        %1875 = vmatprep.subr.bf16.mxu0 0
        %1876 = vmatpush2.bf16.msra.mxu0 0
        %1877 = vmatprep.subr.bf16.mxu0 0
        %1878 = vmatpush2.bf16.msra.mxu0 0
        %1879 = vmatprep.subr.bf16.mxu0 0
        %1880 = vmatpush2.bf16.msra.mxu0 0
        %1881 = vmatprep.mubr.bf16.mxu0 0
        %1882 = vmatmul.mubr.bf16.gmra.mxu0 %v1783
        %v1883 = vpop.f32.mrf.mxu0
        %v1884 = vadd.f32 0.0, %v1883
        %v1885 = vpop.f32.mrf.mxu0
        %v1886 = vpop.f32.mrf.mxu0
        %v1887 = vpop.f32.mrf.mxu0
        %1888 = vdwg.mxu0
        %v1905 = vunpack.c.l.b16 %v1669
        %v1906 = vunpack.c.l.b16 %v1670
        %v1907 = vunpack.c.l.b16 %v1671
        %v1908 = vunpack.c.l.b16 %v1672
        %v1909 = vunpack.c.l.b16 %v1673
        %v1910 = vunpack.c.l.b16 %v1674
        %v1911 = vunpack.c.l.b16 %v1675
        %v1912 = vunpack.c.l.b16 %v1676
        %v1913 = vunpack.c.l.b16 %v1677
        %v1914 = vunpack.c.l.b16 %v1678
        %v1915 = vunpack.c.l.b16 %v1679
        %v1916 = vunpack.c.l.b16 %v1680
        %v1917 = vunpack.c.l.b16 %v1681
        %v1918 = vunpack.c.l.b16 %v1682
        %v1919 = vunpack.c.l.b16 %v1683
        %v1920 = vunpack.c.l.b16 %v1684
        %v1921 = vpack.c.b16 %v1906, %v1905
        %v1922 = vpack.c.b16 %v1908, %v1907
        %v1923 = vpack.c.b16 %v1910, %v1909
        %v1924 = vpack.c.b16 %v1912, %v1911
        %v1925 = vpack.c.b16 %v1914, %v1913
        %v1926 = vpack.c.b16 %v1916, %v1915
        %v1927 = vpack.c.b16 %v1918, %v1917
        %v1928 = vpack.c.b16 %v1920, %v1919
        %1937 = vmatprep.subr.bf16.mxu0 0
        %1938 = vmatpush1.bf16.msra.mxu0 %v1928
        %1939 = vmatprep.subr.bf16.mxu0 0
        %1940 = vmatpush1.bf16.msra.mxu0 %v1927
        %1941 = vmatprep.subr.bf16.mxu0 0
        %1942 = vmatpush1.bf16.msra.mxu0 %v1926
        %1943 = vmatprep.subr.bf16.mxu0 0
        %1944 = vmatpush1.bf16.msra.mxu0 %v1925
        %1945 = vmatprep.subr.bf16.mxu0 0
        %1946 = vmatpush1.bf16.msra.mxu0 %v1924
        %1947 = vmatprep.subr.bf16.mxu0 0
        %1948 = vmatpush1.bf16.msra.mxu0 %v1923
        %1949 = vmatprep.subr.bf16.mxu0 0
        %1950 = vmatpush1.bf16.msra.mxu0 %v1922
        %1951 = vmatprep.subr.bf16.mxu0 0
        %1952 = vmatpush1.bf16.msra.mxu0 %v1921
        %1953 = vmatprep.subr.bf16.mxu0 0
        %1954 = vmatpush2.bf16.msra.mxu0 0
        %1955 = vmatprep.subr.bf16.mxu0 0
        %1956 = vmatpush2.bf16.msra.mxu0 0
        %1957 = vmatprep.subr.bf16.mxu0 0
        %1958 = vmatpush2.bf16.msra.mxu0 0
        %1959 = vmatprep.subr.bf16.mxu0 0
        %1960 = vmatpush2.bf16.msra.mxu0 0
        %1961 = vmatprep.subr.bf16.mxu0 0
        %1962 = vmatpush2.bf16.msra.mxu0 0
        %1963 = vmatprep.subr.bf16.mxu0 0
        %1964 = vmatpush2.bf16.msra.mxu0 0
        %1965 = vmatprep.subr.bf16.mxu0 0
        %1966 = vmatpush2.bf16.msra.mxu0 0
        %1967 = vmatprep.subr.bf16.mxu0 0
        %1968 = vmatpush2.bf16.msra.mxu0 0
        %1969 = vmatprep.mubr.bf16.mxu0 0
        %1970 = vmatmul.mubr.bf16.gmra.mxu0 %v1668
        %v1971 = vpop.f32.mrf.mxu0
        %v1972 = vadd.f32 %v1884, %v1971
        %v1973 = vpop.f32.mrf.mxu0
        %v1974 = vpop.f32.mrf.mxu0
        %v1975 = vpop.f32.mrf.mxu0
        %1976 = vdwg.mxu0
        %1977 = vmatprep.subr.bf16.mxu0 0
        %1978 = vmatpush1.bf16.xpose.msra.mxu0 0
        %1979 = vmatprep.subr.bf16.mxu0 0
        %1980 = vmatpush1.bf16.xpose.msra.mxu0 0
        %1981 = vmatprep.subr.bf16.mxu0 0
        %1982 = vmatpush1.bf16.xpose.msra.mxu0 0
        %1983 = vmatprep.subr.bf16.mxu0 0
        %1984 = vmatpush1.bf16.xpose.msra.mxu0 0
        %1985 = vmatprep.subr.bf16.mxu0 0
        %1986 = vmatpush1.bf16.xpose.msra.mxu0 0
        %1987 = vmatprep.subr.bf16.mxu0 0
        %1988 = vmatpush1.bf16.xpose.msra.mxu0 0
        %1989 = vmatprep.subr.bf16.mxu0 0
        %1990 = vmatpush1.bf16.xpose.msra.mxu0 0
        %1991 = vmatprep.subr.bf16.mxu0 0
        %1992 = vmatpush1.bf16.xpose.msra.mxu0 %v1562
        %1993 = vmatprep.subr.bf16.mxu0 0
        %1994 = vmatpush2.bf16.xpose.msra.mxu0 0
        %1995 = vmatprep.subr.bf16.mxu0 0
        %1996 = vmatpush2.bf16.xpose.msra.mxu0 0
        %1997 = vmatprep.subr.bf16.mxu0 0
        %1998 = vmatpush2.bf16.xpose.msra.mxu0 0
        %1999 = vmatprep.subr.bf16.mxu0 0
        %2000 = vmatpush2.bf16.xpose.msra.mxu0 0
        %2001 = vmatprep.subr.bf16.mxu0 0
        %2002 = vmatpush2.bf16.xpose.msra.mxu0 0
        %2003 = vmatprep.subr.bf16.mxu0 0
        %2004 = vmatpush2.bf16.xpose.msra.mxu0 0
        %2005 = vmatprep.subr.bf16.mxu0 0
        %2006 = vmatpush2.bf16.xpose.msra.mxu0 0
        %2007 = vmatprep.subr.bf16.mxu0 0
        %2008 = vmatpush2.bf16.xpose.msra.mxu0 0
        %2009 = vmatprep.mubr.bf16.mxu0 0
        %2010 = vmatmul.mubr.bf16.gmra.mxu0 %v1558
        %v2011 = vpop.f32.mrf.mxu0
        %v2012 = vadd.f32 0.0, %v2011
        %v2013 = vpop.f32.mrf.mxu0
        %v2014 = vpop.f32.mrf.mxu0
        %v2015 = vpop.f32.mrf.mxu0
        %2016 = vdwg.mxu0
        %v2017 = vsel %vm1608, %v2012, -inf
        %2018 = vmax.xlane.f32.xlu0 %v2017
        %v2019 = vpop.xlane.xlu0 %2018
        %v2020 = vsub.f32 %v2012, %v2019
        %v2021 = vmul.f32 %v2020, 1.442695
        %v2022 = vpow.pop %v2021
        %v2023 = vsel %vm1608, %v2022, 0.0
        %2024 = vadd.xlane.f32.xlu0 %v2023
        %v2025 = vpop.xlane.xlu0 %2024
        %v2026 = vrcp.pop %v2025
        %v2027 = vmul.f32 %v2022, %v2026
        %v2028 = vpack.c.bf16 %v2027, %v2027
        %v2030 = vsel %vm1608, %v2028, 0
        %v2033 = vsel %vm1624, %v1566, 0
        %2035 = vmatprep.subr.bf16.mxu0 0
        %2036 = vmatpush1.bf16.msra.mxu0 0
        %2037 = vmatprep.subr.bf16.mxu0 0
        %2038 = vmatpush1.bf16.msra.mxu0 0
        %2039 = vmatprep.subr.bf16.mxu0 0
        %2040 = vmatpush1.bf16.msra.mxu0 0
        %2041 = vmatprep.subr.bf16.mxu0 0
        %2042 = vmatpush1.bf16.msra.mxu0 0
        %2043 = vmatprep.subr.bf16.mxu0 0
        %2044 = vmatpush1.bf16.msra.mxu0 0
        %2045 = vmatprep.subr.bf16.mxu0 0
        %2046 = vmatpush1.bf16.msra.mxu0 0
        %2047 = vmatprep.subr.bf16.mxu0 0
        %2048 = vmatpush1.bf16.msra.mxu0 0
        %2049 = vmatprep.subr.bf16.mxu0 0
        %2050 = vmatpush1.bf16.msra.mxu0 %v2033
        %2051 = vmatprep.subr.bf16.mxu0 0
        %2052 = vmatpush2.bf16.msra.mxu0 0
        %2053 = vmatprep.subr.bf16.mxu0 0
        %2054 = vmatpush2.bf16.msra.mxu0 0
        %2055 = vmatprep.subr.bf16.mxu0 0
        %2056 = vmatpush2.bf16.msra.mxu0 0
        %2057 = vmatprep.subr.bf16.mxu0 0
        %2058 = vmatpush2.bf16.msra.mxu0 0
        %2059 = vmatprep.subr.bf16.mxu0 0
        %2060 = vmatpush2.bf16.msra.mxu0 0
        %2061 = vmatprep.subr.bf16.mxu0 0
        %2062 = vmatpush2.bf16.msra.mxu0 0
        %2063 = vmatprep.subr.bf16.mxu0 0
        %2064 = vmatpush2.bf16.msra.mxu0 0
        %2065 = vmatprep.subr.bf16.mxu0 0
        %2066 = vmatpush2.bf16.msra.mxu0 0
        %2067 = vmatprep.mubr.bf16.mxu0 0
        %2068 = vmatmul.mubr.bf16.gmra.mxu0 %v2030
        %v2069 = vpop.f32.mrf.mxu0
        %v2070 = vadd.f32 0.0, %v2069
        %v2071 = vpop.f32.mrf.mxu0
        %v2072 = vpop.f32.mrf.mxu0
        %v2073 = vpop.f32.mrf.mxu0
        %2074 = vdwg.mxu0
        %v2075 = vpack.c.bf16 %v2070, %v2070
        %s2076 = scalar_lea.vmem [#allocation11], 128
        %v2077 = vld [vmem:[%s2076] sm:$0xf]
        %v2078 = vld [vmem:[%s2076 + $0x4] sm:$0xf]
        %v2079 = vld [vmem:[%s2076 + $0x8] sm:$0xf]
        %v2080 = vld [vmem:[%s2076 + $0xc] sm:$0xf]
        %v2081 = vld [vmem:[%s2076 + $0x10] sm:$0xf]
        %v2082 = vld [vmem:[%s2076 + $0x14] sm:$0xf]
        %v2083 = vld [vmem:[%s2076 + $0x18] sm:$0xf]
        %v2084 = vld [vmem:[%s2076 + $0x1c] sm:$0xf]
        %v2085 = vld [vmem:[%s2076 + $0x20] sm:$0xf]
        %v2086 = vld [vmem:[%s2076 + $0x24] sm:$0xf]
        %v2087 = vld [vmem:[%s2076 + $0x28] sm:$0xf]
        %v2088 = vld [vmem:[%s2076 + $0x2c] sm:$0xf]
        %v2089 = vld [vmem:[%s2076 + $0x30] sm:$0xf]
        %v2090 = vld [vmem:[%s2076 + $0x34] sm:$0xf]
        %v2091 = vld [vmem:[%s2076 + $0x38] sm:$0xf]
        %v2092 = vld [vmem:[%s2076 + $0x3c] sm:$0xf]
        %v2109 = vunpack.c.l.b16 %v2077
        %v2110 = vunpack.c.l.b16 %v2078
        %v2111 = vunpack.c.l.b16 %v2079
        %v2112 = vunpack.c.l.b16 %v2080
        %v2113 = vunpack.c.l.b16 %v2081
        %v2114 = vunpack.c.l.b16 %v2082
        %v2115 = vunpack.c.l.b16 %v2083
        %v2116 = vunpack.c.l.b16 %v2084
        %v2117 = vunpack.c.l.b16 %v2085
        %v2118 = vunpack.c.l.b16 %v2086
        %v2119 = vunpack.c.l.b16 %v2087
        %v2120 = vunpack.c.l.b16 %v2088
        %v2121 = vunpack.c.l.b16 %v2089
        %v2122 = vunpack.c.l.b16 %v2090
        %v2123 = vunpack.c.l.b16 %v2091
        %v2124 = vunpack.c.l.b16 %v2092
        %v2125 = vpack.c.b16 %v2110, %v2109
        %v2126 = vpack.c.b16 %v2112, %v2111
        %v2127 = vpack.c.b16 %v2114, %v2113
        %v2128 = vpack.c.b16 %v2116, %v2115
        %v2129 = vpack.c.b16 %v2118, %v2117
        %v2130 = vpack.c.b16 %v2120, %v2119
        %v2131 = vpack.c.b16 %v2122, %v2121
        %v2132 = vpack.c.b16 %v2124, %v2123
        %2141 = vmatprep.subr.bf16.mxu0 0
        %2142 = vmatpush1.bf16.msra.mxu0 %v2132
        %2143 = vmatprep.subr.bf16.mxu0 0
        %2144 = vmatpush1.bf16.msra.mxu0 %v2131
        %2145 = vmatprep.subr.bf16.mxu0 0
        %2146 = vmatpush1.bf16.msra.mxu0 %v2130
        %2147 = vmatprep.subr.bf16.mxu0 0
        %2148 = vmatpush1.bf16.msra.mxu0 %v2129
        %2149 = vmatprep.subr.bf16.mxu0 0
        %2150 = vmatpush1.bf16.msra.mxu0 %v2128
        %2151 = vmatprep.subr.bf16.mxu0 0
        %2152 = vmatpush1.bf16.msra.mxu0 %v2127
        %2153 = vmatprep.subr.bf16.mxu0 0
        %2154 = vmatpush1.bf16.msra.mxu0 %v2126
        %2155 = vmatprep.subr.bf16.mxu0 0
        %2156 = vmatpush1.bf16.msra.mxu0 %v2125
        %2157 = vmatprep.subr.bf16.mxu0 0
        %2158 = vmatpush2.bf16.msra.mxu0 0
        %2159 = vmatprep.subr.bf16.mxu0 0
        %2160 = vmatpush2.bf16.msra.mxu0 0
        %2161 = vmatprep.subr.bf16.mxu0 0
        %2162 = vmatpush2.bf16.msra.mxu0 0
        %2163 = vmatprep.subr.bf16.mxu0 0
        %2164 = vmatpush2.bf16.msra.mxu0 0
        %2165 = vmatprep.subr.bf16.mxu0 0
        %2166 = vmatpush2.bf16.msra.mxu0 0
        %2167 = vmatprep.subr.bf16.mxu0 0
        %2168 = vmatpush2.bf16.msra.mxu0 0
        %2169 = vmatprep.subr.bf16.mxu0 0
        %2170 = vmatpush2.bf16.msra.mxu0 0
        %2171 = vmatprep.subr.bf16.mxu0 0
        %2172 = vmatpush2.bf16.msra.mxu0 0
        %2173 = vmatprep.mubr.bf16.mxu0 0
        %2174 = vmatmul.mubr.bf16.gmra.mxu0 %v2075
        %v2175 = vpop.f32.mrf.mxu0
        %v2176 = vadd.f32 0.0, %v2175
        %v2177 = vpop.f32.mrf.mxu0
        %v2178 = vpop.f32.mrf.mxu0
        %v2179 = vpop.f32.mrf.mxu0
        %2180 = vdwg.mxu0
        %v2181 = vadd.f32 %v1972, %v2176
        %2182 = vmatprep.subr.bf16.mxu0 0
        %2183 = vmatpush1.bf16.xpose.msra.mxu0 0
        %2184 = vmatprep.subr.bf16.mxu0 0
        %2185 = vmatpush1.bf16.xpose.msra.mxu0 0
        %2186 = vmatprep.subr.bf16.mxu0 0
        %2187 = vmatpush1.bf16.xpose.msra.mxu0 0
        %2188 = vmatprep.subr.bf16.mxu0 0
        %2189 = vmatpush1.bf16.xpose.msra.mxu0 0
        %2190 = vmatprep.subr.bf16.mxu0 0
        %2191 = vmatpush1.bf16.xpose.msra.mxu0 0
        %2192 = vmatprep.subr.bf16.mxu0 0
        %2193 = vmatpush1.bf16.xpose.msra.mxu0 0
        %2194 = vmatprep.subr.bf16.mxu0 0
        %2195 = vmatpush1.bf16.xpose.msra.mxu0 0
        %2196 = vmatprep.subr.bf16.mxu0 0
        %2197 = vmatpush1.bf16.xpose.msra.mxu0 %v1563
        %2198 = vmatprep.subr.bf16.mxu0 0
        %2199 = vmatpush2.bf16.xpose.msra.mxu0 0
        %2200 = vmatprep.subr.bf16.mxu0 0
        %2201 = vmatpush2.bf16.xpose.msra.mxu0 0
        %2202 = vmatprep.subr.bf16.mxu0 0
        %2203 = vmatpush2.bf16.xpose.msra.mxu0 0
        %2204 = vmatprep.subr.bf16.mxu0 0
        %2205 = vmatpush2.bf16.xpose.msra.mxu0 0
        %2206 = vmatprep.subr.bf16.mxu0 0
        %2207 = vmatpush2.bf16.xpose.msra.mxu0 0
        %2208 = vmatprep.subr.bf16.mxu0 0
        %2209 = vmatpush2.bf16.xpose.msra.mxu0 0
        %2210 = vmatprep.subr.bf16.mxu0 0
        %2211 = vmatpush2.bf16.xpose.msra.mxu0 0
        %2212 = vmatprep.subr.bf16.mxu0 0
        %2213 = vmatpush2.bf16.xpose.msra.mxu0 0
        %2214 = vmatprep.mubr.bf16.mxu0 0
        %2215 = vmatmul.mubr.bf16.gmra.mxu0 %v1559
        %v2216 = vpop.f32.mrf.mxu0
        %v2217 = vadd.f32 0.0, %v2216
        %v2218 = vpop.f32.mrf.mxu0
        %v2219 = vpop.f32.mrf.mxu0
        %v2220 = vpop.f32.mrf.mxu0
        %2221 = vdwg.mxu0
        %v2222 = vsel %vm1608, %v2217, -inf
        %2223 = vmax.xlane.f32.xlu0 %v2222
        %v2224 = vpop.xlane.xlu0 %2223
        %v2225 = vsub.f32 %v2217, %v2224
        %v2226 = vmul.f32 %v2225, 1.442695
        %v2227 = vpow.pop %v2226
        %v2228 = vsel %vm1608, %v2227, 0.0
        %2229 = vadd.xlane.f32.xlu0 %v2228
        %v2230 = vpop.xlane.xlu0 %2229
        %v2231 = vrcp.pop %v2230
        %v2232 = vmul.f32 %v2227, %v2231
        %v2233 = vpack.c.bf16 %v2232, %v2232
        %v2235 = vsel %vm1608, %v2233, 0
        %v2238 = vsel %vm1624, %v1567, 0
        %2240 = vmatprep.subr.bf16.mxu0 0
        %2241 = vmatpush1.bf16.msra.mxu0 0
        %2242 = vmatprep.subr.bf16.mxu0 0
        %2243 = vmatpush1.bf16.msra.mxu0 0
        %2244 = vmatprep.subr.bf16.mxu0 0
        %2245 = vmatpush1.bf16.msra.mxu0 0
        %2246 = vmatprep.subr.bf16.mxu0 0
        %2247 = vmatpush1.bf16.msra.mxu0 0
        %2248 = vmatprep.subr.bf16.mxu0 0
        %2249 = vmatpush1.bf16.msra.mxu0 0
        %2250 = vmatprep.subr.bf16.mxu0 0
        %2251 = vmatpush1.bf16.msra.mxu0 0
        %2252 = vmatprep.subr.bf16.mxu0 0
        %2253 = vmatpush1.bf16.msra.mxu0 0
        %2254 = vmatprep.subr.bf16.mxu0 0
        %2255 = vmatpush1.bf16.msra.mxu0 %v2238
        %2256 = vmatprep.subr.bf16.mxu0 0
        %2257 = vmatpush2.bf16.msra.mxu0 0
        %2258 = vmatprep.subr.bf16.mxu0 0
        %2259 = vmatpush2.bf16.msra.mxu0 0
        %2260 = vmatprep.subr.bf16.mxu0 0
        %2261 = vmatpush2.bf16.msra.mxu0 0
        %2262 = vmatprep.subr.bf16.mxu0 0
        %2263 = vmatpush2.bf16.msra.mxu0 0
        %2264 = vmatprep.subr.bf16.mxu0 0
        %2265 = vmatpush2.bf16.msra.mxu0 0
        %2266 = vmatprep.subr.bf16.mxu0 0
        %2267 = vmatpush2.bf16.msra.mxu0 0
        %2268 = vmatprep.subr.bf16.mxu0 0
        %2269 = vmatpush2.bf16.msra.mxu0 0
        %2270 = vmatprep.subr.bf16.mxu0 0
        %2271 = vmatpush2.bf16.msra.mxu0 0
        %2272 = vmatprep.mubr.bf16.mxu0 0
        %2273 = vmatmul.mubr.bf16.gmra.mxu0 %v2235
        %v2274 = vpop.f32.mrf.mxu0
        %v2275 = vadd.f32 0.0, %v2274
        %v2276 = vpop.f32.mrf.mxu0
        %v2277 = vpop.f32.mrf.mxu0
        %v2278 = vpop.f32.mrf.mxu0
        %2279 = vdwg.mxu0
        %v2280 = vpack.c.bf16 %v2275, %v2275
        %s2281 = scalar_lea.vmem [#allocation11], 192
        %v2282 = vld [vmem:[%s2281] sm:$0xf]
        %v2283 = vld [vmem:[%s2281 + $0x4] sm:$0xf]
        %v2284 = vld [vmem:[%s2281 + $0x8] sm:$0xf]
        %v2285 = vld [vmem:[%s2281 + $0xc] sm:$0xf]
        %v2286 = vld [vmem:[%s2281 + $0x10] sm:$0xf]
        %v2287 = vld [vmem:[%s2281 + $0x14] sm:$0xf]
        %v2288 = vld [vmem:[%s2281 + $0x18] sm:$0xf]
        %v2289 = vld [vmem:[%s2281 + $0x1c] sm:$0xf]
        %v2290 = vld [vmem:[%s2281 + $0x20] sm:$0xf]
        %v2291 = vld [vmem:[%s2281 + $0x24] sm:$0xf]
        %v2292 = vld [vmem:[%s2281 + $0x28] sm:$0xf]
        %v2293 = vld [vmem:[%s2281 + $0x2c] sm:$0xf]
        %v2294 = vld [vmem:[%s2281 + $0x30] sm:$0xf]
        %v2295 = vld [vmem:[%s2281 + $0x34] sm:$0xf]
        %v2296 = vld [vmem:[%s2281 + $0x38] sm:$0xf]
        %v2297 = vld [vmem:[%s2281 + $0x3c] sm:$0xf]
        %v2314 = vunpack.c.l.b16 %v2282
        %v2315 = vunpack.c.l.b16 %v2283
        %v2316 = vunpack.c.l.b16 %v2284
        %v2317 = vunpack.c.l.b16 %v2285
        %v2318 = vunpack.c.l.b16 %v2286
        %v2319 = vunpack.c.l.b16 %v2287
        %v2320 = vunpack.c.l.b16 %v2288
        %v2321 = vunpack.c.l.b16 %v2289
        %v2322 = vunpack.c.l.b16 %v2290
        %v2323 = vunpack.c.l.b16 %v2291
        %v2324 = vunpack.c.l.b16 %v2292
        %v2325 = vunpack.c.l.b16 %v2293
        %v2326 = vunpack.c.l.b16 %v2294
        %v2327 = vunpack.c.l.b16 %v2295
        %v2328 = vunpack.c.l.b16 %v2296
        %v2329 = vunpack.c.l.b16 %v2297
        %v2330 = vpack.c.b16 %v2315, %v2314
        %v2331 = vpack.c.b16 %v2317, %v2316
        %v2332 = vpack.c.b16 %v2319, %v2318
        %v2333 = vpack.c.b16 %v2321, %v2320
        %v2334 = vpack.c.b16 %v2323, %v2322
        %v2335 = vpack.c.b16 %v2325, %v2324
        %v2336 = vpack.c.b16 %v2327, %v2326
        %v2337 = vpack.c.b16 %v2329, %v2328
        %2346 = vmatprep.subr.bf16.mxu0 0
        %2347 = vmatpush1.bf16.msra.mxu0 %v2337
        %2348 = vmatprep.subr.bf16.mxu0 0
        %2349 = vmatpush1.bf16.msra.mxu0 %v2336
        %2350 = vmatprep.subr.bf16.mxu0 0
        %2351 = vmatpush1.bf16.msra.mxu0 %v2335
        %2352 = vmatprep.subr.bf16.mxu0 0
        %2353 = vmatpush1.bf16.msra.mxu0 %v2334
        %2354 = vmatprep.subr.bf16.mxu0 0
        %2355 = vmatpush1.bf16.msra.mxu0 %v2333
        %2356 = vmatprep.subr.bf16.mxu0 0
        %2357 = vmatpush1.bf16.msra.mxu0 %v2332
        %2358 = vmatprep.subr.bf16.mxu0 0
        %2359 = vmatpush1.bf16.msra.mxu0 %v2331
        %2360 = vmatprep.subr.bf16.mxu0 0
        %2361 = vmatpush1.bf16.msra.mxu0 %v2330
        %2362 = vmatprep.subr.bf16.mxu0 0
        %2363 = vmatpush2.bf16.msra.mxu0 0
        %2364 = vmatprep.subr.bf16.mxu0 0
        %2365 = vmatpush2.bf16.msra.mxu0 0
        %2366 = vmatprep.subr.bf16.mxu0 0
        %2367 = vmatpush2.bf16.msra.mxu0 0
        %2368 = vmatprep.subr.bf16.mxu0 0
        %2369 = vmatpush2.bf16.msra.mxu0 0
        %2370 = vmatprep.subr.bf16.mxu0 0
        %2371 = vmatpush2.bf16.msra.mxu0 0
        %2372 = vmatprep.subr.bf16.mxu0 0
        %2373 = vmatpush2.bf16.msra.mxu0 0
        %2374 = vmatprep.subr.bf16.mxu0 0
        %2375 = vmatpush2.bf16.msra.mxu0 0
        %2376 = vmatprep.subr.bf16.mxu0 0
        %2377 = vmatpush2.bf16.msra.mxu0 0
        %2378 = vmatprep.mubr.bf16.mxu0 0
        %2379 = vmatmul.mubr.bf16.gmra.mxu0 %v2280
        %v2380 = vpop.f32.mrf.mxu0
        %v2381 = vadd.f32 0.0, %v2380
        %v2382 = vpop.f32.mrf.mxu0
        %v2383 = vpop.f32.mrf.mxu0
        %v2384 = vpop.f32.mrf.mxu0
        %2385 = vdwg.mxu0
        %v2386 = vadd.f32 %v2181, %v2381
        %v2387 = vld [vmem:[%s7] sm:$0x1]
        %v2389 = vlaneseq
        %v2390 = vshrl.u32 %v2389, 7
        %v2391 = vsub.s32 0, %v2390
        %v2392 = vrot.slane %v2387, %v2391
        %v2394 = vadd.f32 %v2386, %v2392
        %v2395 = vadd.f32 %v660, %v2394
        %v2396 = vld [vmem:[%s8] sm:$0x1]
        %v2397 = vld [vmem:[%s9] sm:$0x1]
        %2398 = vadd.xlane.f32.xlu0 %v2395
        %v2399 = vpop.xlane.xlu0 %2398
        %v2400 = vmul.f32 %v2399, 0.03125
        %v2401 = vsub.f32 %v2395, %v2400
        %v2402 = vmul.f32 %v2401, %v669
        %v2403 = vmul.f32 %v2402, %v2402
        %2404 = vadd.xlane.f32.xlu0 %v2403
        %v2405 = vpop.xlane.xlu0 %2404
        %v2406 = vmul.f32 %v2405, 0.03125
        %v2407 = vadd.f32 %v2406, 1e-05
        %v2408 = vrsqrt.pop %v2407
        %v2409 = vmul.f32 %v2402, %v2408
        %v2411 = vlaneseq
        %v2412 = vshrl.u32 %v2411, 7
        %v2413 = vsub.s32 0, %v2412
        %v2414 = vrot.slane %v2396, %v2413
        %v2416 = vmul.f32 %v2409, %v2414
        %v2418 = vlaneseq
        %v2419 = vshrl.u32 %v2418, 7
        %v2420 = vsub.s32 0, %v2419
        %v2421 = vrot.slane %v2397, %v2420
        %v2423 = vadd.f32 %v2416, %v2421
        %v2424 = vpack.c.bf16 %v2423, %v2423
        %v2425 = vld [vmem:[#allocation13] sm:$0xf]
        %v2426 = vld [vmem:[#allocation13 + $0x4] sm:$0xf]
        %v2427 = vld [vmem:[#allocation13 + $0x8] sm:$0xf]
        %v2428 = vld [vmem:[#allocation13 + $0xc] sm:$0xf]
        %v2429 = vld [vmem:[#allocation13 + $0x10] sm:$0xf]
        %v2430 = vld [vmem:[#allocation13 + $0x14] sm:$0xf]
        %v2431 = vld [vmem:[#allocation13 + $0x18] sm:$0xf]
        %v2432 = vld [vmem:[#allocation13 + $0x1c] sm:$0xf]
        %v2433 = vld [vmem:[#allocation13 + $0x20] sm:$0xf]
        %v2434 = vld [vmem:[#allocation13 + $0x24] sm:$0xf]
        %v2435 = vld [vmem:[#allocation13 + $0x28] sm:$0xf]
        %v2436 = vld [vmem:[#allocation13 + $0x2c] sm:$0xf]
        %v2437 = vld [vmem:[#allocation13 + $0x30] sm:$0xf]
        %v2438 = vld [vmem:[#allocation13 + $0x34] sm:$0xf]
        %v2439 = vld [vmem:[#allocation13 + $0x38] sm:$0xf]
        %v2440 = vld [vmem:[#allocation13 + $0x3c] sm:$0xf]
        %v2441 = vld [vmem:[%s11] sm:$0x1]
        %v2443 = vlaneseq
        %v2444 = vshrl.u32 %v2443, 7
        %v2445 = vsub.s32 0, %v2444
        %v2446 = vrot.slane %v2441, %v2445
        %v2464 = vunpack.c.l.b16 %v2425
        %v2465 = vunpack.c.l.b16 %v2426
        %v2466 = vunpack.c.l.b16 %v2427
        %v2467 = vunpack.c.l.b16 %v2428
        %v2468 = vunpack.c.l.b16 %v2429
        %v2469 = vunpack.c.l.b16 %v2430
        %v2470 = vunpack.c.l.b16 %v2431
        %v2471 = vunpack.c.l.b16 %v2432
        %v2472 = vunpack.c.l.b16 %v2433
        %v2473 = vunpack.c.l.b16 %v2434
        %v2474 = vunpack.c.l.b16 %v2435
        %v2475 = vunpack.c.l.b16 %v2436
        %v2476 = vunpack.c.l.b16 %v2437
        %v2477 = vunpack.c.l.b16 %v2438
        %v2478 = vunpack.c.l.b16 %v2439
        %v2479 = vunpack.c.l.b16 %v2440
        %v2480 = vpack.c.b16 %v2465, %v2464
        %v2481 = vpack.c.b16 %v2467, %v2466
        %v2482 = vpack.c.b16 %v2469, %v2468
        %v2483 = vpack.c.b16 %v2471, %v2470
        %v2484 = vpack.c.b16 %v2473, %v2472
        %v2485 = vpack.c.b16 %v2475, %v2474
        %v2486 = vpack.c.b16 %v2477, %v2476
        %v2487 = vpack.c.b16 %v2479, %v2478
        %2496 = vmatprep.subr.bf16.mxu0 0
        %2497 = vmatpush1.bf16.msra.mxu0 %v2487
        %2498 = vmatprep.subr.bf16.mxu0 0
        %2499 = vmatpush1.bf16.msra.mxu0 %v2486
        %2500 = vmatprep.subr.bf16.mxu0 0
        %2501 = vmatpush1.bf16.msra.mxu0 %v2485
        %2502 = vmatprep.subr.bf16.mxu0 0
        %2503 = vmatpush1.bf16.msra.mxu0 %v2484
        %2504 = vmatprep.subr.bf16.mxu0 0
        %2505 = vmatpush1.bf16.msra.mxu0 %v2483
        %2506 = vmatprep.subr.bf16.mxu0 0
        %2507 = vmatpush1.bf16.msra.mxu0 %v2482
        %2508 = vmatprep.subr.bf16.mxu0 0
        %2509 = vmatpush1.bf16.msra.mxu0 %v2481
        %2510 = vmatprep.subr.bf16.mxu0 0
        %2511 = vmatpush1.bf16.msra.mxu0 %v2480
        %2512 = vmatprep.subr.bf16.mxu0 0
        %2513 = vmatpush2.bf16.msra.mxu0 0
        %2514 = vmatprep.subr.bf16.mxu0 0
        %2515 = vmatpush2.bf16.msra.mxu0 0
        %2516 = vmatprep.subr.bf16.mxu0 0
        %2517 = vmatpush2.bf16.msra.mxu0 0
        %2518 = vmatprep.subr.bf16.mxu0 0
        %2519 = vmatpush2.bf16.msra.mxu0 0
        %2520 = vmatprep.subr.bf16.mxu0 0
        %2521 = vmatpush2.bf16.msra.mxu0 0
        %2522 = vmatprep.subr.bf16.mxu0 0
        %2523 = vmatpush2.bf16.msra.mxu0 0
        %2524 = vmatprep.subr.bf16.mxu0 0
        %2525 = vmatpush2.bf16.msra.mxu0 0
        %2526 = vmatprep.subr.bf16.mxu0 0
        %2527 = vmatpush2.bf16.msra.mxu0 0
        %2528 = vmatprep.mubr.bf16.mxu0 0
        %2529 = vmatmul.mubr.bf16.gmra.mxu0 %v2424
        %v2530 = vpop.f32.mrf.mxu0
        %v2531 = vadd.f32 %v2446, %v2530
        %v2532 = vpop.f32.mrf.mxu0
        %v2533 = vpop.f32.mrf.mxu0
        %v2534 = vpop.f32.mrf.mxu0
        %2535 = vdwg.mxu0
        %v2536 = vmax.f32 %v2531, 0.0
        %v2537 = vpack.c.bf16 %v2536, %v2536
        %v2538 = vld [vmem:[#allocation14] sm:$0xf]
        %v2539 = vld [vmem:[#allocation14 + $0x4] sm:$0xf]
        %v2540 = vld [vmem:[#allocation14 + $0x8] sm:$0xf]
        %v2541 = vld [vmem:[#allocation14 + $0xc] sm:$0xf]
        %v2542 = vld [vmem:[#allocation14 + $0x10] sm:$0xf]
        %v2543 = vld [vmem:[#allocation14 + $0x14] sm:$0xf]
        %v2544 = vld [vmem:[#allocation14 + $0x18] sm:$0xf]
        %v2545 = vld [vmem:[#allocation14 + $0x1c] sm:$0xf]
        %v2546 = vld [vmem:[#allocation14 + $0x20] sm:$0xf]
        %v2547 = vld [vmem:[#allocation14 + $0x24] sm:$0xf]
        %v2548 = vld [vmem:[#allocation14 + $0x28] sm:$0xf]
        %v2549 = vld [vmem:[#allocation14 + $0x2c] sm:$0xf]
        %v2550 = vld [vmem:[#allocation14 + $0x30] sm:$0xf]
        %v2551 = vld [vmem:[#allocation14 + $0x34] sm:$0xf]
        %v2552 = vld [vmem:[#allocation14 + $0x38] sm:$0xf]
        %v2553 = vld [vmem:[#allocation14 + $0x3c] sm:$0xf]
        %v2554 = vld [vmem:[%s13] sm:$0x1]
        %v2556 = vlaneseq
        %v2557 = vshrl.u32 %v2556, 7
        %v2558 = vsub.s32 0, %v2557
        %v2559 = vrot.slane %v2554, %v2558
        %v2577 = vunpack.c.l.b16 %v2538
        %v2578 = vunpack.c.l.b16 %v2539
        %v2579 = vunpack.c.l.b16 %v2540
        %v2580 = vunpack.c.l.b16 %v2541
        %v2581 = vunpack.c.l.b16 %v2542
        %v2582 = vunpack.c.l.b16 %v2543
        %v2583 = vunpack.c.l.b16 %v2544
        %v2584 = vunpack.c.l.b16 %v2545
        %v2585 = vunpack.c.l.b16 %v2546
        %v2586 = vunpack.c.l.b16 %v2547
        %v2587 = vunpack.c.l.b16 %v2548
        %v2588 = vunpack.c.l.b16 %v2549
        %v2589 = vunpack.c.l.b16 %v2550
        %v2590 = vunpack.c.l.b16 %v2551
        %v2591 = vunpack.c.l.b16 %v2552
        %v2592 = vunpack.c.l.b16 %v2553
        %v2593 = vpack.c.b16 %v2578, %v2577
        %v2594 = vpack.c.b16 %v2580, %v2579
        %v2595 = vpack.c.b16 %v2582, %v2581
        %v2596 = vpack.c.b16 %v2584, %v2583
        %v2597 = vpack.c.b16 %v2586, %v2585
        %v2598 = vpack.c.b16 %v2588, %v2587
        %v2599 = vpack.c.b16 %v2590, %v2589
        %v2600 = vpack.c.b16 %v2592, %v2591
        %2609 = vmatprep.subr.bf16.mxu0 0
        %2610 = vmatpush1.bf16.msra.mxu0 %v2600
        %2611 = vmatprep.subr.bf16.mxu0 0
        %2612 = vmatpush1.bf16.msra.mxu0 %v2599
        %2613 = vmatprep.subr.bf16.mxu0 0
        %2614 = vmatpush1.bf16.msra.mxu0 %v2598
        %2615 = vmatprep.subr.bf16.mxu0 0
        %2616 = vmatpush1.bf16.msra.mxu0 %v2597
        %2617 = vmatprep.subr.bf16.mxu0 0
        %2618 = vmatpush1.bf16.msra.mxu0 %v2596
        %2619 = vmatprep.subr.bf16.mxu0 0
        %2620 = vmatpush1.bf16.msra.mxu0 %v2595
        %2621 = vmatprep.subr.bf16.mxu0 0
        %2622 = vmatpush1.bf16.msra.mxu0 %v2594
        %2623 = vmatprep.subr.bf16.mxu0 0
        %2624 = vmatpush1.bf16.msra.mxu0 %v2593
        %2625 = vmatprep.subr.bf16.mxu0 0
        %2626 = vmatpush2.bf16.msra.mxu0 0
        %2627 = vmatprep.subr.bf16.mxu0 0
        %2628 = vmatpush2.bf16.msra.mxu0 0
        %2629 = vmatprep.subr.bf16.mxu0 0
        %2630 = vmatpush2.bf16.msra.mxu0 0
        %2631 = vmatprep.subr.bf16.mxu0 0
        %2632 = vmatpush2.bf16.msra.mxu0 0
        %2633 = vmatprep.subr.bf16.mxu0 0
        %2634 = vmatpush2.bf16.msra.mxu0 0
        %2635 = vmatprep.subr.bf16.mxu0 0
        %2636 = vmatpush2.bf16.msra.mxu0 0
        %2637 = vmatprep.subr.bf16.mxu0 0
        %2638 = vmatpush2.bf16.msra.mxu0 0
        %2639 = vmatprep.subr.bf16.mxu0 0
        %2640 = vmatpush2.bf16.msra.mxu0 0
        %2641 = vmatprep.mubr.bf16.mxu0 0
        %2642 = vmatmul.mubr.bf16.gmra.mxu0 %v2537
        %v2643 = vpop.f32.mrf.mxu0
        %v2644 = vadd.f32 %v2559, %v2643
        %v2645 = vpop.f32.mrf.mxu0
        %v2646 = vpop.f32.mrf.mxu0
        %v2647 = vpop.f32.mrf.mxu0
        %2648 = vdwg.mxu0
        %v2649 = vadd.f32 %v2423, %v2644
        %v2650 = vld [vmem:[%s14] sm:$0x1]
        %v2651 = vld [vmem:[%s15] sm:$0x1]
        %2652 = vadd.xlane.f32.xlu0 %v2649
        %v2653 = vpop.xlane.xlu0 %2652
        %v2654 = vmul.f32 %v2653, 0.03125
        %v2655 = vsub.f32 %v2649, %v2654
        %v2656 = vmul.f32 %v2655, %v669
        %v2657 = vmul.f32 %v2656, %v2656
        %2658 = vadd.xlane.f32.xlu0 %v2657
        %v2659 = vpop.xlane.xlu0 %2658
        %v2660 = vmul.f32 %v2659, 0.03125
        %v2661 = vadd.f32 %v2660, 1e-05
        %v2662 = vrsqrt.pop %v2661
        %v2663 = vmul.f32 %v2656, %v2662
        %v2665 = vlaneseq
        %v2666 = vshrl.u32 %v2665, 7
        %v2667 = vsub.s32 0, %v2666
        %v2668 = vrot.slane %v2650, %v2667
        %v2670 = vmul.f32 %v2663, %v2668
        %v2672 = vlaneseq
        %v2673 = vshrl.u32 %v2672, 7
        %v2674 = vsub.s32 0, %v2673
        %v2675 = vrot.slane %v2651, %v2674
        %v2677 = vadd.f32 %v2670, %v2675
        %2678 = vst [vmem:[%s658] sm:$0xff] %v2677
        %s2679 = sand.u32 %s393, 1
        %s2680 = scalar_lea.sflag [#allocation4], %s2679
        %s2681 = sand.u32 %s393, 1
        %s2682 = smul.addr %s2681, 8
        %s2683 = scalar_lea.vmem [#allocation16], %s2682
        // Predicated region
        $region117: #{tpu_custom_call.1} parent=83 // pred_check
          %p2684 = pneg %p403
        $region118: #{tpu_custom_call.1} parent=83 // pred_check_branch
          %2686 = sbr.rel (%p2684) target = $region120
        $region119: #{tpu_custom_call.1} parent=83 // pred_region
          %s2688 = ssub.s32 128, 128
          %2689 = vsyncadd %s2680, %s2688
          %s2690 = smul.addr %s39, 128
          %s2691 = scalar_lea.hbm %s16, %s2690
          %s2693 = sshll.u32 %s2683, 4
          %s2694 = int_to_ptr.vmem [resolvable:$true] %s2693
          %2696 = dma.vmem_to_hbm [thread:$0]  %s2694, 128, %s2691, %s2680
        $region120: #{tpu_custom_call.1} parent=83 // pred_fallthru
          _
      $region84: #{tpu_custom_call.1} parent=5 // pred_fallthru
        _
      %p2697 = scmp.le.s32.totalorder 2, %s34
      // Predicated region
      $region121: #{tpu_custom_call.1} parent=5 // pred_check
        %p2698 = pneg %p2697
      $region122: #{tpu_custom_call.1} parent=5 // pred_check_branch
        %2700 = sbr.rel (%p2698) target = $region124
      $region123: #{tpu_custom_call.1} parent=5 // pred_region
        %s2701 = ssub.s32 %s34, 2
        // Predicated region
        $region125: #{tpu_custom_call.1} parent=123 // pred_check
          %p2702 = pneg %p409
        $region126: #{tpu_custom_call.1} parent=123 // pred_check_branch
          %2704 = sbr.rel (%p2702) target = $region128
        $region127: #{tpu_custom_call.1} parent=123 // pred_region
          %s2705 = sand.u32 %s394, 1
          %s2706 = scalar_lea.sflag [#allocation4], %s2705
          %s2707 = sand.u32 %s394, 1
          %s2708 = smul.addr %s2707, 8
          %s2709 = scalar_lea.vmem [#allocation16], %s2708
          %2710 = dma.done %s2706, 128
        $region128: #{tpu_custom_call.1} parent=123 // pred_fallthru
          _
      $region124: #{tpu_custom_call.1} parent=5 // pred_fallthru
        _
    $region6: #{tpu_custom_call.1} parent=1 // loop_footer
      %s38 = sadd.s32 1, %s34
    $region7: #{tpu_custom_call.1} parent=1 // loop_footer_branch
      %33 = sbr.rel target = $region3
    $region8: #{tpu_custom_call.1} parent=1 // loop_exit
      _
    %2711 = vsyncpa [#allocation3], 1
    %s2712 = scalar_lea.sflag [#allocation3], 1
    %2713 = vsyncpa %s2712, 1
    %2714 = vsyncpa [#allocation6], 1
    %s2715 = scalar_lea.sflag [#allocation6], 1
    %2716 = vsyncpa %s2715, 1
    %2717 = vsyncpa [#allocation9], 1
    %2718 = vsyncpa [#allocation12], 1
    %2719 = vsyncpa [#allocation15], 1
    %2720 = vsyncpa [#allocation4], 1
    %s2721 = scalar_lea.sflag [#allocation4], 1
    %2722 = vsyncpa %s2721, 1

</llo_original>
